<compile_context>
chip_gen: v6e
topology: v6e:2x2x1
jax: 0.10.0
libtpu: 0.0.40
codegen_flags: <defaults>
</compile_context>

<pallas_src>
import functools

import jax
import jax.numpy as jnp
from jax import lax
from jax.experimental import pallas as pl
from jax.experimental.pallas import tpu as pltpu


# ----------------------------- kernel helpers -----------------------------

def _layer_norm(x, gamma, beta, eps=1e-5):
    """f32 LayerNorm over the last dim; gamma/beta are (1, D)."""
    mean = jnp.mean(x, axis=-1, keepdims=True)
    var = jnp.mean(jnp.square(x - mean), axis=-1, keepdims=True)
    return (x - mean) * lax.rsqrt(var + eps) * gamma + beta


# ------------------------------ Pallas kernel ------------------------------

def _decoder_kernel(nhead, num_layers,
                    tgt_ref, mem_ref, pos_ref, qpos_ref,
                    sa_wqk_ref, sa_bqk_ref, sa_wv_ref, sa_bv_ref,
                    sa_wo_ref, sa_bo_ref,
                    ca_wq_ref, ca_bq_ref, ca_wk_ref, ca_bk_ref,
                    ca_wv_ref, ca_bv_ref, ca_wo_ref, ca_bo_ref,
                    w1_ref, b1_ref, w2_ref, b2_ref,
                    n1g_ref, n1b_ref, n2g_ref, n2b_ref, n3g_ref, n3b_ref,
                    out_ref):
    f32 = jnp.float32
    bf16 = jnp.bfloat16

    bb, lt, d = tgt_ref.shape
    lm = mem_ref.shape[1]
    hd = d // nhead

    # Flatten the batch block into the matmul M dimension.  lt/lm are multiples of 8,
    # so these reshapes only merge the leading dim into aligned sublane groups.
    tgt0 = tgt_ref[...].astype(f32).reshape(bb * lt, d)
    qpos = qpos_ref[...].astype(f32).reshape(bb * lt, d)
    mem = mem_ref[...].astype(f32).reshape(bb * lm, d)
    pos = pos_ref[...].astype(f32).reshape(bb * lm, d)

    # Hoist all parameter loads out of the layer loop (weights are bf16, biases f32).
    sa_wqk = sa_wqk_ref[...]; sa_bqk = sa_bqk_ref[...]
    sa_wv = sa_wv_ref[...];   sa_bv = sa_bv_ref[...]
    sa_wo = sa_wo_ref[...];   sa_bo = sa_bo_ref[...]
    ca_wq = ca_wq_ref[...];   ca_bq = ca_bq_ref[...]
    ca_wk = ca_wk_ref[...];   ca_bk = ca_bk_ref[...]
    ca_wv = ca_wv_ref[...];   ca_bv = ca_bv_ref[...]
    ca_wo = ca_wo_ref[...];   ca_bo = ca_bo_ref[...]
    w1 = w1_ref[...]; b1 = b1_ref[...]
    w2 = w2_ref[...]; b2 = b2_ref[...]
    n1g = n1g_ref[...]; n1b = n1b_ref[...]
    n2g = n2g_ref[...]; n2b = n2b_ref[...]
    n3g = n3g_ref[...]; n3b = n3b_ref[...]

    def attend(qb, kb, vb, wo, bo):
        """Multi-head attention on batch-flattened bf16 q/k/v.

        qb: (bb*Lq, D), kb/vb: (bb*Lk, D) bf16 (softmax scale already folded into q).
        Heads are lane-concatenated back to (bb*Lq, D) and the output projection is
        a single full-contraction (D,D) matmul.  Returns f32 (bb*Lq, D).
        """
        lq = qb.shape[0] // bb
        lk = kb.shape[0] // bb
        rows = []
        for b in range(bb):
            q_b = qb[b * lq:(b + 1) * lq]
            k_b = kb[b * lk:(b + 1) * lk]
            v_b = vb[b * lk:(b + 1) * lk]
            heads = []
            for h in range(nhead):
                qs = q_b[:, h * hd:(h + 1) * hd]
                ks = k_b[:, h * hd:(h + 1) * hd]
                vs = v_b[:, h * hd:(h + 1) * hd]
                s = lax.dot_general(qs, ks, (((1,), (1,)), ((), ())),
                                    preferred_element_type=f32)
                s = s - jnp.max(s, axis=-1, keepdims=True)
                p = jnp.exp(s)
                p = p * pl.reciprocal(jnp.sum(p, axis=-1, keepdims=True), approx=True)
                heads.append(jnp.dot(p.astype(bf16), vs, preferred_element_type=f32))
            rows.append(jnp.concatenate(heads, axis=-1))
        o = jnp.concatenate(rows, axis=0)                       # (bb*Lq, D) f32
        return jnp.dot(o.astype(bf16), wo, preferred_element_type=f32) + bo

    # Cross-attention K/V depend only on memory/pos and the (shared) weights:
    # compute once (and cast to bf16 once), reuse in every layer.
    mp = (mem + pos).astype(bf16)
    k_c = (jnp.dot(mp, ca_wk, preferred_element_type=f32) + ca_bk).astype(bf16)
    v_c = (jnp.dot(mem.astype(bf16), ca_wv, preferred_element_type=f32)
           + ca_bv).astype(bf16)

    def layer(_, x):
        # ---- self-attention (q = k = tgt + query_pos, value = tgt) ----
        xq = (x + qpos).astype(bf16)
        qk = jnp.dot(xq, sa_wqk, preferred_element_type=f32) + sa_bqk   # (M, 2D)
        v = jnp.dot(x.astype(bf16), sa_wv, preferred_element_type=f32) + sa_bv
        attn = attend(qk[:, :d].astype(bf16), qk[:, d:].astype(bf16),
                      v.astype(bf16), sa_wo, sa_bo)
        x = _layer_norm(x + attn, n1g, n1b)                   # dropout1 == identity

        # ---- cross-attention (query = tgt + query_pos, key = memory + pos) ----
        q = jnp.dot((x + qpos).astype(bf16), ca_wq,
                    preferred_element_type=f32) + ca_bq
        attn = attend(q.astype(bf16), k_c, v_c, ca_wo, ca_bo)
        x = _layer_norm(x + attn, n2g, n2b)                   # dropout2 == identity

        # ---- feed-forward ----
        h = jnp.maximum(jnp.dot(x.astype(bf16), w1, preferred_element_type=f32) + b1,
                        0.0)
        x2 = jnp.dot(h.astype(bf16), w2, preferred_element_type=f32) + b2
        x = _layer_norm(x + x2, n3g, n3b)                     # dropout3 == identity
        return x

    # Shared weights => same `layer` applied num_layers times (rolled loop: the body
    # is already three large matmul blocks, unrolling would only inflate live ranges).
    x = lax.fori_loop(0, num_layers, layer, tgt0)
    out_ref[...] = x.reshape(bb, lt, d).astype(out_ref.dtype)


# ------------------------------ host wrapper -------------------------------

def _param_spec(arr):
    nd = arr.ndim
    return pl.BlockSpec(arr.shape, lambda g, _n=nd: (0,) * _n)


def _prep_params(params, nhead):
    """PyTorch-layout params -> pre-transposed / pre-scaled bf16 kernel params."""
    (sa_in_w, sa_in_b, sa_out_w, sa_out_b,
     ca_in_w, ca_in_b, ca_out_w, ca_out_b,
     lin1_w, lin1_b, lin2_w, lin2_b,
     n1_g, n1_b, n2_g, n2_b, n3_g, n3_b) = params
    D = sa_out_w.shape[0]
    hd = D // nhead
    scale = hd ** -0.5
    bf16, f32 = jnp.bfloat16, jnp.float32

    # Self-attention: q and k share the same input -> fused (D, 2D) projection.
    # The 1/sqrt(hd) softmax scale is folded into the Q half (weights AND bias).
    sa_wqk = jnp.concatenate([jnp.transpose(sa_in_w[:D]) * scale,
                              jnp.transpose(sa_in_w[D:2 * D])], axis=1).astype(bf16)
    sa_bqk = jnp.concatenate([sa_in_b[:, :D] * scale,
                              sa_in_b[:, D:2 * D]], axis=1).astype(f32)
    sa_wv = jnp.transpose(sa_in_w[2 * D:]).astype(bf16)
    sa_bv = sa_in_b[:, 2 * D:].astype(f32)
    sa_wo = jnp.transpose(sa_out_w).astype(bf16)
    sa_bo = sa_out_b.astype(f32)

    # Cross-attention: q/k/v have different inputs -> separate projections.
    ca_wq = (jnp.transpose(ca_in_w[:D]) * scale).astype(bf16)
    ca_bq = (ca_in_b[:, :D] * scale).astype(f32)
    ca_wk = jnp.transpose(ca_in_w[D:2 * D]).astype(bf16)
    ca_bk = ca_in_b[:, D:2 * D].astype(f32)
    ca_wv = jnp.transpose(ca_in_w[2 * D:]).astype(bf16)
    ca_bv = ca_in_b[:, 2 * D:].astype(f32)
    ca_wo = jnp.transpose(ca_out_w).astype(bf16)
    ca_bo = ca_out_b.astype(f32)

    w1 = jnp.transpose(lin1_w).astype(bf16)
    b1 = lin1_b.astype(f32)
    w2 = jnp.transpose(lin2_w).astype(bf16)
    b2 = lin2_b.astype(f32)

    return (sa_wqk, sa_bqk, sa_wv, sa_bv, sa_wo, sa_bo,
            ca_wq, ca_bq, ca_wk, ca_bk, ca_wv, ca_bv, ca_wo, ca_bo,
            w1, b1, w2, b2,
            n1_g.astype(f32), n1_b.astype(f32),
            n2_g.astype(f32), n2_b.astype(f32),
            n3_g.astype(f32), n3_b.astype(f32))


@functools.partial(jax.jit, static_argnames=("num_layers", "nhead", "batch_block"))
def transformer_decoder(tgt, memory, pos, query_pos, params, *,
                        num_layers, nhead, batch_block=1):
    """Matches TransformerDecoder.forward.  Inputs use PyTorch (L, B, D) layout."""
    tgt_b = jnp.transpose(tgt, (1, 0, 2))
    mem_b = jnp.transpose(memory, (1, 0, 2))
    pos_b = jnp.transpose(pos, (1, 0, 2))
    qpos_b = jnp.transpose(query_pos, (1, 0, 2))

    B, Lt, D = tgt_b.shape
    _, Lm, _ = mem_b.shape
    assert B % batch_block == 0, "batch must be divisible by batch_block"
    assert D % nhead == 0
    bb = batch_block

    kparams = _prep_params(params, nhead)

    seq_t = pl.BlockSpec((bb, Lt, D), lambda g: (g, 0, 0))
    seq_m = pl.BlockSpec((bb, Lm, D), lambda g: (g, 0, 0))
    in_specs = [seq_t, seq_m, seq_m, seq_t] + [_param_spec(p) for p in kparams]
    out_spec = pl.BlockSpec((bb, Lt, D), lambda g: (g, 0, 0))

    # Explicit scoped-VMEM budget: resident weights + double-buffered sequence blocks
    # + headroom, clamped to [32 MiB, 64 MiB] so it is valid on v5e/v6e/v7x.
    itemsize = tgt_b.dtype.itemsize
    param_bytes = sum(int(p.size) * p.dtype.itemsize for p in kparams)
    block_bytes = (3 * bb * Lt * D + 2 * bb * Lm * D) * itemsize
    vmem_limit = int(min(64 << 20,
                         max(32 << 20, 4 * (param_bytes + block_bytes) + (8 << 20))))

    out_b = pl.pallas_call(
        functools.partial(_decoder_kernel, nhead, num_layers),
        out_shape=jax.ShapeDtypeStruct((B, Lt, D), tgt_b.dtype),
        grid=(B // bb,),
        in_specs=in_specs,
        out_specs=out_spec,
        compiler_params=pltpu.CompilerParams(
            dimension_semantics=("parallel",),
            vmem_limit_bytes=vmem_limit),
    )(tgt_b, mem_b, pos_b, qpos_b, *kparams)
    return jnp.transpose(out_b, (1, 0, 2))


# --------------------------- pure-JAX f32 reference -------------------------

def _ref_mha(q_in, k_in, v_in, in_w, in_b, out_w, out_b, nhead):
    d = q_in.shape[-1]
    hd = d // nhead
    q = q_in @ in_w[0:d].T + in_b[0, 0:d]
    k = k_in @ in_w[d:2 * d].T + in_b[0, d:2 * d]
    v = v_in @ in_w[2 * d:].T + in_b[0, 2 * d:]
    q = q * (hd ** -0.5)
    outs = []
    for h in range(nhead):
        s = q[:, h * hd:(h + 1) * hd] @ k[:, h * hd:(h + 1) * hd].T
        p = jax.nn.softmax(s, axis=-1)
        outs.append(p @ v[:, h * hd:(h + 1) * hd])
    return jnp.concatenate(outs, axis=-1) @ out_w.T + out_b[0]


def _ref_ln(x, g, b, eps=1e-5):
    m = jnp.mean(x, axis=-1, keepdims=True)
    v = jnp.mean((x - m) ** 2, axis=-1, keepdims=True)
    return (x - m) / jnp.sqrt(v + eps) * g[0] + b[0]


def _ref_decoder(tgt, memory, pos, qpos, params, num_layers, nhead):
    (sa_in_w, sa_in_b, sa_out_w, sa_out_b,
     ca_in_w, ca_in_b, ca_out_w, ca_out_b,
     lin1_w, lin1_b, lin2_w, lin2_b,
     n1_g, n1_b, n2_g, n2_b, n3_g, n3_b) = params
    out = tgt
    for _ in range(num_layers):
        def per_batch(t, m, p, qp):
            q = t + qp
            t2 = _ref_mha(q, q, t, sa_in_w, sa_in_b, sa_out_w, sa_out_b, nhead)
            t = _ref_ln(t + t2, n1_g, n1_b)
            t2 = _ref_mha(t + qp, m + p, m, ca_in_w, ca_in_b, ca_out_w, ca_out_b, nhead)
            t = _ref_ln(t + t2, n2_g, n2_b)
            h = jnp.maximum(t @ lin1_w.T + lin1_b[0], 0.0)
            t2 = h @ lin2_w.T + lin2_b[0]
            return _ref_ln(t + t2, n3_g, n3_b)
        out = jax.vmap(per_batch, in_axes=(1, 1, 1, 1), out_axes=1)(out, memory, pos, qpos)
    return out


# --------------------------------- main ------------------------------------

if __name__ == "__main__":
    B, Lt, Lm, D, NHEAD, DFF, NUM_LAYERS = 4, 8, 16, 32, 4, 64, 2
    BATCH_BLOCK = 2   # 2 batch elements folded into M per grid step -> grid=(2,)

    key = jax.random.PRNGKey(0)
    ks = jax.random.split(key, 20)

    def w(k, shape, scale=0.02):
        return (scale * jax.random.normal(k, shape)).astype(jnp.float32)

    params = (
        # self-attention (PyTorch MultiheadAttention layout)
        w(ks[0], (3 * D, D)), w(ks[10], (1, 3 * D)),
        w(ks[1], (D, D)),     w(ks[11], (1, D)),
        # cross-attention
        w(ks[2], (3 * D, D)), w(ks[12], (1, 3 * D)),
        w(ks[3], (D, D)),     w(ks[13], (1, D)),
        # FFN
        w(ks[4], (DFF, D)), w(ks[14], (1, DFF)),
        w(ks[5], (D, DFF)), w(ks[15], (1, D)),
        # LayerNorms (gamma, beta) x 3
        jnp.ones((1, D), jnp.float32), jnp.zeros((1, D), jnp.float32),
        jnp.ones((1, D), jnp.float32), jnp.zeros((1, D), jnp.float32),
        jnp.ones((1, D), jnp.float32), jnp.zeros((1, D), jnp.float32),
    )

    tgt = jax.random.normal(ks[6], (Lt, B, D), jnp.float32)
    memory = jax.random.normal(ks[7], (Lm, B, D), jnp.float32)
    pos = jax.random.normal(ks[8], (Lm, B, D), jnp.float32)
    query_pos = jax.random.normal(ks[9], (Lt, B, D), jnp.float32)

    out = transformer_decoder(tgt, memory, pos, query_pos, params,
                              num_layers=NUM_LAYERS, nhead=NHEAD,
                              batch_block=BATCH_BLOCK)
    out = jax.block_until_ready(out)

    ref = _ref_decoder(tgt, memory, pos, query_pos, params, NUM_LAYERS, NHEAD)
    assert out.shape == (Lt, B, D)
    # Tolerance accounts for bf16 MXU operands (weights + activations rounded to bf16,
    # f32 accumulation) and the EUP approximate reciprocal in the softmax.
    assert jnp.allclose(out, ref, atol=3e-2, rtol=3e-2), "mismatch vs f32 reference"

    print("KERNEL_OK")
</pallas_src>

<mosaic_0001>
module attributes {stable_mosaic.version = 11 : i64} {
  func.func @_decoder_kernel(%arg0: i32, %arg1: memref<2x8x32xf32, #tpu.memory_space<vmem>>, %arg2: memref<2x16x32xf32, #tpu.memory_space<vmem>>, %arg3: memref<2x16x32xf32, #tpu.memory_space<vmem>>, %arg4: memref<2x8x32xf32, #tpu.memory_space<vmem>>, %arg5: memref<32x64xbf16, #tpu.memory_space<vmem>>, %arg6: memref<1x64xf32, #tpu.memory_space<vmem>>, %arg7: memref<32x32xbf16, #tpu.memory_space<vmem>>, %arg8: memref<1x32xf32, #tpu.memory_space<vmem>>, %arg9: memref<32x32xbf16, #tpu.memory_space<vmem>>, %arg10: memref<1x32xf32, #tpu.memory_space<vmem>>, %arg11: memref<32x32xbf16, #tpu.memory_space<vmem>>, %arg12: memref<1x32xf32, #tpu.memory_space<vmem>>, %arg13: memref<32x32xbf16, #tpu.memory_space<vmem>>, %arg14: memref<1x32xf32, #tpu.memory_space<vmem>>, %arg15: memref<32x32xbf16, #tpu.memory_space<vmem>>, %arg16: memref<1x32xf32, #tpu.memory_space<vmem>>, %arg17: memref<32x32xbf16, #tpu.memory_space<vmem>>, %arg18: memref<1x32xf32, #tpu.memory_space<vmem>>, %arg19: memref<32x64xbf16, #tpu.memory_space<vmem>>, %arg20: memref<1x64xf32, #tpu.memory_space<vmem>>, %arg21: memref<64x32xbf16, #tpu.memory_space<vmem>>, %arg22: memref<1x32xf32, #tpu.memory_space<vmem>>, %arg23: memref<1x32xf32, #tpu.memory_space<vmem>>, %arg24: memref<1x32xf32, #tpu.memory_space<vmem>>, %arg25: memref<1x32xf32, #tpu.memory_space<vmem>>, %arg26: memref<1x32xf32, #tpu.memory_space<vmem>>, %arg27: memref<1x32xf32, #tpu.memory_space<vmem>>, %arg28: memref<1x32xf32, #tpu.memory_space<vmem>>, %arg29: memref<2x8x32xf32, #tpu.memory_space<vmem>>) attributes {dimension_semantics = [#tpu.dimension_semantics<parallel>], iteration_bounds = array<i64: 2>, scalar_prefetch = 0 : i64, scratch_operands = 0 : i64, tpu.core_type = #tpu.core_type<tc>, window_params = [{transform_indices = @transform_0, window_bounds = array<i64: 2, 8, 32>}, {transform_indices = @transform_1, window_bounds = array<i64: 2, 16, 32>}, {transform_indices = @transform_2, window_bounds = array<i64: 2, 16, 32>}, {transform_indices = @transform_3, window_bounds = array<i64: 2, 8, 32>}, {pipeline_mode = #tpu.pipeline_mode<synchronous>, transform_indices = @transform_4, window_bounds = array<i64: 32, 64>}, {pipeline_mode = #tpu.pipeline_mode<synchronous>, transform_indices = @transform_5, window_bounds = array<i64: 1, 64>}, {pipeline_mode = #tpu.pipeline_mode<synchronous>, transform_indices = @transform_6, window_bounds = array<i64: 32, 32>}, {pipeline_mode = #tpu.pipeline_mode<synchronous>, transform_indices = @transform_7, window_bounds = array<i64: 1, 32>}, {pipeline_mode = #tpu.pipeline_mode<synchronous>, transform_indices = @transform_8, window_bounds = array<i64: 32, 32>}, {pipeline_mode = #tpu.pipeline_mode<synchronous>, transform_indices = @transform_9, window_bounds = array<i64: 1, 32>}, {pipeline_mode = #tpu.pipeline_mode<synchronous>, transform_indices = @transform_10, window_bounds = array<i64: 32, 32>}, {pipeline_mode = #tpu.pipeline_mode<synchronous>, transform_indices = @transform_11, window_bounds = array<i64: 1, 32>}, {pipeline_mode = #tpu.pipeline_mode<synchronous>, transform_indices = @transform_12, window_bounds = array<i64: 32, 32>}, {pipeline_mode = #tpu.pipeline_mode<synchronous>, transform_indices = @transform_13, window_bounds = array<i64: 1, 32>}, {pipeline_mode = #tpu.pipeline_mode<synchronous>, transform_indices = @transform_14, window_bounds = array<i64: 32, 32>}, {pipeline_mode = #tpu.pipeline_mode<synchronous>, transform_indices = @transform_15, window_bounds = array<i64: 1, 32>}, {pipeline_mode = #tpu.pipeline_mode<synchronous>, transform_indices = @transform_16, window_bounds = array<i64: 32, 32>}, {pipeline_mode = #tpu.pipeline_mode<synchronous>, transform_indices = @transform_17, window_bounds = array<i64: 1, 32>}, {pipeline_mode = #tpu.pipeline_mode<synchronous>, transform_indices = @transform_18, window_bounds = array<i64: 32, 64>}, {pipeline_mode = #tpu.pipeline_mode<synchronous>, transform_indices = @transform_19, window_bounds = array<i64: 1, 64>}, {pipeline_mode = #tpu.pipeline_mode<synchronous>, transform_indices = @transform_20, window_bounds = array<i64: 64, 32>}, {pipeline_mode = #tpu.pipeline_mode<synchronous>, transform_indices = @transform_21, window_bounds = array<i64: 1, 32>}, {pipeline_mode = #tpu.pipeline_mode<synchronous>, transform_indices = @transform_22, window_bounds = array<i64: 1, 32>}, {pipeline_mode = #tpu.pipeline_mode<synchronous>, transform_indices = @transform_23, window_bounds = array<i64: 1, 32>}, {pipeline_mode = #tpu.pipeline_mode<synchronous>, transform_indices = @transform_24, window_bounds = array<i64: 1, 32>}, {pipeline_mode = #tpu.pipeline_mode<synchronous>, transform_indices = @transform_25, window_bounds = array<i64: 1, 32>}, {pipeline_mode = #tpu.pipeline_mode<synchronous>, transform_indices = @transform_26, window_bounds = array<i64: 1, 32>}, {pipeline_mode = #tpu.pipeline_mode<synchronous>, transform_indices = @transform_27, window_bounds = array<i64: 1, 32>}, {transform_indices = @transform_28, window_bounds = array<i64: 2, 8, 32>}]} {
    %c0 = arith.constant 0 : index
    %c0_0 = arith.constant 0 : index
    %c0_1 = arith.constant 0 : index
    %0 = vector.load %arg1[%c0, %c0_0, %c0_1] : memref<2x8x32xf32, #tpu.memory_space<vmem>>, vector<2x8x32xf32>
    %1 = vector.shape_cast %0 : vector<2x8x32xf32> to vector<16x32xf32>
    %c0_2 = arith.constant 0 : index
    %c0_3 = arith.constant 0 : index
    %c0_4 = arith.constant 0 : index
    %2 = vector.load %arg4[%c0_2, %c0_3, %c0_4] : memref<2x8x32xf32, #tpu.memory_space<vmem>>, vector<2x8x32xf32>
    %3 = vector.shape_cast %2 : vector<2x8x32xf32> to vector<16x32xf32>
    %c0_5 = arith.constant 0 : index
    %c0_6 = arith.constant 0 : index
    %c0_7 = arith.constant 0 : index
    %4 = vector.load %arg2[%c0_5, %c0_6, %c0_7] : memref<2x16x32xf32, #tpu.memory_space<vmem>>, vector<2x16x32xf32>
    %5 = vector.shape_cast %4 : vector<2x16x32xf32> to vector<32x32xf32>
    %c0_8 = arith.constant 0 : index
    %c0_9 = arith.constant 0 : index
    %c0_10 = arith.constant 0 : index
    %6 = vector.load %arg3[%c0_8, %c0_9, %c0_10] : memref<2x16x32xf32, #tpu.memory_space<vmem>>, vector<2x16x32xf32>
    %7 = vector.shape_cast %6 : vector<2x16x32xf32> to vector<32x32xf32>
    %c0_11 = arith.constant 0 : index
    %c0_12 = arith.constant 0 : index
    %8 = vector.load %arg5[%c0_11, %c0_12] : memref<32x64xbf16, #tpu.memory_space<vmem>>, vector<32x64xbf16>
    %c0_13 = arith.constant 0 : index
    %c0_14 = arith.constant 0 : index
    %9 = vector.load %arg6[%c0_13, %c0_14] : memref<1x64xf32, #tpu.memory_space<vmem>>, vector<1x64xf32>
    %c0_15 = arith.constant 0 : index
    %c0_16 = arith.constant 0 : index
    %10 = vector.load %arg7[%c0_15, %c0_16] : memref<32x32xbf16, #tpu.memory_space<vmem>>, vector<32x32xbf16>
    %c0_17 = arith.constant 0 : index
    %c0_18 = arith.constant 0 : index
    %11 = vector.load %arg8[%c0_17, %c0_18] : memref<1x32xf32, #tpu.memory_space<vmem>>, vector<1x32xf32>
    %c0_19 = arith.constant 0 : index
    %c0_20 = arith.constant 0 : index
    %12 = vector.load %arg9[%c0_19, %c0_20] : memref<32x32xbf16, #tpu.memory_space<vmem>>, vector<32x32xbf16>
    %c0_21 = arith.constant 0 : index
    %c0_22 = arith.constant 0 : index
    %13 = vector.load %arg10[%c0_21, %c0_22] : memref<1x32xf32, #tpu.memory_space<vmem>>, vector<1x32xf32>
    %c0_23 = arith.constant 0 : index
    %c0_24 = arith.constant 0 : index
    %14 = vector.load %arg11[%c0_23, %c0_24] : memref<32x32xbf16, #tpu.memory_space<vmem>>, vector<32x32xbf16>
    %c0_25 = arith.constant 0 : index
    %c0_26 = arith.constant 0 : index
    %15 = vector.load %arg12[%c0_25, %c0_26] : memref<1x32xf32, #tpu.memory_space<vmem>>, vector<1x32xf32>
    %c0_27 = arith.constant 0 : index
    %c0_28 = arith.constant 0 : index
    %16 = vector.load %arg13[%c0_27, %c0_28] : memref<32x32xbf16, #tpu.memory_space<vmem>>, vector<32x32xbf16>
    %c0_29 = arith.constant 0 : index
    %c0_30 = arith.constant 0 : index
    %17 = vector.load %arg14[%c0_29, %c0_30] : memref<1x32xf32, #tpu.memory_space<vmem>>, vector<1x32xf32>
    %c0_31 = arith.constant 0 : index
    %c0_32 = arith.constant 0 : index
    %18 = vector.load %arg15[%c0_31, %c0_32] : memref<32x32xbf16, #tpu.memory_space<vmem>>, vector<32x32xbf16>
    %c0_33 = arith.constant 0 : index
    %c0_34 = arith.constant 0 : index
    %19 = vector.load %arg16[%c0_33, %c0_34] : memref<1x32xf32, #tpu.memory_space<vmem>>, vector<1x32xf32>
    %c0_35 = arith.constant 0 : index
    %c0_36 = arith.constant 0 : index
    %20 = vector.load %arg17[%c0_35, %c0_36] : memref<32x32xbf16, #tpu.memory_space<vmem>>, vector<32x32xbf16>
    %c0_37 = arith.constant 0 : index
    %c0_38 = arith.constant 0 : index
    %21 = vector.load %arg18[%c0_37, %c0_38] : memref<1x32xf32, #tpu.memory_space<vmem>>, vector<1x32xf32>
    %c0_39 = arith.constant 0 : index
    %c0_40 = arith.constant 0 : index
    %22 = vector.load %arg19[%c0_39, %c0_40] : memref<32x64xbf16, #tpu.memory_space<vmem>>, vector<32x64xbf16>
    %c0_41 = arith.constant 0 : index
    %c0_42 = arith.constant 0 : index
    %23 = vector.load %arg20[%c0_41, %c0_42] : memref<1x64xf32, #tpu.memory_space<vmem>>, vector<1x64xf32>
    %c0_43 = arith.constant 0 : index
    %c0_44 = arith.constant 0 : index
    %24 = vector.load %arg21[%c0_43, %c0_44] : memref<64x32xbf16, #tpu.memory_space<vmem>>, vector<64x32xbf16>
    %c0_45 = arith.constant 0 : index
    %c0_46 = arith.constant 0 : index
    %25 = vector.load %arg22[%c0_45, %c0_46] : memref<1x32xf32, #tpu.memory_space<vmem>>, vector<1x32xf32>
    %c0_47 = arith.constant 0 : index
    %c0_48 = arith.constant 0 : index
    %26 = vector.load %arg23[%c0_47, %c0_48] : memref<1x32xf32, #tpu.memory_space<vmem>>, vector<1x32xf32>
    %c0_49 = arith.constant 0 : index
    %c0_50 = arith.constant 0 : index
    %27 = vector.load %arg24[%c0_49, %c0_50] : memref<1x32xf32, #tpu.memory_space<vmem>>, vector<1x32xf32>
    %c0_51 = arith.constant 0 : index
    %c0_52 = arith.constant 0 : index
    %28 = vector.load %arg25[%c0_51, %c0_52] : memref<1x32xf32, #tpu.memory_space<vmem>>, vector<1x32xf32>
    %c0_53 = arith.constant 0 : index
    %c0_54 = arith.constant 0 : index
    %29 = vector.load %arg26[%c0_53, %c0_54] : memref<1x32xf32, #tpu.memory_space<vmem>>, vector<1x32xf32>
    %c0_55 = arith.constant 0 : index
    %c0_56 = arith.constant 0 : index
    %30 = vector.load %arg27[%c0_55, %c0_56] : memref<1x32xf32, #tpu.memory_space<vmem>>, vector<1x32xf32>
    %c0_57 = arith.constant 0 : index
    %c0_58 = arith.constant 0 : index
    %31 = vector.load %arg28[%c0_57, %c0_58] : memref<1x32xf32, #tpu.memory_space<vmem>>, vector<1x32xf32>
    %32 = arith.addf %5, %7 : vector<32x32xf32>
    %33 = arith.truncf %32 : vector<32x32xf32> to vector<32x32xbf16>
    %cst = arith.constant dense<0.000000e+00> : vector<32x32xf32>
    %34 = tpu.matmul %33, %16, %cst {dimension_numbers = #tpu.dot_dimension_numbers<[1], [0], [0], [1], [0, 0, 1, 1], [], []>} : vector<32x32xbf16>, vector<32x32xbf16>, vector<32x32xf32> -> vector<32x32xf32>
    %35 = vector.broadcast %17 : vector<1x32xf32> to vector<32x32xf32>
    %36 = arith.addf %34, %35 : vector<32x32xf32>
    %37 = arith.truncf %36 : vector<32x32xf32> to vector<32x32xbf16>
    %38 = arith.truncf %5 : vector<32x32xf32> to vector<32x32xbf16>
    %cst_59 = arith.constant dense<0.000000e+00> : vector<32x32xf32>
    %39 = tpu.matmul %38, %18, %cst_59 {dimension_numbers = #tpu.dot_dimension_numbers<[1], [0], [0], [1], [0, 0, 1, 1], [], []>} : vector<32x32xbf16>, vector<32x32xbf16>, vector<32x32xf32> -> vector<32x32xf32>
    %40 = vector.broadcast %19 : vector<1x32xf32> to vector<32x32xf32>
    %41 = arith.addf %39, %40 : vector<32x32xf32>
    %42 = arith.truncf %41 : vector<32x32xf32> to vector<32x32xbf16>
    %c0_i32 = arith.constant 0 : i32
    %c2_i32 = arith.constant 2 : i32
    %43 = arith.addi %c0_i32, %c2_i32 : i32
    %c1_i32 = arith.constant 1 : i32
    %44 = scf.for %arg30 = %c0_i32 to %43 step %c1_i32 iter_args(%arg31 = %1) -> (vector<16x32xf32>)  : i32 {
      %47 = arith.addf %arg31, %3 : vector<16x32xf32>
      %48 = arith.truncf %47 : vector<16x32xf32> to vector<16x32xbf16>
      %cst_63 = arith.constant dense<0.000000e+00> : vector<16x64xf32>
      %49 = tpu.matmul %48, %8, %cst_63 {dimension_numbers = #tpu.dot_dimension_numbers<[1], [0], [0], [1], [0, 0, 1, 1], [], []>} : vector<16x32xbf16>, vector<32x64xbf16>, vector<16x64xf32> -> vector<16x64xf32>
      %50 = vector.broadcast %9 : vector<1x64xf32> to vector<16x64xf32>
      %51 = arith.addf %49, %50 : vector<16x64xf32>
      %52 = arith.truncf %arg31 : vector<16x32xf32> to vector<16x32xbf16>
      %cst_64 = arith.constant dense<0.000000e+00> : vector<16x32xf32>
      %53 = tpu.matmul %52, %10, %cst_64 {dimension_numbers = #tpu.dot_dimension_numbers<[1], [0], [0], [1], [0, 0, 1, 1], [], []>} : vector<16x32xbf16>, vector<32x32xbf16>, vector<16x32xf32> -> vector<16x32xf32>
      %54 = vector.broadcast %11 : vector<1x32xf32> to vector<16x32xf32>
      %55 = arith.addf %53, %54 : vector<16x32xf32>
      %56 = vector.extract_strided_slice %51 {offsets = [0, 0], sizes = [16, 32], strides = [1, 1]} : vector<16x64xf32> to vector<16x32xf32>
      %57 = arith.truncf %56 : vector<16x32xf32> to vector<16x32xbf16>
      %58 = vector.extract_strided_slice %51 {offsets = [0, 32], sizes = [16, 32], strides = [1, 1]} : vector<16x64xf32> to vector<16x32xf32>
      %59 = arith.truncf %58 : vector<16x32xf32> to vector<16x32xbf16>
      %60 = arith.truncf %55 : vector<16x32xf32> to vector<16x32xbf16>
      %61 = vector.extract_strided_slice %57 {offsets = [0, 0], sizes = [8, 32], strides = [1, 1]} : vector<16x32xbf16> to vector<8x32xbf16>
      %62 = vector.extract_strided_slice %59 {offsets = [0, 0], sizes = [8, 32], strides = [1, 1]} : vector<16x32xbf16> to vector<8x32xbf16>
      %63 = vector.extract_strided_slice %60 {offsets = [0, 0], sizes = [8, 32], strides = [1, 1]} : vector<16x32xbf16> to vector<8x32xbf16>
      %64 = vector.extract_strided_slice %61 {offsets = [0, 0], sizes = [8, 8], strides = [1, 1]} : vector<8x32xbf16> to vector<8x8xbf16>
      %65 = vector.extract_strided_slice %62 {offsets = [0, 0], sizes = [8, 8], strides = [1, 1]} : vector<8x32xbf16> to vector<8x8xbf16>
      %66 = vector.extract_strided_slice %63 {offsets = [0, 0], sizes = [8, 8], strides = [1, 1]} : vector<8x32xbf16> to vector<8x8xbf16>
      %cst_65 = arith.constant dense<0.000000e+00> : vector<8x8xf32>
      %67 = tpu.matmul %64, %65, %cst_65 {dimension_numbers = #tpu.dot_dimension_numbers<[1], [1], [0], [0], [0, 0, 1, 0], [], []>} : vector<8x8xbf16>, vector<8x8xbf16>, vector<8x8xf32> -> vector<8x8xf32>
      %cst_66 = arith.constant dense<0xFF800000> : vector<8xf32>
      %68 = vector.multi_reduction <maximumf>, %67, %cst_66 [1] : vector<8x8xf32> to vector<8xf32>
      %69 = vector.shape_cast %68 : vector<8xf32> to vector<8x1xf32>
      %70 = vector.broadcast %69 : vector<8x1xf32> to vector<8x8xf32>
      %71 = arith.subf %67, %70 : vector<8x8xf32>
      %72 = math.exp %71 : vector<8x8xf32>
      %cst_67 = arith.constant dense<0.000000e+00> : vector<8xf32>
      %73 = vector.multi_reduction <add>, %72, %cst_67 [1] : vector<8x8xf32> to vector<8xf32>
      %74 = vector.shape_cast %73 : vector<8xf32> to vector<8x1xf32>
      %75 = tpu.reciprocal %74 {approx = true} : vector<8x1xf32> -> vector<8x1xf32>
      %76 = vector.broadcast %75 : vector<8x1xf32> to vector<8x8xf32>
      %77 = arith.mulf %72, %76 : vector<8x8xf32>
      %78 = arith.truncf %77 : vector<8x8xf32> to vector<8x8xbf16>
      %cst_68 = arith.constant dense<0.000000e+00> : vector<8x8xf32>
      %79 = tpu.matmul %78, %66, %cst_68 {dimension_numbers = #tpu.dot_dimension_numbers<[1], [0], [0], [1], [0, 0, 1, 1], [], []>} : vector<8x8xbf16>, vector<8x8xbf16>, vector<8x8xf32> -> vector<8x8xf32>
      %80 = vector.extract_strided_slice %61 {offsets = [0, 8], sizes = [8, 8], strides = [1, 1]} : vector<8x32xbf16> to vector<8x8xbf16>
      %81 = vector.extract_strided_slice %62 {offsets = [0, 8], sizes = [8, 8], strides = [1, 1]} : vector<8x32xbf16> to vector<8x8xbf16>
      %82 = vector.extract_strided_slice %63 {offsets = [0, 8], sizes = [8, 8], strides = [1, 1]} : vector<8x32xbf16> to vector<8x8xbf16>
      %cst_69 = arith.constant dense<0.000000e+00> : vector<8x8xf32>
      %83 = tpu.matmul %80, %81, %cst_69 {dimension_numbers = #tpu.dot_dimension_numbers<[1], [1], [0], [0], [0, 0, 1, 0], [], []>} : vector<8x8xbf16>, vector<8x8xbf16>, vector<8x8xf32> -> vector<8x8xf32>
      %cst_70 = arith.constant dense<0xFF800000> : vector<8xf32>
      %84 = vector.multi_reduction <maximumf>, %83, %cst_70 [1] : vector<8x8xf32> to vector<8xf32>
      %85 = vector.shape_cast %84 : vector<8xf32> to vector<8x1xf32>
      %86 = vector.broadcast %85 : vector<8x1xf32> to vector<8x8xf32>
      %87 = arith.subf %83, %86 : vector<8x8xf32>
      %88 = math.exp %87 : vector<8x8xf32>
      %cst_71 = arith.constant dense<0.000000e+00> : vector<8xf32>
      %89 = vector.multi_reduction <add>, %88, %cst_71 [1] : vector<8x8xf32> to vector<8xf32>
      %90 = vector.shape_cast %89 : vector<8xf32> to vector<8x1xf32>
      %91 = tpu.reciprocal %90 {approx = true} : vector<8x1xf32> -> vector<8x1xf32>
      %92 = vector.broadcast %91 : vector<8x1xf32> to vector<8x8xf32>
      %93 = arith.mulf %88, %92 : vector<8x8xf32>
      %94 = arith.truncf %93 : vector<8x8xf32> to vector<8x8xbf16>
      %cst_72 = arith.constant dense<0.000000e+00> : vector<8x8xf32>
      %95 = tpu.matmul %94, %82, %cst_72 {dimension_numbers = #tpu.dot_dimension_numbers<[1], [0], [0], [1], [0, 0, 1, 1], [], []>} : vector<8x8xbf16>, vector<8x8xbf16>, vector<8x8xf32> -> vector<8x8xf32>
      %96 = vector.extract_strided_slice %61 {offsets = [0, 16], sizes = [8, 8], strides = [1, 1]} : vector<8x32xbf16> to vector<8x8xbf16>
      %97 = vector.extract_strided_slice %62 {offsets = [0, 16], sizes = [8, 8], strides = [1, 1]} : vector<8x32xbf16> to vector<8x8xbf16>
      %98 = vector.extract_strided_slice %63 {offsets = [0, 16], sizes = [8, 8], strides = [1, 1]} : vector<8x32xbf16> to vector<8x8xbf16>
      %cst_73 = arith.constant dense<0.000000e+00> : vector<8x8xf32>
      %99 = tpu.matmul %96, %97, %cst_73 {dimension_numbers = #tpu.dot_dimension_numbers<[1], [1], [0], [0], [0, 0, 1, 0], [], []>} : vector<8x8xbf16>, vector<8x8xbf16>, vector<8x8xf32> -> vector<8x8xf32>
      %cst_74 = arith.constant dense<0xFF800000> : vector<8xf32>
      %100 = vector.multi_reduction <maximumf>, %99, %cst_74 [1] : vector<8x8xf32> to vector<8xf32>
      %101 = vector.shape_cast %100 : vector<8xf32> to vector<8x1xf32>
      %102 = vector.broadcast %101 : vector<8x1xf32> to vector<8x8xf32>
      %103 = arith.subf %99, %102 : vector<8x8xf32>
      %104 = math.exp %103 : vector<8x8xf32>
      %cst_75 = arith.constant dense<0.000000e+00> : vector<8xf32>
      %105 = vector.multi_reduction <add>, %104, %cst_75 [1] : vector<8x8xf32> to vector<8xf32>
      %106 = vector.shape_cast %105 : vector<8xf32> to vector<8x1xf32>
      %107 = tpu.reciprocal %106 {approx = true} : vector<8x1xf32> -> vector<8x1xf32>
      %108 = vector.broadcast %107 : vector<8x1xf32> to vector<8x8xf32>
      %109 = arith.mulf %104, %108 : vector<8x8xf32>
      %110 = arith.truncf %109 : vector<8x8xf32> to vector<8x8xbf16>
      %cst_76 = arith.constant dense<0.000000e+00> : vector<8x8xf32>
      %111 = tpu.matmul %110, %98, %cst_76 {dimension_numbers = #tpu.dot_dimension_numbers<[1], [0], [0], [1], [0, 0, 1, 1], [], []>} : vector<8x8xbf16>, vector<8x8xbf16>, vector<8x8xf32> -> vector<8x8xf32>
      %112 = vector.extract_strided_slice %61 {offsets = [0, 24], sizes = [8, 8], strides = [1, 1]} : vector<8x32xbf16> to vector<8x8xbf16>
      %113 = vector.extract_strided_slice %62 {offsets = [0, 24], sizes = [8, 8], strides = [1, 1]} : vector<8x32xbf16> to vector<8x8xbf16>
      %114 = vector.extract_strided_slice %63 {offsets = [0, 24], sizes = [8, 8], strides = [1, 1]} : vector<8x32xbf16> to vector<8x8xbf16>
      %cst_77 = arith.constant dense<0.000000e+00> : vector<8x8xf32>
      %115 = tpu.matmul %112, %113, %cst_77 {dimension_numbers = #tpu.dot_dimension_numbers<[1], [1], [0], [0], [0, 0, 1, 0], [], []>} : vector<8x8xbf16>, vector<8x8xbf16>, vector<8x8xf32> -> vector<8x8xf32>
      %cst_78 = arith.constant dense<0xFF800000> : vector<8xf32>
      %116 = vector.multi_reduction <maximumf>, %115, %cst_78 [1] : vector<8x8xf32> to vector<8xf32>
      %117 = vector.shape_cast %116 : vector<8xf32> to vector<8x1xf32>
      %118 = vector.broadcast %117 : vector<8x1xf32> to vector<8x8xf32>
      %119 = arith.subf %115, %118 : vector<8x8xf32>
      %120 = math.exp %119 : vector<8x8xf32>
      %cst_79 = arith.constant dense<0.000000e+00> : vector<8xf32>
      %121 = vector.multi_reduction <add>, %120, %cst_79 [1] : vector<8x8xf32> to vector<8xf32>
      %122 = vector.shape_cast %121 : vector<8xf32> to vector<8x1xf32>
      %123 = tpu.reciprocal %122 {approx = true} : vector<8x1xf32> -> vector<8x1xf32>
      %124 = vector.broadcast %123 : vector<8x1xf32> to vector<8x8xf32>
      %125 = arith.mulf %120, %124 : vector<8x8xf32>
      %126 = arith.truncf %125 : vector<8x8xf32> to vector<8x8xbf16>
      %cst_80 = arith.constant dense<0.000000e+00> : vector<8x8xf32>
      %127 = tpu.matmul %126, %114, %cst_80 {dimension_numbers = #tpu.dot_dimension_numbers<[1], [0], [0], [1], [0, 0, 1, 1], [], []>} : vector<8x8xbf16>, vector<8x8xbf16>, vector<8x8xf32> -> vector<8x8xf32>
      %128 = tpu.concatenate %79, %95, %111, %127 in 1 : vector<8x8xf32>, vector<8x8xf32>, vector<8x8xf32>, vector<8x8xf32> -> vector<8x32xf32>
      %129 = vector.extract_strided_slice %57 {offsets = [8, 0], sizes = [8, 32], strides = [1, 1]} : vector<16x32xbf16> to vector<8x32xbf16>
      %130 = vector.extract_strided_slice %59 {offsets = [8, 0], sizes = [8, 32], strides = [1, 1]} : vector<16x32xbf16> to vector<8x32xbf16>
      %131 = vector.extract_strided_slice %60 {offsets = [8, 0], sizes = [8, 32], strides = [1, 1]} : vector<16x32xbf16> to vector<8x32xbf16>
      %132 = vector.extract_strided_slice %129 {offsets = [0, 0], sizes = [8, 8], strides = [1, 1]} : vector<8x32xbf16> to vector<8x8xbf16>
      %133 = vector.extract_strided_slice %130 {offsets = [0, 0], sizes = [8, 8], strides = [1, 1]} : vector<8x32xbf16> to vector<8x8xbf16>
      %134 = vector.extract_strided_slice %131 {offsets = [0, 0], sizes = [8, 8], strides = [1, 1]} : vector<8x32xbf16> to vector<8x8xbf16>
      %cst_81 = arith.constant dense<0.000000e+00> : vector<8x8xf32>
      %135 = tpu.matmul %132, %133, %cst_81 {dimension_numbers = #tpu.dot_dimension_numbers<[1], [1], [0], [0], [0, 0, 1, 0], [], []>} : vector<8x8xbf16>, vector<8x8xbf16>, vector<8x8xf32> -> vector<8x8xf32>
      %cst_82 = arith.constant dense<0xFF800000> : vector<8xf32>
      %136 = vector.multi_reduction <maximumf>, %135, %cst_82 [1] : vector<8x8xf32> to vector<8xf32>
      %137 = vector.shape_cast %136 : vector<8xf32> to vector<8x1xf32>
      %138 = vector.broadcast %137 : vector<8x1xf32> to vector<8x8xf32>
      %139 = arith.subf %135, %138 : vector<8x8xf32>
      %140 = math.exp %139 : vector<8x8xf32>
      %cst_83 = arith.constant dense<0.000000e+00> : vector<8xf32>
      %141 = vector.multi_reduction <add>, %140, %cst_83 [1] : vector<8x8xf32> to vector<8xf32>
      %142 = vector.shape_cast %141 : vector<8xf32> to vector<8x1xf32>
      %143 = tpu.reciprocal %142 {approx = true} : vector<8x1xf32> -> vector<8x1xf32>
      %144 = vector.broadcast %143 : vector<8x1xf32> to vector<8x8xf32>
      %145 = arith.mulf %140, %144 : vector<8x8xf32>
      %146 = arith.truncf %145 : vector<8x8xf32> to vector<8x8xbf16>
      %cst_84 = arith.constant dense<0.000000e+00> : vector<8x8xf32>
      %147 = tpu.matmul %146, %134, %cst_84 {dimension_numbers = #tpu.dot_dimension_numbers<[1], [0], [0], [1], [0, 0, 1, 1], [], []>} : vector<8x8xbf16>, vector<8x8xbf16>, vector<8x8xf32> -> vector<8x8xf32>
      %148 = vector.extract_strided_slice %129 {offsets = [0, 8], sizes = [8, 8], strides = [1, 1]} : vector<8x32xbf16> to vector<8x8xbf16>
      %149 = vector.extract_strided_slice %130 {offsets = [0, 8], sizes = [8, 8], strides = [1, 1]} : vector<8x32xbf16> to vector<8x8xbf16>
      %150 = vector.extract_strided_slice %131 {offsets = [0, 8], sizes = [8, 8], strides = [1, 1]} : vector<8x32xbf16> to vector<8x8xbf16>
      %cst_85 = arith.constant dense<0.000000e+00> : vector<8x8xf32>
      %151 = tpu.matmul %148, %149, %cst_85 {dimension_numbers = #tpu.dot_dimension_numbers<[1], [1], [0], [0], [0, 0, 1, 0], [], []>} : vector<8x8xbf16>, vector<8x8xbf16>, vector<8x8xf32> -> vector<8x8xf32>
      %cst_86 = arith.constant dense<0xFF800000> : vector<8xf32>
      %152 = vector.multi_reduction <maximumf>, %151, %cst_86 [1] : vector<8x8xf32> to vector<8xf32>
      %153 = vector.shape_cast %152 : vector<8xf32> to vector<8x1xf32>
      %154 = vector.broadcast %153 : vector<8x1xf32> to vector<8x8xf32>
      %155 = arith.subf %151, %154 : vector<8x8xf32>
      %156 = math.exp %155 : vector<8x8xf32>
      %cst_87 = arith.constant dense<0.000000e+00> : vector<8xf32>
      %157 = vector.multi_reduction <add>, %156, %cst_87 [1] : vector<8x8xf32> to vector<8xf32>
      %158 = vector.shape_cast %157 : vector<8xf32> to vector<8x1xf32>
      %159 = tpu.reciprocal %158 {approx = true} : vector<8x1xf32> -> vector<8x1xf32>
      %160 = vector.broadcast %159 : vector<8x1xf32> to vector<8x8xf32>
      %161 = arith.mulf %156, %160 : vector<8x8xf32>
      %162 = arith.truncf %161 : vector<8x8xf32> to vector<8x8xbf16>
      %cst_88 = arith.constant dense<0.000000e+00> : vector<8x8xf32>
      %163 = tpu.matmul %162, %150, %cst_88 {dimension_numbers = #tpu.dot_dimension_numbers<[1], [0], [0], [1], [0, 0, 1, 1], [], []>} : vector<8x8xbf16>, vector<8x8xbf16>, vector<8x8xf32> -> vector<8x8xf32>
      %164 = vector.extract_strided_slice %129 {offsets = [0, 16], sizes = [8, 8], strides = [1, 1]} : vector<8x32xbf16> to vector<8x8xbf16>
      %165 = vector.extract_strided_slice %130 {offsets = [0, 16], sizes = [8, 8], strides = [1, 1]} : vector<8x32xbf16> to vector<8x8xbf16>
      %166 = vector.extract_strided_slice %131 {offsets = [0, 16], sizes = [8, 8], strides = [1, 1]} : vector<8x32xbf16> to vector<8x8xbf16>
      %cst_89 = arith.constant dense<0.000000e+00> : vector<8x8xf32>
      %167 = tpu.matmul %164, %165, %cst_89 {dimension_numbers = #tpu.dot_dimension_numbers<[1], [1], [0], [0], [0, 0, 1, 0], [], []>} : vector<8x8xbf16>, vector<8x8xbf16>, vector<8x8xf32> -> vector<8x8xf32>
      %cst_90 = arith.constant dense<0xFF800000> : vector<8xf32>
      %168 = vector.multi_reduction <maximumf>, %167, %cst_90 [1] : vector<8x8xf32> to vector<8xf32>
      %169 = vector.shape_cast %168 : vector<8xf32> to vector<8x1xf32>
      %170 = vector.broadcast %169 : vector<8x1xf32> to vector<8x8xf32>
      %171 = arith.subf %167, %170 : vector<8x8xf32>
      %172 = math.exp %171 : vector<8x8xf32>
      %cst_91 = arith.constant dense<0.000000e+00> : vector<8xf32>
      %173 = vector.multi_reduction <add>, %172, %cst_91 [1] : vector<8x8xf32> to vector<8xf32>
      %174 = vector.shape_cast %173 : vector<8xf32> to vector<8x1xf32>
      %175 = tpu.reciprocal %174 {approx = true} : vector<8x1xf32> -> vector<8x1xf32>
      %176 = vector.broadcast %175 : vector<8x1xf32> to vector<8x8xf32>
      %177 = arith.mulf %172, %176 : vector<8x8xf32>
      %178 = arith.truncf %177 : vector<8x8xf32> to vector<8x8xbf16>
      %cst_92 = arith.constant dense<0.000000e+00> : vector<8x8xf32>
      %179 = tpu.matmul %178, %166, %cst_92 {dimension_numbers = #tpu.dot_dimension_numbers<[1], [0], [0], [1], [0, 0, 1, 1], [], []>} : vector<8x8xbf16>, vector<8x8xbf16>, vector<8x8xf32> -> vector<8x8xf32>
      %180 = vector.extract_strided_slice %129 {offsets = [0, 24], sizes = [8, 8], strides = [1, 1]} : vector<8x32xbf16> to vector<8x8xbf16>
      %181 = vector.extract_strided_slice %130 {offsets = [0, 24], sizes = [8, 8], strides = [1, 1]} : vector<8x32xbf16> to vector<8x8xbf16>
      %182 = vector.extract_strided_slice %131 {offsets = [0, 24], sizes = [8, 8], strides = [1, 1]} : vector<8x32xbf16> to vector<8x8xbf16>
      %cst_93 = arith.constant dense<0.000000e+00> : vector<8x8xf32>
      %183 = tpu.matmul %180, %181, %cst_93 {dimension_numbers = #tpu.dot_dimension_numbers<[1], [1], [0], [0], [0, 0, 1, 0], [], []>} : vector<8x8xbf16>, vector<8x8xbf16>, vector<8x8xf32> -> vector<8x8xf32>
      %cst_94 = arith.constant dense<0xFF800000> : vector<8xf32>
      %184 = vector.multi_reduction <maximumf>, %183, %cst_94 [1] : vector<8x8xf32> to vector<8xf32>
      %185 = vector.shape_cast %184 : vector<8xf32> to vector<8x1xf32>
      %186 = vector.broadcast %185 : vector<8x1xf32> to vector<8x8xf32>
      %187 = arith.subf %183, %186 : vector<8x8xf32>
      %188 = math.exp %187 : vector<8x8xf32>
      %cst_95 = arith.constant dense<0.000000e+00> : vector<8xf32>
      %189 = vector.multi_reduction <add>, %188, %cst_95 [1] : vector<8x8xf32> to vector<8xf32>
      %190 = vector.shape_cast %189 : vector<8xf32> to vector<8x1xf32>
      %191 = tpu.reciprocal %190 {approx = true} : vector<8x1xf32> -> vector<8x1xf32>
      %192 = vector.broadcast %191 : vector<8x1xf32> to vector<8x8xf32>
      %193 = arith.mulf %188, %192 : vector<8x8xf32>
      %194 = arith.truncf %193 : vector<8x8xf32> to vector<8x8xbf16>
      %cst_96 = arith.constant dense<0.000000e+00> : vector<8x8xf32>
      %195 = tpu.matmul %194, %182, %cst_96 {dimension_numbers = #tpu.dot_dimension_numbers<[1], [0], [0], [1], [0, 0, 1, 1], [], []>} : vector<8x8xbf16>, vector<8x8xbf16>, vector<8x8xf32> -> vector<8x8xf32>
      %196 = tpu.concatenate %147, %163, %179, %195 in 1 : vector<8x8xf32>, vector<8x8xf32>, vector<8x8xf32>, vector<8x8xf32> -> vector<8x32xf32>
      %197 = tpu.concatenate %128, %196 in 0 : vector<8x32xf32>, vector<8x32xf32> -> vector<16x32xf32>
      %198 = arith.truncf %197 : vector<16x32xf32> to vector<16x32xbf16>
      %cst_97 = arith.constant dense<0.000000e+00> : vector<16x32xf32>
      %199 = tpu.matmul %198, %12, %cst_97 {dimension_numbers = #tpu.dot_dimension_numbers<[1], [0], [0], [1], [0, 0, 1, 1], [], []>} : vector<16x32xbf16>, vector<32x32xbf16>, vector<16x32xf32> -> vector<16x32xf32>
      %200 = vector.broadcast %13 : vector<1x32xf32> to vector<16x32xf32>
      %201 = arith.addf %199, %200 : vector<16x32xf32>
      %202 = arith.addf %arg31, %201 : vector<16x32xf32>
      %cst_98 = arith.constant dense<0.000000e+00> : vector<16xf32>
      %203 = vector.multi_reduction <add>, %202, %cst_98 [1] : vector<16x32xf32> to vector<16xf32>
      %204 = vector.shape_cast %203 : vector<16xf32> to vector<16x1xf32>
      %cst_99 = arith.constant 3.200000e+01 : f32
      %205 = vector.broadcast %cst_99 : f32 to vector<16x1xf32>
      %206 = arith.divf %204, %205 : vector<16x1xf32>
      %207 = vector.broadcast %206 : vector<16x1xf32> to vector<16x32xf32>
      %208 = arith.subf %202, %207 : vector<16x32xf32>
      %209 = arith.mulf %208, %208 : vector<16x32xf32>
      %cst_100 = arith.constant dense<0.000000e+00> : vector<16xf32>
      %210 = vector.multi_reduction <add>, %209, %cst_100 [1] : vector<16x32xf32> to vector<16xf32>
      %211 = vector.shape_cast %210 : vector<16xf32> to vector<16x1xf32>
      %cst_101 = arith.constant 3.200000e+01 : f32
      %212 = vector.broadcast %cst_101 : f32 to vector<16x1xf32>
      %213 = arith.divf %211, %212 : vector<16x1xf32>
      %214 = vector.broadcast %206 : vector<16x1xf32> to vector<16x32xf32>
      %215 = arith.subf %202, %214 : vector<16x32xf32>
      %cst_102 = arith.constant 9.99999974E-6 : f32
      %216 = vector.broadcast %cst_102 : f32 to vector<16x1xf32>
      %217 = arith.addf %213, %216 : vector<16x1xf32>
      %218 = math.rsqrt %217 : vector<16x1xf32>
      %219 = vector.broadcast %218 : vector<16x1xf32> to vector<16x32xf32>
      %220 = arith.mulf %215, %219 : vector<16x32xf32>
      %221 = vector.broadcast %26 : vector<1x32xf32> to vector<16x32xf32>
      %222 = arith.mulf %220, %221 : vector<16x32xf32>
      %223 = vector.broadcast %27 : vector<1x32xf32> to vector<16x32xf32>
      %224 = arith.addf %222, %223 : vector<16x32xf32>
      %225 = arith.addf %224, %3 : vector<16x32xf32>
      %226 = arith.truncf %225 : vector<16x32xf32> to vector<16x32xbf16>
      %cst_103 = arith.constant dense<0.000000e+00> : vector<16x32xf32>
      %227 = tpu.matmul %226, %14, %cst_103 {dimension_numbers = #tpu.dot_dimension_numbers<[1], [0], [0], [1], [0, 0, 1, 1], [], []>} : vector<16x32xbf16>, vector<32x32xbf16>, vector<16x32xf32> -> vector<16x32xf32>
      %228 = vector.broadcast %15 : vector<1x32xf32> to vector<16x32xf32>
      %229 = arith.addf %227, %228 : vector<16x32xf32>
      %230 = arith.truncf %229 : vector<16x32xf32> to vector<16x32xbf16>
      %231 = vector.extract_strided_slice %230 {offsets = [0, 0], sizes = [8, 32], strides = [1, 1]} : vector<16x32xbf16> to vector<8x32xbf16>
      %232 = vector.extract_strided_slice %37 {offsets = [0, 0], sizes = [16, 32], strides = [1, 1]} : vector<32x32xbf16> to vector<16x32xbf16>
      %233 = vector.extract_strided_slice %42 {offsets = [0, 0], sizes = [16, 32], strides = [1, 1]} : vector<32x32xbf16> to vector<16x32xbf16>
      %234 = vector.extract_strided_slice %231 {offsets = [0, 0], sizes = [8, 8], strides = [1, 1]} : vector<8x32xbf16> to vector<8x8xbf16>
      %235 = vector.extract_strided_slice %232 {offsets = [0, 0], sizes = [16, 8], strides = [1, 1]} : vector<16x32xbf16> to vector<16x8xbf16>
      %236 = vector.extract_strided_slice %233 {offsets = [0, 0], sizes = [16, 8], strides = [1, 1]} : vector<16x32xbf16> to vector<16x8xbf16>
      %cst_104 = arith.constant dense<0.000000e+00> : vector<8x16xf32>
      %237 = tpu.matmul %234, %235, %cst_104 {dimension_numbers = #tpu.dot_dimension_numbers<[1], [1], [0], [0], [0, 0, 1, 0], [], []>} : vector<8x8xbf16>, vector<16x8xbf16>, vector<8x16xf32> -> vector<8x16xf32>
      %cst_105 = arith.constant dense<0xFF800000> : vector<8xf32>
      %238 = vector.multi_reduction <maximumf>, %237, %cst_105 [1] : vector<8x16xf32> to vector<8xf32>
      %239 = vector.shape_cast %238 : vector<8xf32> to vector<8x1xf32>
      %240 = vector.broadcast %239 : vector<8x1xf32> to vector<8x16xf32>
      %241 = arith.subf %237, %240 : vector<8x16xf32>
      %242 = math.exp %241 : vector<8x16xf32>
      %cst_106 = arith.constant dense<0.000000e+00> : vector<8xf32>
      %243 = vector.multi_reduction <add>, %242, %cst_106 [1] : vector<8x16xf32> to vector<8xf32>
      %244 = vector.shape_cast %243 : vector<8xf32> to vector<8x1xf32>
      %245 = tpu.reciprocal %244 {approx = true} : vector<8x1xf32> -> vector<8x1xf32>
      %246 = vector.broadcast %245 : vector<8x1xf32> to vector<8x16xf32>
      %247 = arith.mulf %242, %246 : vector<8x16xf32>
      %248 = arith.truncf %247 : vector<8x16xf32> to vector<8x16xbf16>
      %cst_107 = arith.constant dense<0.000000e+00> : vector<8x8xf32>
      %249 = tpu.matmul %248, %236, %cst_107 {dimension_numbers = #tpu.dot_dimension_numbers<[1], [0], [0], [1], [0, 0, 1, 1], [], []>} : vector<8x16xbf16>, vector<16x8xbf16>, vector<8x8xf32> -> vector<8x8xf32>
      %250 = vector.extract_strided_slice %231 {offsets = [0, 8], sizes = [8, 8], strides = [1, 1]} : vector<8x32xbf16> to vector<8x8xbf16>
      %251 = vector.extract_strided_slice %232 {offsets = [0, 8], sizes = [16, 8], strides = [1, 1]} : vector<16x32xbf16> to vector<16x8xbf16>
      %252 = vector.extract_strided_slice %233 {offsets = [0, 8], sizes = [16, 8], strides = [1, 1]} : vector<16x32xbf16> to vector<16x8xbf16>
      %cst_108 = arith.constant dense<0.000000e+00> : vector<8x16xf32>
      %253 = tpu.matmul %250, %251, %cst_108 {dimension_numbers = #tpu.dot_dimension_numbers<[1], [1], [0], [0], [0, 0, 1, 0], [], []>} : vector<8x8xbf16>, vector<16x8xbf16>, vector<8x16xf32> -> vector<8x16xf32>
      %cst_109 = arith.constant dense<0xFF800000> : vector<8xf32>
      %254 = vector.multi_reduction <maximumf>, %253, %cst_109 [1] : vector<8x16xf32> to vector<8xf32>
      %255 = vector.shape_cast %254 : vector<8xf32> to vector<8x1xf32>
      %256 = vector.broadcast %255 : vector<8x1xf32> to vector<8x16xf32>
      %257 = arith.subf %253, %256 : vector<8x16xf32>
      %258 = math.exp %257 : vector<8x16xf32>
      %cst_110 = arith.constant dense<0.000000e+00> : vector<8xf32>
      %259 = vector.multi_reduction <add>, %258, %cst_110 [1] : vector<8x16xf32> to vector<8xf32>
      %260 = vector.shape_cast %259 : vector<8xf32> to vector<8x1xf32>
      %261 = tpu.reciprocal %260 {approx = true} : vector<8x1xf32> -> vector<8x1xf32>
      %262 = vector.broadcast %261 : vector<8x1xf32> to vector<8x16xf32>
      %263 = arith.mulf %258, %262 : vector<8x16xf32>
      %264 = arith.truncf %263 : vector<8x16xf32> to vector<8x16xbf16>
      %cst_111 = arith.constant dense<0.000000e+00> : vector<8x8xf32>
      %265 = tpu.matmul %264, %252, %cst_111 {dimension_numbers = #tpu.dot_dimension_numbers<[1], [0], [0], [1], [0, 0, 1, 1], [], []>} : vector<8x16xbf16>, vector<16x8xbf16>, vector<8x8xf32> -> vector<8x8xf32>
      %266 = vector.extract_strided_slice %231 {offsets = [0, 16], sizes = [8, 8], strides = [1, 1]} : vector<8x32xbf16> to vector<8x8xbf16>
      %267 = vector.extract_strided_slice %232 {offsets = [0, 16], sizes = [16, 8], strides = [1, 1]} : vector<16x32xbf16> to vector<16x8xbf16>
      %268 = vector.extract_strided_slice %233 {offsets = [0, 16], sizes = [16, 8], strides = [1, 1]} : vector<16x32xbf16> to vector<16x8xbf16>
      %cst_112 = arith.constant dense<0.000000e+00> : vector<8x16xf32>
      %269 = tpu.matmul %266, %267, %cst_112 {dimension_numbers = #tpu.dot_dimension_numbers<[1], [1], [0], [0], [0, 0, 1, 0], [], []>} : vector<8x8xbf16>, vector<16x8xbf16>, vector<8x16xf32> -> vector<8x16xf32>
      %cst_113 = arith.constant dense<0xFF800000> : vector<8xf32>
      %270 = vector.multi_reduction <maximumf>, %269, %cst_113 [1] : vector<8x16xf32> to vector<8xf32>
      %271 = vector.shape_cast %270 : vector<8xf32> to vector<8x1xf32>
      %272 = vector.broadcast %271 : vector<8x1xf32> to vector<8x16xf32>
      %273 = arith.subf %269, %272 : vector<8x16xf32>
      %274 = math.exp %273 : vector<8x16xf32>
      %cst_114 = arith.constant dense<0.000000e+00> : vector<8xf32>
      %275 = vector.multi_reduction <add>, %274, %cst_114 [1] : vector<8x16xf32> to vector<8xf32>
      %276 = vector.shape_cast %275 : vector<8xf32> to vector<8x1xf32>
      %277 = tpu.reciprocal %276 {approx = true} : vector<8x1xf32> -> vector<8x1xf32>
      %278 = vector.broadcast %277 : vector<8x1xf32> to vector<8x16xf32>
      %279 = arith.mulf %274, %278 : vector<8x16xf32>
      %280 = arith.truncf %279 : vector<8x16xf32> to vector<8x16xbf16>
      %cst_115 = arith.constant dense<0.000000e+00> : vector<8x8xf32>
      %281 = tpu.matmul %280, %268, %cst_115 {dimension_numbers = #tpu.dot_dimension_numbers<[1], [0], [0], [1], [0, 0, 1, 1], [], []>} : vector<8x16xbf16>, vector<16x8xbf16>, vector<8x8xf32> -> vector<8x8xf32>
      %282 = vector.extract_strided_slice %231 {offsets = [0, 24], sizes = [8, 8], strides = [1, 1]} : vector<8x32xbf16> to vector<8x8xbf16>
      %283 = vector.extract_strided_slice %232 {offsets = [0, 24], sizes = [16, 8], strides = [1, 1]} : vector<16x32xbf16> to vector<16x8xbf16>
      %284 = vector.extract_strided_slice %233 {offsets = [0, 24], sizes = [16, 8], strides = [1, 1]} : vector<16x32xbf16> to vector<16x8xbf16>
      %cst_116 = arith.constant dense<0.000000e+00> : vector<8x16xf32>
      %285 = tpu.matmul %282, %283, %cst_116 {dimension_numbers = #tpu.dot_dimension_numbers<[1], [1], [0], [0], [0, 0, 1, 0], [], []>} : vector<8x8xbf16>, vector<16x8xbf16>, vector<8x16xf32> -> vector<8x16xf32>
      %cst_117 = arith.constant dense<0xFF800000> : vector<8xf32>
      %286 = vector.multi_reduction <maximumf>, %285, %cst_117 [1] : vector<8x16xf32> to vector<8xf32>
      %287 = vector.shape_cast %286 : vector<8xf32> to vector<8x1xf32>
      %288 = vector.broadcast %287 : vector<8x1xf32> to vector<8x16xf32>
      %289 = arith.subf %285, %288 : vector<8x16xf32>
      %290 = math.exp %289 : vector<8x16xf32>
      %cst_118 = arith.constant dense<0.000000e+00> : vector<8xf32>
      %291 = vector.multi_reduction <add>, %290, %cst_118 [1] : vector<8x16xf32> to vector<8xf32>
      %292 = vector.shape_cast %291 : vector<8xf32> to vector<8x1xf32>
      %293 = tpu.reciprocal %292 {approx = true} : vector<8x1xf32> -> vector<8x1xf32>
      %294 = vector.broadcast %293 : vector<8x1xf32> to vector<8x16xf32>
      %295 = arith.mulf %290, %294 : vector<8x16xf32>
      %296 = arith.truncf %295 : vector<8x16xf32> to vector<8x16xbf16>
      %cst_119 = arith.constant dense<0.000000e+00> : vector<8x8xf32>
      %297 = tpu.matmul %296, %284, %cst_119 {dimension_numbers = #tpu.dot_dimension_numbers<[1], [0], [0], [1], [0, 0, 1, 1], [], []>} : vector<8x16xbf16>, vector<16x8xbf16>, vector<8x8xf32> -> vector<8x8xf32>
      %298 = tpu.concatenate %249, %265, %281, %297 in 1 : vector<8x8xf32>, vector<8x8xf32>, vector<8x8xf32>, vector<8x8xf32> -> vector<8x32xf32>
      %299 = vector.extract_strided_slice %230 {offsets = [8, 0], sizes = [8, 32], strides = [1, 1]} : vector<16x32xbf16> to vector<8x32xbf16>
      %300 = vector.extract_strided_slice %37 {offsets = [16, 0], sizes = [16, 32], strides = [1, 1]} : vector<32x32xbf16> to vector<16x32xbf16>
      %301 = vector.extract_strided_slice %42 {offsets = [16, 0], sizes = [16, 32], strides = [1, 1]} : vector<32x32xbf16> to vector<16x32xbf16>
      %302 = vector.extract_strided_slice %299 {offsets = [0, 0], sizes = [8, 8], strides = [1, 1]} : vector<8x32xbf16> to vector<8x8xbf16>
      %303 = vector.extract_strided_slice %300 {offsets = [0, 0], sizes = [16, 8], strides = [1, 1]} : vector<16x32xbf16> to vector<16x8xbf16>
      %304 = vector.extract_strided_slice %301 {offsets = [0, 0], sizes = [16, 8], strides = [1, 1]} : vector<16x32xbf16> to vector<16x8xbf16>
      %cst_120 = arith.constant dense<0.000000e+00> : vector<8x16xf32>
      %305 = tpu.matmul %302, %303, %cst_120 {dimension_numbers = #tpu.dot_dimension_numbers<[1], [1], [0], [0], [0, 0, 1, 0], [], []>} : vector<8x8xbf16>, vector<16x8xbf16>, vector<8x16xf32> -> vector<8x16xf32>
      %cst_121 = arith.constant dense<0xFF800000> : vector<8xf32>
      %306 = vector.multi_reduction <maximumf>, %305, %cst_121 [1] : vector<8x16xf32> to vector<8xf32>
      %307 = vector.shape_cast %306 : vector<8xf32> to vector<8x1xf32>
      %308 = vector.broadcast %307 : vector<8x1xf32> to vector<8x16xf32>
      %309 = arith.subf %305, %308 : vector<8x16xf32>
      %310 = math.exp %309 : vector<8x16xf32>
      %cst_122 = arith.constant dense<0.000000e+00> : vector<8xf32>
      %311 = vector.multi_reduction <add>, %310, %cst_122 [1] : vector<8x16xf32> to vector<8xf32>
      %312 = vector.shape_cast %311 : vector<8xf32> to vector<8x1xf32>
      %313 = tpu.reciprocal %312 {approx = true} : vector<8x1xf32> -> vector<8x1xf32>
      %314 = vector.broadcast %313 : vector<8x1xf32> to vector<8x16xf32>
      %315 = arith.mulf %310, %314 : vector<8x16xf32>
      %316 = arith.truncf %315 : vector<8x16xf32> to vector<8x16xbf16>
      %cst_123 = arith.constant dense<0.000000e+00> : vector<8x8xf32>
      %317 = tpu.matmul %316, %304, %cst_123 {dimension_numbers = #tpu.dot_dimension_numbers<[1], [0], [0], [1], [0, 0, 1, 1], [], []>} : vector<8x16xbf16>, vector<16x8xbf16>, vector<8x8xf32> -> vector<8x8xf32>
      %318 = vector.extract_strided_slice %299 {offsets = [0, 8], sizes = [8, 8], strides = [1, 1]} : vector<8x32xbf16> to vector<8x8xbf16>
      %319 = vector.extract_strided_slice %300 {offsets = [0, 8], sizes = [16, 8], strides = [1, 1]} : vector<16x32xbf16> to vector<16x8xbf16>
      %320 = vector.extract_strided_slice %301 {offsets = [0, 8], sizes = [16, 8], strides = [1, 1]} : vector<16x32xbf16> to vector<16x8xbf16>
      %cst_124 = arith.constant dense<0.000000e+00> : vector<8x16xf32>
      %321 = tpu.matmul %318, %319, %cst_124 {dimension_numbers = #tpu.dot_dimension_numbers<[1], [1], [0], [0], [0, 0, 1, 0], [], []>} : vector<8x8xbf16>, vector<16x8xbf16>, vector<8x16xf32> -> vector<8x16xf32>
      %cst_125 = arith.constant dense<0xFF800000> : vector<8xf32>
      %322 = vector.multi_reduction <maximumf>, %321, %cst_125 [1] : vector<8x16xf32> to vector<8xf32>
      %323 = vector.shape_cast %322 : vector<8xf32> to vector<8x1xf32>
      %324 = vector.broadcast %323 : vector<8x1xf32> to vector<8x16xf32>
      %325 = arith.subf %321, %324 : vector<8x16xf32>
      %326 = math.exp %325 : vector<8x16xf32>
      %cst_126 = arith.constant dense<0.000000e+00> : vector<8xf32>
      %327 = vector.multi_reduction <add>, %326, %cst_126 [1] : vector<8x16xf32> to vector<8xf32>
      %328 = vector.shape_cast %327 : vector<8xf32> to vector<8x1xf32>
      %329 = tpu.reciprocal %328 {approx = true} : vector<8x1xf32> -> vector<8x1xf32>
      %330 = vector.broadcast %329 : vector<8x1xf32> to vector<8x16xf32>
      %331 = arith.mulf %326, %330 : vector<8x16xf32>
      %332 = arith.truncf %331 : vector<8x16xf32> to vector<8x16xbf16>
      %cst_127 = arith.constant dense<0.000000e+00> : vector<8x8xf32>
      %333 = tpu.matmul %332, %320, %cst_127 {dimension_numbers = #tpu.dot_dimension_numbers<[1], [0], [0], [1], [0, 0, 1, 1], [], []>} : vector<8x16xbf16>, vector<16x8xbf16>, vector<8x8xf32> -> vector<8x8xf32>
      %334 = vector.extract_strided_slice %299 {offsets = [0, 16], sizes = [8, 8], strides = [1, 1]} : vector<8x32xbf16> to vector<8x8xbf16>
      %335 = vector.extract_strided_slice %300 {offsets = [0, 16], sizes = [16, 8], strides = [1, 1]} : vector<16x32xbf16> to vector<16x8xbf16>
      %336 = vector.extract_strided_slice %301 {offsets = [0, 16], sizes = [16, 8], strides = [1, 1]} : vector<16x32xbf16> to vector<16x8xbf16>
      %cst_128 = arith.constant dense<0.000000e+00> : vector<8x16xf32>
      %337 = tpu.matmul %334, %335, %cst_128 {dimension_numbers = #tpu.dot_dimension_numbers<[1], [1], [0], [0], [0, 0, 1, 0], [], []>} : vector<8x8xbf16>, vector<16x8xbf16>, vector<8x16xf32> -> vector<8x16xf32>
      %cst_129 = arith.constant dense<0xFF800000> : vector<8xf32>
      %338 = vector.multi_reduction <maximumf>, %337, %cst_129 [1] : vector<8x16xf32> to vector<8xf32>
      %339 = vector.shape_cast %338 : vector<8xf32> to vector<8x1xf32>
      %340 = vector.broadcast %339 : vector<8x1xf32> to vector<8x16xf32>
      %341 = arith.subf %337, %340 : vector<8x16xf32>
      %342 = math.exp %341 : vector<8x16xf32>
      %cst_130 = arith.constant dense<0.000000e+00> : vector<8xf32>
      %343 = vector.multi_reduction <add>, %342, %cst_130 [1] : vector<8x16xf32> to vector<8xf32>
      %344 = vector.shape_cast %343 : vector<8xf32> to vector<8x1xf32>
      %345 = tpu.reciprocal %344 {approx = true} : vector<8x1xf32> -> vector<8x1xf32>
      %346 = vector.broadcast %345 : vector<8x1xf32> to vector<8x16xf32>
      %347 = arith.mulf %342, %346 : vector<8x16xf32>
      %348 = arith.truncf %347 : vector<8x16xf32> to vector<8x16xbf16>
      %cst_131 = arith.constant dense<0.000000e+00> : vector<8x8xf32>
      %349 = tpu.matmul %348, %336, %cst_131 {dimension_numbers = #tpu.dot_dimension_numbers<[1], [0], [0], [1], [0, 0, 1, 1], [], []>} : vector<8x16xbf16>, vector<16x8xbf16>, vector<8x8xf32> -> vector<8x8xf32>
      %350 = vector.extract_strided_slice %299 {offsets = [0, 24], sizes = [8, 8], strides = [1, 1]} : vector<8x32xbf16> to vector<8x8xbf16>
      %351 = vector.extract_strided_slice %300 {offsets = [0, 24], sizes = [16, 8], strides = [1, 1]} : vector<16x32xbf16> to vector<16x8xbf16>
      %352 = vector.extract_strided_slice %301 {offsets = [0, 24], sizes = [16, 8], strides = [1, 1]} : vector<16x32xbf16> to vector<16x8xbf16>
      %cst_132 = arith.constant dense<0.000000e+00> : vector<8x16xf32>
      %353 = tpu.matmul %350, %351, %cst_132 {dimension_numbers = #tpu.dot_dimension_numbers<[1], [1], [0], [0], [0, 0, 1, 0], [], []>} : vector<8x8xbf16>, vector<16x8xbf16>, vector<8x16xf32> -> vector<8x16xf32>
      %cst_133 = arith.constant dense<0xFF800000> : vector<8xf32>
      %354 = vector.multi_reduction <maximumf>, %353, %cst_133 [1] : vector<8x16xf32> to vector<8xf32>
      %355 = vector.shape_cast %354 : vector<8xf32> to vector<8x1xf32>
      %356 = vector.broadcast %355 : vector<8x1xf32> to vector<8x16xf32>
      %357 = arith.subf %353, %356 : vector<8x16xf32>
      %358 = math.exp %357 : vector<8x16xf32>
      %cst_134 = arith.constant dense<0.000000e+00> : vector<8xf32>
      %359 = vector.multi_reduction <add>, %358, %cst_134 [1] : vector<8x16xf32> to vector<8xf32>
      %360 = vector.shape_cast %359 : vector<8xf32> to vector<8x1xf32>
      %361 = tpu.reciprocal %360 {approx = true} : vector<8x1xf32> -> vector<8x1xf32>
      %362 = vector.broadcast %361 : vector<8x1xf32> to vector<8x16xf32>
      %363 = arith.mulf %358, %362 : vector<8x16xf32>
      %364 = arith.truncf %363 : vector<8x16xf32> to vector<8x16xbf16>
      %cst_135 = arith.constant dense<0.000000e+00> : vector<8x8xf32>
      %365 = tpu.matmul %364, %352, %cst_135 {dimension_numbers = #tpu.dot_dimension_numbers<[1], [0], [0], [1], [0, 0, 1, 1], [], []>} : vector<8x16xbf16>, vector<16x8xbf16>, vector<8x8xf32> -> vector<8x8xf32>
      %366 = tpu.concatenate %317, %333, %349, %365 in 1 : vector<8x8xf32>, vector<8x8xf32>, vector<8x8xf32>, vector<8x8xf32> -> vector<8x32xf32>
      %367 = tpu.concatenate %298, %366 in 0 : vector<8x32xf32>, vector<8x32xf32> -> vector<16x32xf32>
      %368 = arith.truncf %367 : vector<16x32xf32> to vector<16x32xbf16>
      %cst_136 = arith.constant dense<0.000000e+00> : vector<16x32xf32>
      %369 = tpu.matmul %368, %20, %cst_136 {dimension_numbers = #tpu.dot_dimension_numbers<[1], [0], [0], [1], [0, 0, 1, 1], [], []>} : vector<16x32xbf16>, vector<32x32xbf16>, vector<16x32xf32> -> vector<16x32xf32>
      %370 = vector.broadcast %21 : vector<1x32xf32> to vector<16x32xf32>
      %371 = arith.addf %369, %370 : vector<16x32xf32>
      %372 = arith.addf %224, %371 : vector<16x32xf32>
      %cst_137 = arith.constant dense<0.000000e+00> : vector<16xf32>
      %373 = vector.multi_reduction <add>, %372, %cst_137 [1] : vector<16x32xf32> to vector<16xf32>
      %374 = vector.shape_cast %373 : vector<16xf32> to vector<16x1xf32>
      %cst_138 = arith.constant 3.200000e+01 : f32
      %375 = vector.broadcast %cst_138 : f32 to vector<16x1xf32>
      %376 = arith.divf %374, %375 : vector<16x1xf32>
      %377 = vector.broadcast %376 : vector<16x1xf32> to vector<16x32xf32>
      %378 = arith.subf %372, %377 : vector<16x32xf32>
      %379 = arith.mulf %378, %378 : vector<16x32xf32>
      %cst_139 = arith.constant dense<0.000000e+00> : vector<16xf32>
      %380 = vector.multi_reduction <add>, %379, %cst_139 [1] : vector<16x32xf32> to vector<16xf32>
      %381 = vector.shape_cast %380 : vector<16xf32> to vector<16x1xf32>
      %cst_140 = arith.constant 3.200000e+01 : f32
      %382 = vector.broadcast %cst_140 : f32 to vector<16x1xf32>
      %383 = arith.divf %381, %382 : vector<16x1xf32>
      %384 = vector.broadcast %376 : vector<16x1xf32> to vector<16x32xf32>
      %385 = arith.subf %372, %384 : vector<16x32xf32>
      %cst_141 = arith.constant 9.99999974E-6 : f32
      %386 = vector.broadcast %cst_141 : f32 to vector<16x1xf32>
      %387 = arith.addf %383, %386 : vector<16x1xf32>
      %388 = math.rsqrt %387 : vector<16x1xf32>
      %389 = vector.broadcast %388 : vector<16x1xf32> to vector<16x32xf32>
      %390 = arith.mulf %385, %389 : vector<16x32xf32>
      %391 = vector.broadcast %28 : vector<1x32xf32> to vector<16x32xf32>
      %392 = arith.mulf %390, %391 : vector<16x32xf32>
      %393 = vector.broadcast %29 : vector<1x32xf32> to vector<16x32xf32>
      %394 = arith.addf %392, %393 : vector<16x32xf32>
      %395 = arith.truncf %394 : vector<16x32xf32> to vector<16x32xbf16>
      %cst_142 = arith.constant dense<0.000000e+00> : vector<16x64xf32>
      %396 = tpu.matmul %395, %22, %cst_142 {dimension_numbers = #tpu.dot_dimension_numbers<[1], [0], [0], [1], [0, 0, 1, 1], [], []>} : vector<16x32xbf16>, vector<32x64xbf16>, vector<16x64xf32> -> vector<16x64xf32>
      %397 = vector.broadcast %23 : vector<1x64xf32> to vector<16x64xf32>
      %398 = arith.addf %396, %397 : vector<16x64xf32>
      %cst_143 = arith.constant 0.000000e+00 : f32
      %399 = vector.broadcast %cst_143 : f32 to vector<16x64xf32>
      %400 = arith.maximumf %398, %399 : vector<16x64xf32>
      %401 = arith.truncf %400 : vector<16x64xf32> to vector<16x64xbf16>
      %cst_144 = arith.constant dense<0.000000e+00> : vector<16x32xf32>
      %402 = tpu.matmul %401, %24, %cst_144 {dimension_numbers = #tpu.dot_dimension_numbers<[1], [0], [0], [1], [0, 0, 1, 1], [], []>} : vector<16x64xbf16>, vector<64x32xbf16>, vector<16x32xf32> -> vector<16x32xf32>
      %403 = vector.broadcast %25 : vector<1x32xf32> to vector<16x32xf32>
      %404 = arith.addf %402, %403 : vector<16x32xf32>
      %405 = arith.addf %394, %404 : vector<16x32xf32>
      %cst_145 = arith.constant dense<0.000000e+00> : vector<16xf32>
      %406 = vector.multi_reduction <add>, %405, %cst_145 [1] : vector<16x32xf32> to vector<16xf32>
      %407 = vector.shape_cast %406 : vector<16xf32> to vector<16x1xf32>
      %cst_146 = arith.constant 3.200000e+01 : f32
      %408 = vector.broadcast %cst_146 : f32 to vector<16x1xf32>
      %409 = arith.divf %407, %408 : vector<16x1xf32>
      %410 = vector.broadcast %409 : vector<16x1xf32> to vector<16x32xf32>
      %411 = arith.subf %405, %410 : vector<16x32xf32>
      %412 = arith.mulf %411, %411 : vector<16x32xf32>
      %cst_147 = arith.constant dense<0.000000e+00> : vector<16xf32>
      %413 = vector.multi_reduction <add>, %412, %cst_147 [1] : vector<16x32xf32> to vector<16xf32>
      %414 = vector.shape_cast %413 : vector<16xf32> to vector<16x1xf32>
      %cst_148 = arith.constant 3.200000e+01 : f32
      %415 = vector.broadcast %cst_148 : f32 to vector<16x1xf32>
      %416 = arith.divf %414, %415 : vector<16x1xf32>
      %417 = vector.broadcast %409 : vector<16x1xf32> to vector<16x32xf32>
      %418 = arith.subf %405, %417 : vector<16x32xf32>
      %cst_149 = arith.constant 9.99999974E-6 : f32
      %419 = vector.broadcast %cst_149 : f32 to vector<16x1xf32>
      %420 = arith.addf %416, %419 : vector<16x1xf32>
      %421 = math.rsqrt %420 : vector<16x1xf32>
      %422 = vector.broadcast %421 : vector<16x1xf32> to vector<16x32xf32>
      %423 = arith.mulf %418, %422 : vector<16x32xf32>
      %424 = vector.broadcast %30 : vector<1x32xf32> to vector<16x32xf32>
      %425 = arith.mulf %423, %424 : vector<16x32xf32>
      %426 = vector.broadcast %31 : vector<1x32xf32> to vector<16x32xf32>
      %427 = arith.addf %425, %426 : vector<16x32xf32>
      scf.yield %427 : vector<16x32xf32>
    }
    %45 = vector.shape_cast %44 : vector<16x32xf32> to vector<2x8x32xf32>
    %c0_60 = arith.constant 0 : index
    %c0_61 = arith.constant 0 : index
    %c0_62 = arith.constant 0 : index
    %46 = vector.load %arg29[%c0_60, %c0_61, %c0_62] : memref<2x8x32xf32, #tpu.memory_space<vmem>>, vector<2x8x32xf32>
    tpu.vector_store %arg29[%c0_60, %c0_61, %c0_62], %45 {strides = array<i32>} : memref<2x8x32xf32, #tpu.memory_space<vmem>>, vector<2x8x32xf32>,
    return
  }
  func.func @transform_0(%arg0: i32) -> (i32, i32, i32) {
    %c0_i32 = arith.constant 0 : i32
    %c0_i32_0 = arith.constant 0 : i32
    %c0_i32_1 = arith.constant 0 : i32
    return %arg0, %c0_i32, %c0_i32_0 : i32, i32, i32
  }
  func.func @transform_1(%arg0: i32) -> (i32, i32, i32) {
    %c0_i32 = arith.constant 0 : i32
    %c0_i32_0 = arith.constant 0 : i32
    %c0_i32_1 = arith.constant 0 : i32
    return %arg0, %c0_i32, %c0_i32_0 : i32, i32, i32
  }
  func.func @transform_2(%arg0: i32) -> (i32, i32, i32) {
    %c0_i32 = arith.constant 0 : i32
    %c0_i32_0 = arith.constant 0 : i32
    %c0_i32_1 = arith.constant 0 : i32
    return %arg0, %c0_i32, %c0_i32_0 : i32, i32, i32
  }
  func.func @transform_3(%arg0: i32) -> (i32, i32, i32) {
    %c0_i32 = arith.constant 0 : i32
    %c0_i32_0 = arith.constant 0 : i32
    %c0_i32_1 = arith.constant 0 : i32
    return %arg0, %c0_i32, %c0_i32_0 : i32, i32, i32
  }
  func.func @transform_4(%arg0: i32) -> (i32, i32) {
    %c0_i32 = arith.constant 0 : i32
    %c0_i32_0 = arith.constant 0 : i32
    %c0_i32_1 = arith.constant 0 : i32
    return %c0_i32, %c0_i32_0 : i32, i32
  }
  func.func @transform_5(%arg0: i32) -> (i32, i32) {
    %c0_i32 = arith.constant 0 : i32
    %c0_i32_0 = arith.constant 0 : i32
    %c0_i32_1 = arith.constant 0 : i32
    return %c0_i32, %c0_i32_0 : i32, i32
  }
  func.func @transform_6(%arg0: i32) -> (i32, i32) {
    %c0_i32 = arith.constant 0 : i32
    %c0_i32_0 = arith.constant 0 : i32
    %c0_i32_1 = arith.constant 0 : i32
    return %c0_i32, %c0_i32_0 : i32, i32
  }
  func.func @transform_7(%arg0: i32) -> (i32, i32) {
    %c0_i32 = arith.constant 0 : i32
    %c0_i32_0 = arith.constant 0 : i32
    %c0_i32_1 = arith.constant 0 : i32
    return %c0_i32, %c0_i32_0 : i32, i32
  }
  func.func @transform_8(%arg0: i32) -> (i32, i32) {
    %c0_i32 = arith.constant 0 : i32
    %c0_i32_0 = arith.constant 0 : i32
    %c0_i32_1 = arith.constant 0 : i32
    return %c0_i32, %c0_i32_0 : i32, i32
  }
  func.func @transform_9(%arg0: i32) -> (i32, i32) {
    %c0_i32 = arith.constant 0 : i32
    %c0_i32_0 = arith.constant 0 : i32
    %c0_i32_1 = arith.constant 0 : i32
    return %c0_i32, %c0_i32_0 : i32, i32
  }
  func.func @transform_10(%arg0: i32) -> (i32, i32) {
    %c0_i32 = arith.constant 0 : i32
    %c0_i32_0 = arith.constant 0 : i32
    %c0_i32_1 = arith.constant 0 : i32
    return %c0_i32, %c0_i32_0 : i32, i32
  }
  func.func @transform_11(%arg0: i32) -> (i32, i32) {
    %c0_i32 = arith.constant 0 : i32
    %c0_i32_0 = arith.constant 0 : i32
    %c0_i32_1 = arith.constant 0 : i32
    return %c0_i32, %c0_i32_0 : i32, i32
  }
  func.func @transform_12(%arg0: i32) -> (i32, i32) {
    %c0_i32 = arith.constant 0 : i32
    %c0_i32_0 = arith.constant 0 : i32
    %c0_i32_1 = arith.constant 0 : i32
    return %c0_i32, %c0_i32_0 : i32, i32
  }
  func.func @transform_13(%arg0: i32) -> (i32, i32) {
    %c0_i32 = arith.constant 0 : i32
    %c0_i32_0 = arith.constant 0 : i32
    %c0_i32_1 = arith.constant 0 : i32
    return %c0_i32, %c0_i32_0 : i32, i32
  }
  func.func @transform_14(%arg0: i32) -> (i32, i32) {
    %c0_i32 = arith.constant 0 : i32
    %c0_i32_0 = arith.constant 0 : i32
    %c0_i32_1 = arith.constant 0 : i32
    return %c0_i32, %c0_i32_0 : i32, i32
  }
  func.func @transform_15(%arg0: i32) -> (i32, i32) {
    %c0_i32 = arith.constant 0 : i32
    %c0_i32_0 = arith.constant 0 : i32
    %c0_i32_1 = arith.constant 0 : i32
    return %c0_i32, %c0_i32_0 : i32, i32
  }
  func.func @transform_16(%arg0: i32) -> (i32, i32) {
    %c0_i32 = arith.constant 0 : i32
    %c0_i32_0 = arith.constant 0 : i32
    %c0_i32_1 = arith.constant 0 : i32
    return %c0_i32, %c0_i32_0 : i32, i32
  }
  func.func @transform_17(%arg0: i32) -> (i32, i32) {
    %c0_i32 = arith.constant 0 : i32
    %c0_i32_0 = arith.constant 0 : i32
    %c0_i32_1 = arith.constant 0 : i32
    return %c0_i32, %c0_i32_0 : i32, i32
  }
  func.func @transform_18(%arg0: i32) -> (i32, i32) {
    %c0_i32 = arith.constant 0 : i32
    %c0_i32_0 = arith.constant 0 : i32
    %c0_i32_1 = arith.constant 0 : i32
    return %c0_i32, %c0_i32_0 : i32, i32
  }
  func.func @transform_19(%arg0: i32) -> (i32, i32) {
    %c0_i32 = arith.constant 0 : i32
    %c0_i32_0 = arith.constant 0 : i32
    %c0_i32_1 = arith.constant 0 : i32
    return %c0_i32, %c0_i32_0 : i32, i32
  }
  func.func @transform_20(%arg0: i32) -> (i32, i32) {
    %c0_i32 = arith.constant 0 : i32
    %c0_i32_0 = arith.constant 0 : i32
    %c0_i32_1 = arith.constant 0 : i32
    return %c0_i32, %c0_i32_0 : i32, i32
  }
  func.func @transform_21(%arg0: i32) -> (i32, i32) {
    %c0_i32 = arith.constant 0 : i32
    %c0_i32_0 = arith.constant 0 : i32
    %c0_i32_1 = arith.constant 0 : i32
    return %c0_i32, %c0_i32_0 : i32, i32
  }
  func.func @transform_22(%arg0: i32) -> (i32, i32) {
    %c0_i32 = arith.constant 0 : i32
    %c0_i32_0 = arith.constant 0 : i32
    %c0_i32_1 = arith.constant 0 : i32
    return %c0_i32, %c0_i32_0 : i32, i32
  }
  func.func @transform_23(%arg0: i32) -> (i32, i32) {
    %c0_i32 = arith.constant 0 : i32
    %c0_i32_0 = arith.constant 0 : i32
    %c0_i32_1 = arith.constant 0 : i32
    return %c0_i32, %c0_i32_0 : i32, i32
  }
  func.func @transform_24(%arg0: i32) -> (i32, i32) {
    %c0_i32 = arith.constant 0 : i32
    %c0_i32_0 = arith.constant 0 : i32
    %c0_i32_1 = arith.constant 0 : i32
    return %c0_i32, %c0_i32_0 : i32, i32
  }
  func.func @transform_25(%arg0: i32) -> (i32, i32) {
    %c0_i32 = arith.constant 0 : i32
    %c0_i32_0 = arith.constant 0 : i32
    %c0_i32_1 = arith.constant 0 : i32
    return %c0_i32, %c0_i32_0 : i32, i32
  }
  func.func @transform_26(%arg0: i32) -> (i32, i32) {
    %c0_i32 = arith.constant 0 : i32
    %c0_i32_0 = arith.constant 0 : i32
    %c0_i32_1 = arith.constant 0 : i32
    return %c0_i32, %c0_i32_0 : i32, i32
  }
  func.func @transform_27(%arg0: i32) -> (i32, i32) {
    %c0_i32 = arith.constant 0 : i32
    %c0_i32_0 = arith.constant 0 : i32
    %c0_i32_1 = arith.constant 0 : i32
    return %c0_i32, %c0_i32_0 : i32, i32
  }
  func.func @transform_28(%arg0: i32) -> (i32, i32, i32) {
    %c0_i32 = arith.constant 0 : i32
    %c0_i32_0 = arith.constant 0 : i32
    %c0_i32_1 = arith.constant 0 : i32
    return %arg0, %c0_i32, %c0_i32_0 : i32, i32, i32
  }
}

</mosaic_0001>

<llo_original>
// kernel: transformer_decoder.1
$region0: #{transformer_decoder.1}
  #allocation0 [shape = 'u32[]', space=smem, size = 0x4, offset = 0x4, fixed_abs, tag = 'smem constant byte address 0x4 - core index']
  #allocation1 [shape = 'u32[144,128]{1,0:T(1,128)}', space=vmem, size = 0x12000, scoped, tag = 'internal scratch']
  %s0 = inlined_call_operand.vmem [shape: f32[4,8,32], index: 0, kind: input, shape index: {}]
  %s1 = inlined_call_operand.vmem [shape: f32[4,16,32], index: 1, kind: input, shape index: {}]
  %s2 = inlined_call_operand.vmem [shape: f32[4,16,32], index: 2, kind: input, shape index: {}]
  %s3 = inlined_call_operand.vmem [shape: f32[4,8,32], index: 3, kind: input, shape index: {}]
  %s4 = inlined_call_operand.vmem [shape: bf16[32,64], index: 4, kind: input, shape index: {}]
  %s5 = inlined_call_operand.vmem [shape: f32[1,64], index: 5, kind: input, shape index: {}]
  %s6 = inlined_call_operand.vmem [shape: bf16[32,32], index: 6, kind: input, shape index: {}]
  %s7 = inlined_call_operand.vmem [shape: f32[1,32], index: 7, kind: input, shape index: {}]
  %s8 = inlined_call_operand.vmem [shape: bf16[32,32], index: 8, kind: input, shape index: {}]
  %s9 = inlined_call_operand.vmem [shape: f32[1,32], index: 9, kind: input, shape index: {}]
  %s10 = inlined_call_operand.vmem [shape: bf16[32,32], index: 10, kind: input, shape index: {}]
  %s11 = inlined_call_operand.vmem [shape: f32[1,32], index: 11, kind: input, shape index: {}]
  %s12 = inlined_call_operand.vmem [shape: bf16[32,32], index: 12, kind: input, shape index: {}]
  %s13 = inlined_call_operand.vmem [shape: f32[1,32], index: 13, kind: input, shape index: {}]
  %s14 = inlined_call_operand.vmem [shape: bf16[32,32], index: 14, kind: input, shape index: {}]
  %s15 = inlined_call_operand.vmem [shape: f32[1,32], index: 15, kind: input, shape index: {}]
  %s16 = inlined_call_operand.vmem [shape: bf16[32,32], index: 16, kind: input, shape index: {}]
  %s17 = inlined_call_operand.vmem [shape: f32[1,32], index: 17, kind: input, shape index: {}]
  %s18 = inlined_call_operand.vmem [shape: bf16[32,64], index: 18, kind: input, shape index: {}]
  %s19 = inlined_call_operand.vmem [shape: f32[1,64], index: 19, kind: input, shape index: {}]
  %s20 = inlined_call_operand.vmem [shape: bf16[64,32], index: 20, kind: input, shape index: {}]
  %s21 = inlined_call_operand.vmem [shape: f32[1,32], index: 21, kind: input, shape index: {}]
  %s22 = inlined_call_operand.vmem [shape: f32[1,32], index: 22, kind: input, shape index: {}]
  %s23 = inlined_call_operand.vmem [shape: f32[1,32], index: 23, kind: input, shape index: {}]
  %s24 = inlined_call_operand.vmem [shape: f32[1,32], index: 24, kind: input, shape index: {}]
  %s25 = inlined_call_operand.vmem [shape: f32[1,32], index: 25, kind: input, shape index: {}]
  %s26 = inlined_call_operand.vmem [shape: f32[1,32], index: 26, kind: input, shape index: {}]
  %s27 = inlined_call_operand.vmem [shape: f32[1,32], index: 27, kind: input, shape index: {}]
  %s28 = inlined_call_operand.vmem [shape: f32[4,8,32], index: 28, kind: output, shape index: {}]
  %s29 = sld [smem:[#allocation0]]
  $region152: #{transformer_decoder.1} parent=0
    _
  %s31 = ssub.s32 1, %s29
  %s32 = scalar_select 0, %s31, %s29
  loop: start=0, step=1, limit=4
  $region2: #{transformer_decoder.1} parent=0 // loop_pre_header
    _
  $region3: #{transformer_decoder.1} parent=0 // loop_header
    %s34 = sphi 0, %s38
    %p35 = scmp.ge.s32.totalorder %s34, 4
    %s44 = sphi 0, %s46
    %s47 = sphi 0, %s44
    %s48 = sphi 0, %s47
    %s64 = sphi 0, %s48
    %s70 = sphi 0, %s72
    %s73 = sphi 0, %s70
    %s74 = sphi 0, %s73
    %s90 = sphi 0, %s74
    %s96 = sphi 0, %s98
    %s99 = sphi 0, %s96
    %s100 = sphi 0, %s99
    %s116 = sphi 0, %s100
    %s122 = sphi 0, %s124
    %s125 = sphi 0, %s122
    %s126 = sphi 0, %s125
    %s142 = sphi 0, %s126
    %s146 = sphi 0, %s146
    %s148 = sphi 0, %s146
    %s149 = sphi 0, %s148
    %s163 = sphi 0, %s149
    %s167 = sphi 0, %s167
    %s169 = sphi 0, %s167
    %s170 = sphi 0, %s169
    %s184 = sphi 0, %s170
    %s188 = sphi 0, %s188
    %s190 = sphi 0, %s188
    %s191 = sphi 0, %s190
    %s205 = sphi 0, %s191
    %s209 = sphi 0, %s209
    %s211 = sphi 0, %s209
    %s212 = sphi 0, %s211
    %s226 = sphi 0, %s212
    %s230 = sphi 0, %s230
    %s232 = sphi 0, %s230
    %s233 = sphi 0, %s232
    %s247 = sphi 0, %s233
    %s251 = sphi 0, %s251
    %s253 = sphi 0, %s251
    %s254 = sphi 0, %s253
    %s268 = sphi 0, %s254
    %s272 = sphi 0, %s272
    %s274 = sphi 0, %s272
    %s275 = sphi 0, %s274
    %s289 = sphi 0, %s275
    %s293 = sphi 0, %s293
    %s295 = sphi 0, %s293
    %s296 = sphi 0, %s295
    %s310 = sphi 0, %s296
    %s314 = sphi 0, %s314
    %s316 = sphi 0, %s314
    %s317 = sphi 0, %s316
    %s331 = sphi 0, %s317
    %s335 = sphi 0, %s335
    %s337 = sphi 0, %s335
    %s338 = sphi 0, %s337
    %s352 = sphi 0, %s338
    %s356 = sphi 0, %s356
    %s358 = sphi 0, %s356
    %s359 = sphi 0, %s358
    %s373 = sphi 0, %s359
    %s377 = sphi 0, %s377
    %s379 = sphi 0, %s377
    %s380 = sphi 0, %s379
    %s394 = sphi 0, %s380
    %s398 = sphi 0, %s398
    %s400 = sphi 0, %s398
    %s401 = sphi 0, %s400
    %s415 = sphi 0, %s401
    %s419 = sphi 0, %s419
    %s421 = sphi 0, %s419
    %s422 = sphi 0, %s421
    %s436 = sphi 0, %s422
    %s440 = sphi 0, %s440
    %s442 = sphi 0, %s440
    %s443 = sphi 0, %s442
    %s457 = sphi 0, %s443
    %s461 = sphi 0, %s461
    %s463 = sphi 0, %s461
    %s464 = sphi 0, %s463
    %s478 = sphi 0, %s464
    %s482 = sphi 0, %s482
    %s484 = sphi 0, %s482
    %s485 = sphi 0, %s484
    %s499 = sphi 0, %s485
    %s503 = sphi 0, %s503
    %s505 = sphi 0, %s503
    %s506 = sphi 0, %s505
    %s520 = sphi 0, %s506
    %s524 = sphi 0, %s524
    %s526 = sphi 0, %s524
    %s527 = sphi 0, %s526
    %s541 = sphi 0, %s527
    %s545 = sphi 0, %s545
    %s547 = sphi 0, %s545
    %s548 = sphi 0, %s547
    %s562 = sphi 0, %s548
    %s566 = sphi 0, %s566
    %s568 = sphi 0, %s566
    %s569 = sphi 0, %s568
    %s583 = sphi 0, %s569
    %s587 = sphi 0, %s587
    %s589 = sphi 0, %s587
    %s590 = sphi 0, %s589
    %s604 = sphi 0, %s590
    %s608 = sphi 0, %s608
    %s610 = sphi 0, %s608
    %s611 = sphi 0, %s610
    %s625 = sphi 0, %s611
    %s629 = sphi 0, %s629
    %s631 = sphi 0, %s629
    %s632 = sphi 0, %s631
    %s646 = sphi 0, %s632
    %s652 = sphi 0, %s654
    %s655 = sphi 0, %s652
    %s656 = sphi 0, %s655
    %s672 = sphi 0, %s656
  $region4: #{transformer_decoder.1} parent=0 // loop_header_branch
    %37 = sbr.rel (%p35) target = $region8
  $region5: #{transformer_decoder.1} parent=0 // loop_body
    %s39 = ssub.s32 %s34, 1
    %s40 = ssub.s32 %s34, 2
    %s41 = sadd.s32 %s34, 1
    %s42 = ssub.s32 %s34, %s41
    %p43 = scmp.eq.s32.totalorder %s42, 0
    %s45 = sadd.s32 %s44, 1
    %s46 = scalar_select %p43, %s44, %s45
    %p49 = pneg %p43
    %p50 = scmp.eq.s32.totalorder %s34, 1
    %p51 = por %p49, %p50
    %p52 = scmp.ne.s32.totalorder %s44, %s47
    %p53 = scmp.eq.s32.totalorder %s34, 0
    %p54 = por %p52, %p53
    %p55 = scmp.ne.s32.totalorder %s44, %s47
    %p56 = scmp.eq.s32.totalorder %s39, 1
    %p57 = por %p55, %p56
    %p58 = scmp.ne.s32.totalorder %s47, %s48
    %p59 = scmp.eq.s32.totalorder %s39, 0
    %p60 = por %p58, %p59
    %p61 = scmp.ne.s32.totalorder %s47, %s48
    %p62 = scmp.eq.s32.totalorder %s40, 1
    %p63 = por %p61, %p62
    %p65 = scmp.ne.s32.totalorder %s48, %s64
    %p66 = scmp.eq.s32.totalorder %s40, 0
    %p67 = por %p65, %p66
    %s68 = ssub.s32 %s34, %s41
    %p69 = scmp.eq.s32.totalorder %s68, 0
    %s71 = sadd.s32 %s70, 1
    %s72 = scalar_select %p69, %s70, %s71
    %p75 = pneg %p69
    %p76 = scmp.eq.s32.totalorder %s34, 1
    %p77 = por %p75, %p76
    %p78 = scmp.ne.s32.totalorder %s70, %s73
    %p79 = scmp.eq.s32.totalorder %s34, 0
    %p80 = por %p78, %p79
    %p81 = scmp.ne.s32.totalorder %s70, %s73
    %p82 = scmp.eq.s32.totalorder %s39, 1
    %p83 = por %p81, %p82
    %p84 = scmp.ne.s32.totalorder %s73, %s74
    %p85 = scmp.eq.s32.totalorder %s39, 0
    %p86 = por %p84, %p85
    %p87 = scmp.ne.s32.totalorder %s73, %s74
    %p88 = scmp.eq.s32.totalorder %s40, 1
    %p89 = por %p87, %p88
    %p91 = scmp.ne.s32.totalorder %s74, %s90
    %p92 = scmp.eq.s32.totalorder %s40, 0
    %p93 = por %p91, %p92
    %s94 = ssub.s32 %s34, %s41
    %p95 = scmp.eq.s32.totalorder %s94, 0
    %s97 = sadd.s32 %s96, 1
    %s98 = scalar_select %p95, %s96, %s97
    %p101 = pneg %p95
    %p102 = scmp.eq.s32.totalorder %s34, 1
    %p103 = por %p101, %p102
    %p104 = scmp.ne.s32.totalorder %s96, %s99
    %p105 = scmp.eq.s32.totalorder %s34, 0
    %p106 = por %p104, %p105
    %p107 = scmp.ne.s32.totalorder %s96, %s99
    %p108 = scmp.eq.s32.totalorder %s39, 1
    %p109 = por %p107, %p108
    %p110 = scmp.ne.s32.totalorder %s99, %s100
    %p111 = scmp.eq.s32.totalorder %s39, 0
    %p112 = por %p110, %p111
    %p113 = scmp.ne.s32.totalorder %s99, %s100
    %p114 = scmp.eq.s32.totalorder %s40, 1
    %p115 = por %p113, %p114
    %p117 = scmp.ne.s32.totalorder %s100, %s116
    %p118 = scmp.eq.s32.totalorder %s40, 0
    %p119 = por %p117, %p118
    %s120 = ssub.s32 %s34, %s41
    %p121 = scmp.eq.s32.totalorder %s120, 0
    %s123 = sadd.s32 %s122, 1
    %s124 = scalar_select %p121, %s122, %s123
    %p127 = pneg %p121
    %p128 = scmp.eq.s32.totalorder %s34, 1
    %p129 = por %p127, %p128
    %p130 = scmp.ne.s32.totalorder %s122, %s125
    %p131 = scmp.eq.s32.totalorder %s34, 0
    %p132 = por %p130, %p131
    %p133 = scmp.ne.s32.totalorder %s122, %s125
    %p134 = scmp.eq.s32.totalorder %s39, 1
    %p135 = por %p133, %p134
    %p136 = scmp.ne.s32.totalorder %s125, %s126
    %p137 = scmp.eq.s32.totalorder %s39, 0
    %p138 = por %p136, %p137
    %p139 = scmp.ne.s32.totalorder %s125, %s126
    %p140 = scmp.eq.s32.totalorder %s40, 1
    %p141 = por %p139, %p140
    %p143 = scmp.ne.s32.totalorder %s126, %s142
    %p144 = scmp.eq.s32.totalorder %s40, 0
    %p145 = por %p143, %p144
    %s147 = sadd.s32 %s146, 1
    %p150 = scmp.eq.s32.totalorder %s34, 1
    %p151 = scmp.ne.s32.totalorder %s146, %s148
    %p152 = scmp.eq.s32.totalorder %s34, 0
    %p153 = por %p151, %p152
    %p154 = scmp.ne.s32.totalorder %s146, %s148
    %p155 = scmp.eq.s32.totalorder %s39, 1
    %p156 = por %p154, %p155
    %p157 = scmp.ne.s32.totalorder %s148, %s149
    %p158 = scmp.eq.s32.totalorder %s39, 0
    %p159 = por %p157, %p158
    %p160 = scmp.ne.s32.totalorder %s148, %s149
    %p161 = scmp.eq.s32.totalorder %s40, 1
    %p162 = por %p160, %p161
    %p164 = scmp.ne.s32.totalorder %s149, %s163
    %p165 = scmp.eq.s32.totalorder %s40, 0
    %p166 = por %p164, %p165
    %s168 = sadd.s32 %s167, 1
    %p171 = scmp.eq.s32.totalorder %s34, 1
    %p172 = scmp.ne.s32.totalorder %s167, %s169
    %p173 = scmp.eq.s32.totalorder %s34, 0
    %p174 = por %p172, %p173
    %p175 = scmp.ne.s32.totalorder %s167, %s169
    %p176 = scmp.eq.s32.totalorder %s39, 1
    %p177 = por %p175, %p176
    %p178 = scmp.ne.s32.totalorder %s169, %s170
    %p179 = scmp.eq.s32.totalorder %s39, 0
    %p180 = por %p178, %p179
    %p181 = scmp.ne.s32.totalorder %s169, %s170
    %p182 = scmp.eq.s32.totalorder %s40, 1
    %p183 = por %p181, %p182
    %p185 = scmp.ne.s32.totalorder %s170, %s184
    %p186 = scmp.eq.s32.totalorder %s40, 0
    %p187 = por %p185, %p186
    %s189 = sadd.s32 %s188, 1
    %p192 = scmp.eq.s32.totalorder %s34, 1
    %p193 = scmp.ne.s32.totalorder %s188, %s190
    %p194 = scmp.eq.s32.totalorder %s34, 0
    %p195 = por %p193, %p194
    %p196 = scmp.ne.s32.totalorder %s188, %s190
    %p197 = scmp.eq.s32.totalorder %s39, 1
    %p198 = por %p196, %p197
    %p199 = scmp.ne.s32.totalorder %s190, %s191
    %p200 = scmp.eq.s32.totalorder %s39, 0
    %p201 = por %p199, %p200
    %p202 = scmp.ne.s32.totalorder %s190, %s191
    %p203 = scmp.eq.s32.totalorder %s40, 1
    %p204 = por %p202, %p203
    %p206 = scmp.ne.s32.totalorder %s191, %s205
    %p207 = scmp.eq.s32.totalorder %s40, 0
    %p208 = por %p206, %p207
    %s210 = sadd.s32 %s209, 1
    %p213 = scmp.eq.s32.totalorder %s34, 1
    %p214 = scmp.ne.s32.totalorder %s209, %s211
    %p215 = scmp.eq.s32.totalorder %s34, 0
    %p216 = por %p214, %p215
    %p217 = scmp.ne.s32.totalorder %s209, %s211
    %p218 = scmp.eq.s32.totalorder %s39, 1
    %p219 = por %p217, %p218
    %p220 = scmp.ne.s32.totalorder %s211, %s212
    %p221 = scmp.eq.s32.totalorder %s39, 0
    %p222 = por %p220, %p221
    %p223 = scmp.ne.s32.totalorder %s211, %s212
    %p224 = scmp.eq.s32.totalorder %s40, 1
    %p225 = por %p223, %p224
    %p227 = scmp.ne.s32.totalorder %s212, %s226
    %p228 = scmp.eq.s32.totalorder %s40, 0
    %p229 = por %p227, %p228
    %s231 = sadd.s32 %s230, 1
    %p234 = scmp.eq.s32.totalorder %s34, 1
    %p235 = scmp.ne.s32.totalorder %s230, %s232
    %p236 = scmp.eq.s32.totalorder %s34, 0
    %p237 = por %p235, %p236
    %p238 = scmp.ne.s32.totalorder %s230, %s232
    %p239 = scmp.eq.s32.totalorder %s39, 1
    %p240 = por %p238, %p239
    %p241 = scmp.ne.s32.totalorder %s232, %s233
    %p242 = scmp.eq.s32.totalorder %s39, 0
    %p243 = por %p241, %p242
    %p244 = scmp.ne.s32.totalorder %s232, %s233
    %p245 = scmp.eq.s32.totalorder %s40, 1
    %p246 = por %p244, %p245
    %p248 = scmp.ne.s32.totalorder %s233, %s247
    %p249 = scmp.eq.s32.totalorder %s40, 0
    %p250 = por %p248, %p249
    %s252 = sadd.s32 %s251, 1
    %p255 = scmp.eq.s32.totalorder %s34, 1
    %p256 = scmp.ne.s32.totalorder %s251, %s253
    %p257 = scmp.eq.s32.totalorder %s34, 0
    %p258 = por %p256, %p257
    %p259 = scmp.ne.s32.totalorder %s251, %s253
    %p260 = scmp.eq.s32.totalorder %s39, 1
    %p261 = por %p259, %p260
    %p262 = scmp.ne.s32.totalorder %s253, %s254
    %p263 = scmp.eq.s32.totalorder %s39, 0
    %p264 = por %p262, %p263
    %p265 = scmp.ne.s32.totalorder %s253, %s254
    %p266 = scmp.eq.s32.totalorder %s40, 1
    %p267 = por %p265, %p266
    %p269 = scmp.ne.s32.totalorder %s254, %s268
    %p270 = scmp.eq.s32.totalorder %s40, 0
    %p271 = por %p269, %p270
    %s273 = sadd.s32 %s272, 1
    %p276 = scmp.eq.s32.totalorder %s34, 1
    %p277 = scmp.ne.s32.totalorder %s272, %s274
    %p278 = scmp.eq.s32.totalorder %s34, 0
    %p279 = por %p277, %p278
    %p280 = scmp.ne.s32.totalorder %s272, %s274
    %p281 = scmp.eq.s32.totalorder %s39, 1
    %p282 = por %p280, %p281
    %p283 = scmp.ne.s32.totalorder %s274, %s275
    %p284 = scmp.eq.s32.totalorder %s39, 0
    %p285 = por %p283, %p284
    %p286 = scmp.ne.s32.totalorder %s274, %s275
    %p287 = scmp.eq.s32.totalorder %s40, 1
    %p288 = por %p286, %p287
    %p290 = scmp.ne.s32.totalorder %s275, %s289
    %p291 = scmp.eq.s32.totalorder %s40, 0
    %p292 = por %p290, %p291
    %s294 = sadd.s32 %s293, 1
    %p297 = scmp.eq.s32.totalorder %s34, 1
    %p298 = scmp.ne.s32.totalorder %s293, %s295
    %p299 = scmp.eq.s32.totalorder %s34, 0
    %p300 = por %p298, %p299
    %p301 = scmp.ne.s32.totalorder %s293, %s295
    %p302 = scmp.eq.s32.totalorder %s39, 1
    %p303 = por %p301, %p302
    %p304 = scmp.ne.s32.totalorder %s295, %s296
    %p305 = scmp.eq.s32.totalorder %s39, 0
    %p306 = por %p304, %p305
    %p307 = scmp.ne.s32.totalorder %s295, %s296
    %p308 = scmp.eq.s32.totalorder %s40, 1
    %p309 = por %p307, %p308
    %p311 = scmp.ne.s32.totalorder %s296, %s310
    %p312 = scmp.eq.s32.totalorder %s40, 0
    %p313 = por %p311, %p312
    %s315 = sadd.s32 %s314, 1
    %p318 = scmp.eq.s32.totalorder %s34, 1
    %p319 = scmp.ne.s32.totalorder %s314, %s316
    %p320 = scmp.eq.s32.totalorder %s34, 0
    %p321 = por %p319, %p320
    %p322 = scmp.ne.s32.totalorder %s314, %s316
    %p323 = scmp.eq.s32.totalorder %s39, 1
    %p324 = por %p322, %p323
    %p325 = scmp.ne.s32.totalorder %s316, %s317
    %p326 = scmp.eq.s32.totalorder %s39, 0
    %p327 = por %p325, %p326
    %p328 = scmp.ne.s32.totalorder %s316, %s317
    %p329 = scmp.eq.s32.totalorder %s40, 1
    %p330 = por %p328, %p329
    %p332 = scmp.ne.s32.totalorder %s317, %s331
    %p333 = scmp.eq.s32.totalorder %s40, 0
    %p334 = por %p332, %p333
    %s336 = sadd.s32 %s335, 1
    %p339 = scmp.eq.s32.totalorder %s34, 1
    %p340 = scmp.ne.s32.totalorder %s335, %s337
    %p341 = scmp.eq.s32.totalorder %s34, 0
    %p342 = por %p340, %p341
    %p343 = scmp.ne.s32.totalorder %s335, %s337
    %p344 = scmp.eq.s32.totalorder %s39, 1
    %p345 = por %p343, %p344
    %p346 = scmp.ne.s32.totalorder %s337, %s338
    %p347 = scmp.eq.s32.totalorder %s39, 0
    %p348 = por %p346, %p347
    %p349 = scmp.ne.s32.totalorder %s337, %s338
    %p350 = scmp.eq.s32.totalorder %s40, 1
    %p351 = por %p349, %p350
    %p353 = scmp.ne.s32.totalorder %s338, %s352
    %p354 = scmp.eq.s32.totalorder %s40, 0
    %p355 = por %p353, %p354
    %s357 = sadd.s32 %s356, 1
    %p360 = scmp.eq.s32.totalorder %s34, 1
    %p361 = scmp.ne.s32.totalorder %s356, %s358
    %p362 = scmp.eq.s32.totalorder %s34, 0
    %p363 = por %p361, %p362
    %p364 = scmp.ne.s32.totalorder %s356, %s358
    %p365 = scmp.eq.s32.totalorder %s39, 1
    %p366 = por %p364, %p365
    %p367 = scmp.ne.s32.totalorder %s358, %s359
    %p368 = scmp.eq.s32.totalorder %s39, 0
    %p369 = por %p367, %p368
    %p370 = scmp.ne.s32.totalorder %s358, %s359
    %p371 = scmp.eq.s32.totalorder %s40, 1
    %p372 = por %p370, %p371
    %p374 = scmp.ne.s32.totalorder %s359, %s373
    %p375 = scmp.eq.s32.totalorder %s40, 0
    %p376 = por %p374, %p375
    %s378 = sadd.s32 %s377, 1
    %p381 = scmp.eq.s32.totalorder %s34, 1
    %p382 = scmp.ne.s32.totalorder %s377, %s379
    %p383 = scmp.eq.s32.totalorder %s34, 0
    %p384 = por %p382, %p383
    %p385 = scmp.ne.s32.totalorder %s377, %s379
    %p386 = scmp.eq.s32.totalorder %s39, 1
    %p387 = por %p385, %p386
    %p388 = scmp.ne.s32.totalorder %s379, %s380
    %p389 = scmp.eq.s32.totalorder %s39, 0
    %p390 = por %p388, %p389
    %p391 = scmp.ne.s32.totalorder %s379, %s380
    %p392 = scmp.eq.s32.totalorder %s40, 1
    %p393 = por %p391, %p392
    %p395 = scmp.ne.s32.totalorder %s380, %s394
    %p396 = scmp.eq.s32.totalorder %s40, 0
    %p397 = por %p395, %p396
    %s399 = sadd.s32 %s398, 1
    %p402 = scmp.eq.s32.totalorder %s34, 1
    %p403 = scmp.ne.s32.totalorder %s398, %s400
    %p404 = scmp.eq.s32.totalorder %s34, 0
    %p405 = por %p403, %p404
    %p406 = scmp.ne.s32.totalorder %s398, %s400
    %p407 = scmp.eq.s32.totalorder %s39, 1
    %p408 = por %p406, %p407
    %p409 = scmp.ne.s32.totalorder %s400, %s401
    %p410 = scmp.eq.s32.totalorder %s39, 0
    %p411 = por %p409, %p410
    %p412 = scmp.ne.s32.totalorder %s400, %s401
    %p413 = scmp.eq.s32.totalorder %s40, 1
    %p414 = por %p412, %p413
    %p416 = scmp.ne.s32.totalorder %s401, %s415
    %p417 = scmp.eq.s32.totalorder %s40, 0
    %p418 = por %p416, %p417
    %s420 = sadd.s32 %s419, 1
    %p423 = scmp.eq.s32.totalorder %s34, 1
    %p424 = scmp.ne.s32.totalorder %s419, %s421
    %p425 = scmp.eq.s32.totalorder %s34, 0
    %p426 = por %p424, %p425
    %p427 = scmp.ne.s32.totalorder %s419, %s421
    %p428 = scmp.eq.s32.totalorder %s39, 1
    %p429 = por %p427, %p428
    %p430 = scmp.ne.s32.totalorder %s421, %s422
    %p431 = scmp.eq.s32.totalorder %s39, 0
    %p432 = por %p430, %p431
    %p433 = scmp.ne.s32.totalorder %s421, %s422
    %p434 = scmp.eq.s32.totalorder %s40, 1
    %p435 = por %p433, %p434
    %p437 = scmp.ne.s32.totalorder %s422, %s436
    %p438 = scmp.eq.s32.totalorder %s40, 0
    %p439 = por %p437, %p438
    %s441 = sadd.s32 %s440, 1
    %p444 = scmp.eq.s32.totalorder %s34, 1
    %p445 = scmp.ne.s32.totalorder %s440, %s442
    %p446 = scmp.eq.s32.totalorder %s34, 0
    %p447 = por %p445, %p446
    %p448 = scmp.ne.s32.totalorder %s440, %s442
    %p449 = scmp.eq.s32.totalorder %s39, 1
    %p450 = por %p448, %p449
    %p451 = scmp.ne.s32.totalorder %s442, %s443
    %p452 = scmp.eq.s32.totalorder %s39, 0
    %p453 = por %p451, %p452
    %p454 = scmp.ne.s32.totalorder %s442, %s443
    %p455 = scmp.eq.s32.totalorder %s40, 1
    %p456 = por %p454, %p455
    %p458 = scmp.ne.s32.totalorder %s443, %s457
    %p459 = scmp.eq.s32.totalorder %s40, 0
    %p460 = por %p458, %p459
    %s462 = sadd.s32 %s461, 1
    %p465 = scmp.eq.s32.totalorder %s34, 1
    %p466 = scmp.ne.s32.totalorder %s461, %s463
    %p467 = scmp.eq.s32.totalorder %s34, 0
    %p468 = por %p466, %p467
    %p469 = scmp.ne.s32.totalorder %s461, %s463
    %p470 = scmp.eq.s32.totalorder %s39, 1
    %p471 = por %p469, %p470
    %p472 = scmp.ne.s32.totalorder %s463, %s464
    %p473 = scmp.eq.s32.totalorder %s39, 0
    %p474 = por %p472, %p473
    %p475 = scmp.ne.s32.totalorder %s463, %s464
    %p476 = scmp.eq.s32.totalorder %s40, 1
    %p477 = por %p475, %p476
    %p479 = scmp.ne.s32.totalorder %s464, %s478
    %p480 = scmp.eq.s32.totalorder %s40, 0
    %p481 = por %p479, %p480
    %s483 = sadd.s32 %s482, 1
    %p486 = scmp.eq.s32.totalorder %s34, 1
    %p487 = scmp.ne.s32.totalorder %s482, %s484
    %p488 = scmp.eq.s32.totalorder %s34, 0
    %p489 = por %p487, %p488
    %p490 = scmp.ne.s32.totalorder %s482, %s484
    %p491 = scmp.eq.s32.totalorder %s39, 1
    %p492 = por %p490, %p491
    %p493 = scmp.ne.s32.totalorder %s484, %s485
    %p494 = scmp.eq.s32.totalorder %s39, 0
    %p495 = por %p493, %p494
    %p496 = scmp.ne.s32.totalorder %s484, %s485
    %p497 = scmp.eq.s32.totalorder %s40, 1
    %p498 = por %p496, %p497
    %p500 = scmp.ne.s32.totalorder %s485, %s499
    %p501 = scmp.eq.s32.totalorder %s40, 0
    %p502 = por %p500, %p501
    %s504 = sadd.s32 %s503, 1
    %p507 = scmp.eq.s32.totalorder %s34, 1
    %p508 = scmp.ne.s32.totalorder %s503, %s505
    %p509 = scmp.eq.s32.totalorder %s34, 0
    %p510 = por %p508, %p509
    %p511 = scmp.ne.s32.totalorder %s503, %s505
    %p512 = scmp.eq.s32.totalorder %s39, 1
    %p513 = por %p511, %p512
    %p514 = scmp.ne.s32.totalorder %s505, %s506
    %p515 = scmp.eq.s32.totalorder %s39, 0
    %p516 = por %p514, %p515
    %p517 = scmp.ne.s32.totalorder %s505, %s506
    %p518 = scmp.eq.s32.totalorder %s40, 1
    %p519 = por %p517, %p518
    %p521 = scmp.ne.s32.totalorder %s506, %s520
    %p522 = scmp.eq.s32.totalorder %s40, 0
    %p523 = por %p521, %p522
    %s525 = sadd.s32 %s524, 1
    %p528 = scmp.eq.s32.totalorder %s34, 1
    %p529 = scmp.ne.s32.totalorder %s524, %s526
    %p530 = scmp.eq.s32.totalorder %s34, 0
    %p531 = por %p529, %p530
    %p532 = scmp.ne.s32.totalorder %s524, %s526
    %p533 = scmp.eq.s32.totalorder %s39, 1
    %p534 = por %p532, %p533
    %p535 = scmp.ne.s32.totalorder %s526, %s527
    %p536 = scmp.eq.s32.totalorder %s39, 0
    %p537 = por %p535, %p536
    %p538 = scmp.ne.s32.totalorder %s526, %s527
    %p539 = scmp.eq.s32.totalorder %s40, 1
    %p540 = por %p538, %p539
    %p542 = scmp.ne.s32.totalorder %s527, %s541
    %p543 = scmp.eq.s32.totalorder %s40, 0
    %p544 = por %p542, %p543
    %s546 = sadd.s32 %s545, 1
    %p549 = scmp.eq.s32.totalorder %s34, 1
    %p550 = scmp.ne.s32.totalorder %s545, %s547
    %p551 = scmp.eq.s32.totalorder %s34, 0
    %p552 = por %p550, %p551
    %p553 = scmp.ne.s32.totalorder %s545, %s547
    %p554 = scmp.eq.s32.totalorder %s39, 1
    %p555 = por %p553, %p554
    %p556 = scmp.ne.s32.totalorder %s547, %s548
    %p557 = scmp.eq.s32.totalorder %s39, 0
    %p558 = por %p556, %p557
    %p559 = scmp.ne.s32.totalorder %s547, %s548
    %p560 = scmp.eq.s32.totalorder %s40, 1
    %p561 = por %p559, %p560
    %p563 = scmp.ne.s32.totalorder %s548, %s562
    %p564 = scmp.eq.s32.totalorder %s40, 0
    %p565 = por %p563, %p564
    %s567 = sadd.s32 %s566, 1
    %p570 = scmp.eq.s32.totalorder %s34, 1
    %p571 = scmp.ne.s32.totalorder %s566, %s568
    %p572 = scmp.eq.s32.totalorder %s34, 0
    %p573 = por %p571, %p572
    %p574 = scmp.ne.s32.totalorder %s566, %s568
    %p575 = scmp.eq.s32.totalorder %s39, 1
    %p576 = por %p574, %p575
    %p577 = scmp.ne.s32.totalorder %s568, %s569
    %p578 = scmp.eq.s32.totalorder %s39, 0
    %p579 = por %p577, %p578
    %p580 = scmp.ne.s32.totalorder %s568, %s569
    %p581 = scmp.eq.s32.totalorder %s40, 1
    %p582 = por %p580, %p581
    %p584 = scmp.ne.s32.totalorder %s569, %s583
    %p585 = scmp.eq.s32.totalorder %s40, 0
    %p586 = por %p584, %p585
    %s588 = sadd.s32 %s587, 1
    %p591 = scmp.eq.s32.totalorder %s34, 1
    %p592 = scmp.ne.s32.totalorder %s587, %s589
    %p593 = scmp.eq.s32.totalorder %s34, 0
    %p594 = por %p592, %p593
    %p595 = scmp.ne.s32.totalorder %s587, %s589
    %p596 = scmp.eq.s32.totalorder %s39, 1
    %p597 = por %p595, %p596
    %p598 = scmp.ne.s32.totalorder %s589, %s590
    %p599 = scmp.eq.s32.totalorder %s39, 0
    %p600 = por %p598, %p599
    %p601 = scmp.ne.s32.totalorder %s589, %s590
    %p602 = scmp.eq.s32.totalorder %s40, 1
    %p603 = por %p601, %p602
    %p605 = scmp.ne.s32.totalorder %s590, %s604
    %p606 = scmp.eq.s32.totalorder %s40, 0
    %p607 = por %p605, %p606
    %s609 = sadd.s32 %s608, 1
    %p612 = scmp.eq.s32.totalorder %s34, 1
    %p613 = scmp.ne.s32.totalorder %s608, %s610
    %p614 = scmp.eq.s32.totalorder %s34, 0
    %p615 = por %p613, %p614
    %p616 = scmp.ne.s32.totalorder %s608, %s610
    %p617 = scmp.eq.s32.totalorder %s39, 1
    %p618 = por %p616, %p617
    %p619 = scmp.ne.s32.totalorder %s610, %s611
    %p620 = scmp.eq.s32.totalorder %s39, 0
    %p621 = por %p619, %p620
    %p622 = scmp.ne.s32.totalorder %s610, %s611
    %p623 = scmp.eq.s32.totalorder %s40, 1
    %p624 = por %p622, %p623
    %p626 = scmp.ne.s32.totalorder %s611, %s625
    %p627 = scmp.eq.s32.totalorder %s40, 0
    %p628 = por %p626, %p627
    %s630 = sadd.s32 %s629, 1
    %p633 = scmp.eq.s32.totalorder %s34, 1
    %p634 = scmp.ne.s32.totalorder %s629, %s631
    %p635 = scmp.eq.s32.totalorder %s34, 0
    %p636 = por %p634, %p635
    %p637 = scmp.ne.s32.totalorder %s629, %s631
    %p638 = scmp.eq.s32.totalorder %s39, 1
    %p639 = por %p637, %p638
    %p640 = scmp.ne.s32.totalorder %s631, %s632
    %p641 = scmp.eq.s32.totalorder %s39, 0
    %p642 = por %p640, %p641
    %p643 = scmp.ne.s32.totalorder %s631, %s632
    %p644 = scmp.eq.s32.totalorder %s40, 1
    %p645 = por %p643, %p644
    %p647 = scmp.ne.s32.totalorder %s632, %s646
    %p648 = scmp.eq.s32.totalorder %s40, 0
    %p649 = por %p647, %p648
    %s650 = ssub.s32 %s34, %s41
    %p651 = scmp.eq.s32.totalorder %s650, 0
    %s653 = sadd.s32 %s652, 1
    %s654 = scalar_select %p651, %s652, %s653
    %p657 = pneg %p651
    %p658 = scmp.eq.s32.totalorder %s34, 1
    %p659 = por %p657, %p658
    %p660 = scmp.ne.s32.totalorder %s652, %s655
    %p661 = scmp.eq.s32.totalorder %s34, 0
    %p662 = por %p660, %p661
    %p663 = scmp.ne.s32.totalorder %s652, %s655
    %p664 = scmp.eq.s32.totalorder %s39, 1
    %p665 = por %p663, %p664
    %p666 = scmp.ne.s32.totalorder %s655, %s656
    %p667 = scmp.eq.s32.totalorder %s39, 0
    %p668 = por %p666, %p667
    %p669 = scmp.ne.s32.totalorder %s655, %s656
    %p670 = scmp.eq.s32.totalorder %s40, 1
    %p671 = por %p669, %p670
    %p673 = scmp.ne.s32.totalorder %s656, %s672
    %p674 = scmp.eq.s32.totalorder %s40, 0
    %p675 = por %p673, %p674
    %p676 = scmp.le.s32.totalorder 1, %s34
    %p677 = scmp.lt.s32.totalorder %s34, 3
    %p678 = pnand %p676, %p677
    %p679 = pneg %p678
    // Predicated region
    $region9: #{transformer_decoder.1} parent=5 // pred_check
      _
    $region10: #{transformer_decoder.1} parent=5 // pred_check_branch
      %681 = sbr.rel (%p678) target = $region12
    $region11: #{transformer_decoder.1} parent=5 // pred_region
      %s682 = ssub.s32 %s34, 1
      // Predicated region
      $region13: #{transformer_decoder.1} parent=11 // pred_check
        %p683 = pneg %p159
      $region14: #{transformer_decoder.1} parent=11 // pred_check_branch
        %685 = sbr.rel (%p683) target = $region16
      $region15: #{transformer_decoder.1} parent=11 // pred_region
        _
      $region16: #{transformer_decoder.1} parent=11 // pred_fallthru
        _
      // Predicated region
      $region17: #{transformer_decoder.1} parent=11 // pred_check
        %p686 = pneg %p180
      $region18: #{transformer_decoder.1} parent=11 // pred_check_branch
        %688 = sbr.rel (%p686) target = $region20
      $region19: #{transformer_decoder.1} parent=11 // pred_region
        _
      $region20: #{transformer_decoder.1} parent=11 // pred_fallthru
        _
      // Predicated region
      $region21: #{transformer_decoder.1} parent=11 // pred_check
        %p689 = pneg %p201
      $region22: #{transformer_decoder.1} parent=11 // pred_check_branch
        %691 = sbr.rel (%p689) target = $region24
      $region23: #{transformer_decoder.1} parent=11 // pred_region
        _
      $region24: #{transformer_decoder.1} parent=11 // pred_fallthru
        _
      // Predicated region
      $region25: #{transformer_decoder.1} parent=11 // pred_check
        %p692 = pneg %p222
      $region26: #{transformer_decoder.1} parent=11 // pred_check_branch
        %694 = sbr.rel (%p692) target = $region28
      $region27: #{transformer_decoder.1} parent=11 // pred_region
        _
      $region28: #{transformer_decoder.1} parent=11 // pred_fallthru
        _
      // Predicated region
      $region29: #{transformer_decoder.1} parent=11 // pred_check
        %p695 = pneg %p243
      $region30: #{transformer_decoder.1} parent=11 // pred_check_branch
        %697 = sbr.rel (%p695) target = $region32
      $region31: #{transformer_decoder.1} parent=11 // pred_region
        _
      $region32: #{transformer_decoder.1} parent=11 // pred_fallthru
        _
      // Predicated region
      $region33: #{transformer_decoder.1} parent=11 // pred_check
        %p698 = pneg %p264
      $region34: #{transformer_decoder.1} parent=11 // pred_check_branch
        %700 = sbr.rel (%p698) target = $region36
      $region35: #{transformer_decoder.1} parent=11 // pred_region
        _
      $region36: #{transformer_decoder.1} parent=11 // pred_fallthru
        _
      // Predicated region
      $region37: #{transformer_decoder.1} parent=11 // pred_check
        %p701 = pneg %p285
      $region38: #{transformer_decoder.1} parent=11 // pred_check_branch
        %703 = sbr.rel (%p701) target = $region40
      $region39: #{transformer_decoder.1} parent=11 // pred_region
        _
      $region40: #{transformer_decoder.1} parent=11 // pred_fallthru
        _
      // Predicated region
      $region41: #{transformer_decoder.1} parent=11 // pred_check
        %p704 = pneg %p306
      $region42: #{transformer_decoder.1} parent=11 // pred_check_branch
        %706 = sbr.rel (%p704) target = $region44
      $region43: #{transformer_decoder.1} parent=11 // pred_region
        _
      $region44: #{transformer_decoder.1} parent=11 // pred_fallthru
        _
      // Predicated region
      $region45: #{transformer_decoder.1} parent=11 // pred_check
        %p707 = pneg %p327
      $region46: #{transformer_decoder.1} parent=11 // pred_check_branch
        %709 = sbr.rel (%p707) target = $region48
      $region47: #{transformer_decoder.1} parent=11 // pred_region
        _
      $region48: #{transformer_decoder.1} parent=11 // pred_fallthru
        _
      // Predicated region
      $region49: #{transformer_decoder.1} parent=11 // pred_check
        %p710 = pneg %p348
      $region50: #{transformer_decoder.1} parent=11 // pred_check_branch
        %712 = sbr.rel (%p710) target = $region52
      $region51: #{transformer_decoder.1} parent=11 // pred_region
        _
      $region52: #{transformer_decoder.1} parent=11 // pred_fallthru
        _
      // Predicated region
      $region53: #{transformer_decoder.1} parent=11 // pred_check
        %p713 = pneg %p369
      $region54: #{transformer_decoder.1} parent=11 // pred_check_branch
        %715 = sbr.rel (%p713) target = $region56
      $region55: #{transformer_decoder.1} parent=11 // pred_region
        _
      $region56: #{transformer_decoder.1} parent=11 // pred_fallthru
        _
      // Predicated region
      $region57: #{transformer_decoder.1} parent=11 // pred_check
        %p716 = pneg %p390
      $region58: #{transformer_decoder.1} parent=11 // pred_check_branch
        %718 = sbr.rel (%p716) target = $region60
      $region59: #{transformer_decoder.1} parent=11 // pred_region
        _
      $region60: #{transformer_decoder.1} parent=11 // pred_fallthru
        _
      // Predicated region
      $region61: #{transformer_decoder.1} parent=11 // pred_check
        %p719 = pneg %p411
      $region62: #{transformer_decoder.1} parent=11 // pred_check_branch
        %721 = sbr.rel (%p719) target = $region64
      $region63: #{transformer_decoder.1} parent=11 // pred_region
        _
      $region64: #{transformer_decoder.1} parent=11 // pred_fallthru
        _
      // Predicated region
      $region65: #{transformer_decoder.1} parent=11 // pred_check
        %p722 = pneg %p432
      $region66: #{transformer_decoder.1} parent=11 // pred_check_branch
        %724 = sbr.rel (%p722) target = $region68
      $region67: #{transformer_decoder.1} parent=11 // pred_region
        _
      $region68: #{transformer_decoder.1} parent=11 // pred_fallthru
        _
      // Predicated region
      $region69: #{transformer_decoder.1} parent=11 // pred_check
        %p725 = pneg %p453
      $region70: #{transformer_decoder.1} parent=11 // pred_check_branch
        %727 = sbr.rel (%p725) target = $region72
      $region71: #{transformer_decoder.1} parent=11 // pred_region
        _
      $region72: #{transformer_decoder.1} parent=11 // pred_fallthru
        _
      // Predicated region
      $region73: #{transformer_decoder.1} parent=11 // pred_check
        %p728 = pneg %p474
      $region74: #{transformer_decoder.1} parent=11 // pred_check_branch
        %730 = sbr.rel (%p728) target = $region76
      $region75: #{transformer_decoder.1} parent=11 // pred_region
        _
      $region76: #{transformer_decoder.1} parent=11 // pred_fallthru
        _
      // Predicated region
      $region77: #{transformer_decoder.1} parent=11 // pred_check
        %p731 = pneg %p495
      $region78: #{transformer_decoder.1} parent=11 // pred_check_branch
        %733 = sbr.rel (%p731) target = $region80
      $region79: #{transformer_decoder.1} parent=11 // pred_region
        _
      $region80: #{transformer_decoder.1} parent=11 // pred_fallthru
        _
      // Predicated region
      $region81: #{transformer_decoder.1} parent=11 // pred_check
        %p734 = pneg %p516
      $region82: #{transformer_decoder.1} parent=11 // pred_check_branch
        %736 = sbr.rel (%p734) target = $region84
      $region83: #{transformer_decoder.1} parent=11 // pred_region
        _
      $region84: #{transformer_decoder.1} parent=11 // pred_fallthru
        _
      // Predicated region
      $region85: #{transformer_decoder.1} parent=11 // pred_check
        %p737 = pneg %p537
      $region86: #{transformer_decoder.1} parent=11 // pred_check_branch
        %739 = sbr.rel (%p737) target = $region88
      $region87: #{transformer_decoder.1} parent=11 // pred_region
        _
      $region88: #{transformer_decoder.1} parent=11 // pred_fallthru
        _
      // Predicated region
      $region89: #{transformer_decoder.1} parent=11 // pred_check
        %p740 = pneg %p558
      $region90: #{transformer_decoder.1} parent=11 // pred_check_branch
        %742 = sbr.rel (%p740) target = $region92
      $region91: #{transformer_decoder.1} parent=11 // pred_region
        _
      $region92: #{transformer_decoder.1} parent=11 // pred_fallthru
        _
      // Predicated region
      $region93: #{transformer_decoder.1} parent=11 // pred_check
        %p743 = pneg %p579
      $region94: #{transformer_decoder.1} parent=11 // pred_check_branch
        %745 = sbr.rel (%p743) target = $region96
      $region95: #{transformer_decoder.1} parent=11 // pred_region
        _
      $region96: #{transformer_decoder.1} parent=11 // pred_fallthru
        _
      // Predicated region
      $region97: #{transformer_decoder.1} parent=11 // pred_check
        %p746 = pneg %p600
      $region98: #{transformer_decoder.1} parent=11 // pred_check_branch
        %748 = sbr.rel (%p746) target = $region100
      $region99: #{transformer_decoder.1} parent=11 // pred_region
        _
      $region100: #{transformer_decoder.1} parent=11 // pred_fallthru
        _
      // Predicated region
      $region101: #{transformer_decoder.1} parent=11 // pred_check
        %p749 = pneg %p621
      $region102: #{transformer_decoder.1} parent=11 // pred_check_branch
        %751 = sbr.rel (%p749) target = $region104
      $region103: #{transformer_decoder.1} parent=11 // pred_region
        _
      $region104: #{transformer_decoder.1} parent=11 // pred_fallthru
        _
      // Predicated region
      $region105: #{transformer_decoder.1} parent=11 // pred_check
        %p752 = pneg %p642
      $region106: #{transformer_decoder.1} parent=11 // pred_check_branch
        %754 = sbr.rel (%p752) target = $region108
      $region107: #{transformer_decoder.1} parent=11 // pred_region
        _
      $region108: #{transformer_decoder.1} parent=11 // pred_fallthru
        _
    $region12: #{transformer_decoder.1} parent=5 // pred_fallthru
      _
    %p755 = scmp.lt.s32.totalorder %s34, 2
    // Predicated region
    $region109: #{transformer_decoder.1} parent=5 // pred_check
      %p756 = pneg %p755
    $region110: #{transformer_decoder.1} parent=5 // pred_check_branch
      %758 = sbr.rel (%p756) target = $region112
    $region111: #{transformer_decoder.1} parent=5 // pred_region
      // Predicated region
      $region113: #{transformer_decoder.1} parent=111 // pred_check
        %p759 = pneg %p54
      $region114: #{transformer_decoder.1} parent=111 // pred_check_branch
        %761 = sbr.rel (%p759) target = $region116
      $region115: #{transformer_decoder.1} parent=111 // pred_region
        %s762 = smul.u32 2, %s34
        %p763 = scmp.lt.s32.totalorder %s762, 3
        %s764 = scalar_select %p763, %s762, 3
        %s765 = smul.addr %s764, 8
        %s766 = scalar_lea.vmem %s0, %s765
        %s767 = smul.u32 2, %s34
      $region116: #{transformer_decoder.1} parent=111 // pred_fallthru
        _
      // Predicated region
      $region117: #{transformer_decoder.1} parent=111 // pred_check
        %p768 = pneg %p80
      $region118: #{transformer_decoder.1} parent=111 // pred_check_branch
        %770 = sbr.rel (%p768) target = $region120
      $region119: #{transformer_decoder.1} parent=111 // pred_region
        %s771 = smul.u32 2, %s34
        %p772 = scmp.lt.s32.totalorder %s771, 3
        %s773 = scalar_select %p772, %s771, 3
        %s774 = smul.addr %s773, 2
        %s775 = smul.addr %s774, 8
        %s776 = scalar_lea.vmem %s1, %s775
        %s777 = smul.u32 2, %s34
      $region120: #{transformer_decoder.1} parent=111 // pred_fallthru
        _
      // Predicated region
      $region121: #{transformer_decoder.1} parent=111 // pred_check
        %p778 = pneg %p106
      $region122: #{transformer_decoder.1} parent=111 // pred_check_branch
        %780 = sbr.rel (%p778) target = $region124
      $region123: #{transformer_decoder.1} parent=111 // pred_region
        %s781 = smul.u32 2, %s34
        %p782 = scmp.lt.s32.totalorder %s781, 3
        %s783 = scalar_select %p782, %s781, 3
        %s784 = smul.addr %s783, 2
        %s785 = smul.addr %s784, 8
        %s786 = scalar_lea.vmem %s2, %s785
        %s787 = smul.u32 2, %s34
      $region124: #{transformer_decoder.1} parent=111 // pred_fallthru
        _
      // Predicated region
      $region125: #{transformer_decoder.1} parent=111 // pred_check
        %p788 = pneg %p132
      $region126: #{transformer_decoder.1} parent=111 // pred_check_branch
        %790 = sbr.rel (%p788) target = $region128
      $region127: #{transformer_decoder.1} parent=111 // pred_region
        %s791 = smul.u32 2, %s34
        %p792 = scmp.lt.s32.totalorder %s791, 3
        %s793 = scalar_select %p792, %s791, 3
        %s794 = smul.addr %s793, 8
        %s795 = scalar_lea.vmem %s3, %s794
        %s796 = smul.u32 2, %s34
      $region128: #{transformer_decoder.1} parent=111 // pred_fallthru
        _
    $region112: #{transformer_decoder.1} parent=5 // pred_fallthru
      _
    %p797 = scmp.le.s32.totalorder 1, %s34
    %p798 = scmp.lt.s32.totalorder %s34, 3
    %p799 = pnand %p797, %p798
    %p800 = pneg %p799
    // Predicated region
    $region129: #{transformer_decoder.1} parent=5 // pred_check
      _
    $region130: #{transformer_decoder.1} parent=5 // pred_check_branch
      %802 = sbr.rel (%p799) target = $region132
    $region131: #{transformer_decoder.1} parent=5 // pred_region
      %s803 = ssub.s32 %s34, 1
      %s804 = smul.u32 2, %s39
      %p805 = scmp.lt.s32.totalorder %s804, 3
      %s806 = scalar_select %p805, %s804, 3
      %s807 = smul.addr %s806, 8
      %s808 = scalar_lea.vmem %s0, %s807
      %p809 = pneg %p60
      %p810 = pneg %p57
      %s811 = smul.u32 2, %s39
      %p812 = scmp.lt.s32.totalorder %s811, 3
      %s813 = scalar_select %p812, %s811, 3
      %s814 = smul.addr %s813, 2
      %s815 = smul.addr %s814, 8
      %s816 = scalar_lea.vmem %s1, %s815
      %p817 = pneg %p86
      %p818 = pneg %p83
      %s819 = smul.u32 2, %s39
      %p820 = scmp.lt.s32.totalorder %s819, 3
      %s821 = scalar_select %p820, %s819, 3
      %s822 = smul.addr %s821, 2
      %s823 = smul.addr %s822, 8
      %s824 = scalar_lea.vmem %s2, %s823
      %p825 = pneg %p112
      %p826 = pneg %p109
      %s827 = smul.u32 2, %s39
      %p828 = scmp.lt.s32.totalorder %s827, 3
      %s829 = scalar_select %p828, %s827, 3
      %s830 = smul.addr %s829, 8
      %s831 = scalar_lea.vmem %s3, %s830
      %p832 = pneg %p138
      %p833 = pneg %p135
      %p834 = pneg %p159
      %p835 = pneg %p156
      %p836 = pneg %p180
      %p837 = pneg %p177
      %p838 = pneg %p201
      %p839 = pneg %p198
      %p840 = pneg %p222
      %p841 = pneg %p219
      %p842 = pneg %p243
      %p843 = pneg %p240
      %p844 = pneg %p264
      %p845 = pneg %p261
      %p846 = pneg %p285
      %p847 = pneg %p282
      %p848 = pneg %p306
      %p849 = pneg %p303
      %p850 = pneg %p327
      %p851 = pneg %p324
      %p852 = pneg %p348
      %p853 = pneg %p345
      %p854 = pneg %p369
      %p855 = pneg %p366
      %p856 = pneg %p390
      %p857 = pneg %p387
      %p858 = pneg %p411
      %p859 = pneg %p408
      %p860 = pneg %p432
      %p861 = pneg %p429
      %p862 = pneg %p453
      %p863 = pneg %p450
      %p864 = pneg %p474
      %p865 = pneg %p471
      %p866 = pneg %p495
      %p867 = pneg %p492
      %p868 = pneg %p516
      %p869 = pneg %p513
      %p870 = pneg %p537
      %p871 = pneg %p534
      %p872 = pneg %p558
      %p873 = pneg %p555
      %p874 = pneg %p579
      %p875 = pneg %p576
      %p876 = pneg %p600
      %p877 = pneg %p597
      %p878 = pneg %p621
      %p879 = pneg %p618
      %p880 = pneg %p642
      %p881 = pneg %p639
      %p882 = pneg %p668
      %p883 = pneg %p665
      %s884 = smul.u32 2, %s39
      %p885 = scmp.lt.s32.totalorder %s884, 3
      %s886 = scalar_select %p885, %s884, 3
      %s887 = smul.addr %s886, 8
      %s888 = scalar_lea.vmem %s28, %s887
      %s889 = smul.u32 2, %s39
      %p890 = scmp.lt.s32.totalorder %s889, 3
      %s891 = scalar_select %p890, %s889, 3
      %s892 = smul.addr %s891, 8
      %s893 = scalar_lea.vmem %s0, %s892
      %s894 = smul.u32 2, %s39
      %s895 = smul.u32 2, %s39
      %p896 = scmp.lt.s32.totalorder %s895, 3
      %s897 = scalar_select %p896, %s895, 3
      %s898 = smul.addr %s897, 2
      %s899 = smul.addr %s898, 8
      %s900 = scalar_lea.vmem %s1, %s899
      %s901 = smul.u32 2, %s39
      %s902 = smul.u32 2, %s39
      %p903 = scmp.lt.s32.totalorder %s902, 3
      %s904 = scalar_select %p903, %s902, 3
      %s905 = smul.addr %s904, 2
      %s906 = smul.addr %s905, 8
      %s907 = scalar_lea.vmem %s2, %s906
      %s908 = smul.u32 2, %s39
      %s909 = smul.u32 2, %s39
      %p910 = scmp.lt.s32.totalorder %s909, 3
      %s911 = scalar_select %p910, %s909, 3
      %s912 = smul.addr %s911, 8
      %s913 = scalar_lea.vmem %s3, %s912
      %s914 = smul.u32 2, %s39
      %s915 = smul.u32 2, %s39
      %p916 = scmp.lt.s32.totalorder %s915, 3
      %s917 = scalar_select %p916, %s915, 3
      %s918 = smul.addr %s917, 8
      %s919 = scalar_lea.vmem %s28, %s918
      %s920 = smul.u32 2, %s39
      %v922 = vld [vmem:[%s893] sm:$0xff]
      %v923 = vld [vmem:[%s893 + $0x8] sm:$0xff]
      %v924 = vld [vmem:[%s913] sm:$0xff]
      %v925 = vld [vmem:[%s913 + $0x8] sm:$0xff]
      %v926 = vld [vmem:[%s900] sm:$0xff]
      %v927 = vld [vmem:[%s900 + $0x8] sm:$0xff]
      %v928 = vld [vmem:[%s900 + $0x10] sm:$0xff]
      %v929 = vld [vmem:[%s900 + $0x18] sm:$0xff]
      %v930 = vld [vmem:[%s907] sm:$0xff]
      %v931 = vld [vmem:[%s907 + $0x8] sm:$0xff]
      %v932 = vld [vmem:[%s907 + $0x10] sm:$0xff]
      %v933 = vld [vmem:[%s907 + $0x18] sm:$0xff]
      %v934 = vld [vmem:[%s4] sm:$0xf]
      %v935 = vld [vmem:[%s4 + $0x4] sm:$0xf]
      %v936 = vld [vmem:[%s4 + $0x8] sm:$0xf]
      %v937 = vld [vmem:[%s4 + $0xc] sm:$0xf]
      %v938 = vld [vmem:[%s5] sm:$0x1]
      %v939 = vld [vmem:[%s6] sm:$0xf]
      %v940 = vld [vmem:[%s6 + $0x4] sm:$0xf]
      %v941 = vld [vmem:[%s6 + $0x8] sm:$0xf]
      %v942 = vld [vmem:[%s6 + $0xc] sm:$0xf]
      %v943 = vld [vmem:[%s7] sm:$0x1]
      %v944 = vld [vmem:[%s8] sm:$0xf]
      %v945 = vld [vmem:[%s8 + $0x4] sm:$0xf]
      %v946 = vld [vmem:[%s8 + $0x8] sm:$0xf]
      %v947 = vld [vmem:[%s8 + $0xc] sm:$0xf]
      %v948 = vld [vmem:[%s9] sm:$0x1]
      %v949 = vld [vmem:[%s10] sm:$0xf]
      %v950 = vld [vmem:[%s10 + $0x4] sm:$0xf]
      %v951 = vld [vmem:[%s10 + $0x8] sm:$0xf]
      %v952 = vld [vmem:[%s10 + $0xc] sm:$0xf]
      %v953 = vld [vmem:[%s11] sm:$0x1]
      %v954 = vld [vmem:[%s12] sm:$0xf]
      %v955 = vld [vmem:[%s12 + $0x4] sm:$0xf]
      %v956 = vld [vmem:[%s12 + $0x8] sm:$0xf]
      %v957 = vld [vmem:[%s12 + $0xc] sm:$0xf]
      %v958 = vld [vmem:[%s13] sm:$0x1]
      %v959 = vld [vmem:[%s14] sm:$0xf]
      %v960 = vld [vmem:[%s14 + $0x4] sm:$0xf]
      %v961 = vld [vmem:[%s14 + $0x8] sm:$0xf]
      %v962 = vld [vmem:[%s14 + $0xc] sm:$0xf]
      %v963 = vld [vmem:[%s15] sm:$0x1]
      %v964 = vld [vmem:[%s16] sm:$0xf]
      %v965 = vld [vmem:[%s16 + $0x4] sm:$0xf]
      %v966 = vld [vmem:[%s16 + $0x8] sm:$0xf]
      %v967 = vld [vmem:[%s16 + $0xc] sm:$0xf]
      %v968 = vld [vmem:[%s17] sm:$0x1]
      %v969 = vld [vmem:[%s18] sm:$0xf]
      %v970 = vld [vmem:[%s18 + $0x4] sm:$0xf]
      %v971 = vld [vmem:[%s18 + $0x8] sm:$0xf]
      %v972 = vld [vmem:[%s18 + $0xc] sm:$0xf]
      %v973 = vld [vmem:[%s19] sm:$0x1]
      %v974 = vld [vmem:[%s20] sm:$0xf]
      %v975 = vld [vmem:[%s20 + $0x4] sm:$0xf]
      %v976 = vld [vmem:[%s20 + $0x8] sm:$0xf]
      %v977 = vld [vmem:[%s20 + $0xc] sm:$0xf]
      %v978 = vld [vmem:[%s20 + $0x10] sm:$0xf]
      %v979 = vld [vmem:[%s20 + $0x14] sm:$0xf]
      %v980 = vld [vmem:[%s20 + $0x18] sm:$0xf]
      %v981 = vld [vmem:[%s20 + $0x1c] sm:$0xf]
      %v982 = vld [vmem:[%s21] sm:$0x1]
      %v983 = vld [vmem:[%s22] sm:$0x1]
      %v984 = vld [vmem:[%s23] sm:$0x1]
      %v985 = vld [vmem:[%s24] sm:$0x1]
      %v986 = vld [vmem:[%s25] sm:$0x1]
      %v987 = vld [vmem:[%s26] sm:$0x1]
      %v988 = vld [vmem:[%s27] sm:$0x1]
      %v989 = vadd.f32 %v926, %v930
      %v990 = vadd.f32 %v927, %v931
      %v991 = vadd.f32 %v928, %v932
      %v992 = vadd.f32 %v929, %v933
      %v993 = vpack.c.bf16 %v990, %v989
      %v994 = vpack.c.bf16 %v992, %v991
      %v996 = vlaneseq
      %v997 = vshrl.u32 %v996, 7
      %v998 = vsub.s32 0, %v997
      %v999 = vrot.slane %v958, %v998
      %v1005 = vunpack.c.l.b16 %v954
      %v1006 = vunpack.c.l.b16 %v955
      %v1007 = vunpack.c.l.b16 %v956
      %v1008 = vunpack.c.l.b16 %v957
      %v1009 = vpack.c.b16 %v1006, %v1005
      %v1010 = vpack.c.b16 %v1008, %v1007
      %vm1013 = vcmask 261120
      %v1015 = vsel %vm1013, %v993, 0
      %v1018 = vsel %vm1013, %v994, 0
      %1020 = vmatprep.subr.bf16.mxu0 0
      %1021 = vmatpush1.bf16.msra.mxu0 0
      %1022 = vmatprep.subr.bf16.mxu0 0
      %1023 = vmatpush1.bf16.msra.mxu0 0
      %1024 = vmatprep.subr.bf16.mxu0 0
      %1025 = vmatpush1.bf16.msra.mxu0 0
      %1026 = vmatprep.subr.bf16.mxu0 0
      %1027 = vmatpush1.bf16.msra.mxu0 0
      %1028 = vmatprep.subr.bf16.mxu0 0
      %1029 = vmatpush1.bf16.msra.mxu0 0
      %1030 = vmatprep.subr.bf16.mxu0 0
      %1031 = vmatpush1.bf16.msra.mxu0 0
      %1032 = vmatprep.subr.bf16.mxu0 0
      %1033 = vmatpush1.bf16.msra.mxu0 %v1010
      %1034 = vmatprep.subr.bf16.mxu0 0
      %1035 = vmatpush1.bf16.msra.mxu0 %v1009
      %1036 = vmatprep.subr.bf16.mxu0 0
      %1037 = vmatpush2.bf16.msra.mxu0 0
      %1038 = vmatprep.subr.bf16.mxu0 0
      %1039 = vmatpush2.bf16.msra.mxu0 0
      %1040 = vmatprep.subr.bf16.mxu0 0
      %1041 = vmatpush2.bf16.msra.mxu0 0
      %1042 = vmatprep.subr.bf16.mxu0 0
      %1043 = vmatpush2.bf16.msra.mxu0 0
      %1044 = vmatprep.subr.bf16.mxu0 0
      %1045 = vmatpush2.bf16.msra.mxu0 0
      %1046 = vmatprep.subr.bf16.mxu0 0
      %1047 = vmatpush2.bf16.msra.mxu0 0
      %1048 = vmatprep.subr.bf16.mxu0 0
      %1049 = vmatpush2.bf16.msra.mxu0 0
      %1050 = vmatprep.subr.bf16.mxu0 0
      %1051 = vmatpush2.bf16.msra.mxu0 0
      %1052 = vmatprep.mubr.bf16.mxu0 0
      %1053 = vmatmul.mubr.bf16.gmra.mxu0 %v1015
      %v1054 = vpop.f32.mrf.mxu0
      %v1055 = vadd.f32 %v999, %v1054
      %v1056 = vpop.f32.mrf.mxu0
      %v1057 = vpop.f32.mrf.mxu0
      %v1058 = vadd.f32 %v999, %v1057
      %v1059 = vpop.f32.mrf.mxu0
      %1060 = vmatprep.mubr.bf16.mxu0 0
      %1061 = vmatmul.mubr.bf16.gmra.mxu0 %v1018
      %v1062 = vpop.f32.mrf.mxu0
      %v1063 = vadd.f32 %v999, %v1062
      %v1064 = vpop.f32.mrf.mxu0
      %v1065 = vpop.f32.mrf.mxu0
      %v1066 = vadd.f32 %v999, %v1065
      %v1067 = vpop.f32.mrf.mxu0
      %1068 = vdwg.mxu0
      %v1069 = vpack.c.bf16 %v1058, %v1055
      %v1070 = vpack.c.bf16 %v1066, %v1063
      %v1071 = vpack.c.bf16 %v927, %v926
      %v1072 = vpack.c.bf16 %v929, %v928
      %v1074 = vlaneseq
      %v1075 = vshrl.u32 %v1074, 7
      %v1076 = vsub.s32 0, %v1075
      %v1077 = vrot.slane %v963, %v1076
      %v1083 = vunpack.c.l.b16 %v959
      %v1084 = vunpack.c.l.b16 %v960
      %v1085 = vunpack.c.l.b16 %v961
      %v1086 = vunpack.c.l.b16 %v962
      %v1087 = vpack.c.b16 %v1084, %v1083
      %v1088 = vpack.c.b16 %v1086, %v1085
      %v1092 = vsel %vm1013, %v1071, 0
      %v1095 = vsel %vm1013, %v1072, 0
      %1097 = vmatprep.subr.bf16.mxu0 0
      %1098 = vmatpush1.bf16.msra.mxu0 0
      %1099 = vmatprep.subr.bf16.mxu0 0
      %1100 = vmatpush1.bf16.msra.mxu0 0
      %1101 = vmatprep.subr.bf16.mxu0 0
      %1102 = vmatpush1.bf16.msra.mxu0 0
      %1103 = vmatprep.subr.bf16.mxu0 0
      %1104 = vmatpush1.bf16.msra.mxu0 0
      %1105 = vmatprep.subr.bf16.mxu0 0
      %1106 = vmatpush1.bf16.msra.mxu0 0
      %1107 = vmatprep.subr.bf16.mxu0 0
      %1108 = vmatpush1.bf16.msra.mxu0 0
      %1109 = vmatprep.subr.bf16.mxu0 0
      %1110 = vmatpush1.bf16.msra.mxu0 %v1088
      %1111 = vmatprep.subr.bf16.mxu0 0
      %1112 = vmatpush1.bf16.msra.mxu0 %v1087
      %1113 = vmatprep.subr.bf16.mxu0 0
      %1114 = vmatpush2.bf16.msra.mxu0 0
      %1115 = vmatprep.subr.bf16.mxu0 0
      %1116 = vmatpush2.bf16.msra.mxu0 0
      %1117 = vmatprep.subr.bf16.mxu0 0
      %1118 = vmatpush2.bf16.msra.mxu0 0
      %1119 = vmatprep.subr.bf16.mxu0 0
      %1120 = vmatpush2.bf16.msra.mxu0 0
      %1121 = vmatprep.subr.bf16.mxu0 0
      %1122 = vmatpush2.bf16.msra.mxu0 0
      %1123 = vmatprep.subr.bf16.mxu0 0
      %1124 = vmatpush2.bf16.msra.mxu0 0
      %1125 = vmatprep.subr.bf16.mxu0 0
      %1126 = vmatpush2.bf16.msra.mxu0 0
      %1127 = vmatprep.subr.bf16.mxu0 0
      %1128 = vmatpush2.bf16.msra.mxu0 0
      %1129 = vmatprep.mubr.bf16.mxu0 0
      %1130 = vmatmul.mubr.bf16.gmra.mxu0 %v1092
      %v1131 = vpop.f32.mrf.mxu0
      %v1132 = vadd.f32 %v1077, %v1131
      %v1133 = vpop.f32.mrf.mxu0
      %v1134 = vpop.f32.mrf.mxu0
      %v1135 = vadd.f32 %v1077, %v1134
      %v1136 = vpop.f32.mrf.mxu0
      %1137 = vmatprep.mubr.bf16.mxu0 0
      %1138 = vmatmul.mubr.bf16.gmra.mxu0 %v1095
      %v1139 = vpop.f32.mrf.mxu0
      %v1140 = vadd.f32 %v1077, %v1139
      %v1141 = vpop.f32.mrf.mxu0
      %v1142 = vpop.f32.mrf.mxu0
      %v1143 = vadd.f32 %v1077, %v1142
      %v1144 = vpop.f32.mrf.mxu0
      %1145 = vdwg.mxu0
      %v1146 = vpack.c.bf16 %v1135, %v1132
      %v1147 = vpack.c.bf16 %v1143, %v1140
      loop: start=0, step=1, limit=2
      $region133: #{transformer_decoder.1} parent=131 // loop_pre_header
        _
      $region134: #{transformer_decoder.1} parent=131 // loop_header
        %s1149 = sphi 0, %s1153
        %p1150 = scmp.ge.s32.totalorder %s1149, 2
        %v1154 = vphi %v922, %v3546
        %v1155 = vphi %v923, %v3547
      $region135: #{transformer_decoder.1} parent=131 // loop_header_branch
        %1152 = sbr.rel (%p1150) target = $region139
      $region136: #{transformer_decoder.1} parent=131 // loop_body
        %v1156 = vadd.f32 %v1154, %v924
        %v1157 = vadd.f32 %v1155, %v925
        %v1158 = vpack.c.bf16 %v1157, %v1156
        %v1160 = vlaneseq
        %v1161 = vshrl.u32 %v1160, 7
        %v1162 = vsub.s32 0, %v1161
        %v1163 = vrot.slane %v938, %v1162
        %v1169 = vunpack.c.l.b16 %v934
        %v1170 = vunpack.c.l.b16 %v935
        %v1171 = vunpack.c.l.b16 %v936
        %v1172 = vunpack.c.l.b16 %v937
        %v1173 = vpack.c.b16 %v1170, %v1169
        %v1174 = vpack.c.b16 %v1172, %v1171
        %v1178 = vsel %vm1013, %v1158, 0
        %1180 = vmatprep.subr.bf16.mxu0 0
        %1181 = vmatpush1.bf16.msra.mxu0 0
        %1182 = vmatprep.subr.bf16.mxu0 0
        %1183 = vmatpush1.bf16.msra.mxu0 0
        %1184 = vmatprep.subr.bf16.mxu0 0
        %1185 = vmatpush1.bf16.msra.mxu0 0
        %1186 = vmatprep.subr.bf16.mxu0 0
        %1187 = vmatpush1.bf16.msra.mxu0 0
        %1188 = vmatprep.subr.bf16.mxu0 0
        %1189 = vmatpush1.bf16.msra.mxu0 0
        %1190 = vmatprep.subr.bf16.mxu0 0
        %1191 = vmatpush1.bf16.msra.mxu0 0
        %1192 = vmatprep.subr.bf16.mxu0 0
        %1193 = vmatpush1.bf16.msra.mxu0 %v1174
        %1194 = vmatprep.subr.bf16.mxu0 0
        %1195 = vmatpush1.bf16.msra.mxu0 %v1173
        %1196 = vmatprep.subr.bf16.mxu0 0
        %1197 = vmatpush2.bf16.msra.mxu0 0
        %1198 = vmatprep.subr.bf16.mxu0 0
        %1199 = vmatpush2.bf16.msra.mxu0 0
        %1200 = vmatprep.subr.bf16.mxu0 0
        %1201 = vmatpush2.bf16.msra.mxu0 0
        %1202 = vmatprep.subr.bf16.mxu0 0
        %1203 = vmatpush2.bf16.msra.mxu0 0
        %1204 = vmatprep.subr.bf16.mxu0 0
        %1205 = vmatpush2.bf16.msra.mxu0 0
        %1206 = vmatprep.subr.bf16.mxu0 0
        %1207 = vmatpush2.bf16.msra.mxu0 0
        %1208 = vmatprep.subr.bf16.mxu0 0
        %1209 = vmatpush2.bf16.msra.mxu0 0
        %1210 = vmatprep.subr.bf16.mxu0 0
        %1211 = vmatpush2.bf16.msra.mxu0 0
        %1212 = vmatprep.mubr.bf16.mxu0 0
        %1213 = vmatmul.mubr.bf16.gmra.mxu0 %v1178
        %v1214 = vpop.f32.mrf.mxu0
        %v1215 = vadd.f32 %v1163, %v1214
        %v1216 = vpop.f32.mrf.mxu0
        %v1217 = vpop.f32.mrf.mxu0
        %v1218 = vadd.f32 %v1163, %v1217
        %v1219 = vpop.f32.mrf.mxu0
        %1220 = vdwg.mxu0
        %v1221 = vpack.c.bf16 %v1155, %v1154
        %v1223 = vlaneseq
        %v1224 = vshrl.u32 %v1223, 7
        %v1225 = vsub.s32 0, %v1224
        %v1226 = vrot.slane %v943, %v1225
        %v1232 = vunpack.c.l.b16 %v939
        %v1233 = vunpack.c.l.b16 %v940
        %v1234 = vunpack.c.l.b16 %v941
        %v1235 = vunpack.c.l.b16 %v942
        %v1236 = vpack.c.b16 %v1233, %v1232
        %v1237 = vpack.c.b16 %v1235, %v1234
        %v1241 = vsel %vm1013, %v1221, 0
        %1243 = vmatprep.subr.bf16.mxu0 0
        %1244 = vmatpush1.bf16.msra.mxu0 0
        %1245 = vmatprep.subr.bf16.mxu0 0
        %1246 = vmatpush1.bf16.msra.mxu0 0
        %1247 = vmatprep.subr.bf16.mxu0 0
        %1248 = vmatpush1.bf16.msra.mxu0 0
        %1249 = vmatprep.subr.bf16.mxu0 0
        %1250 = vmatpush1.bf16.msra.mxu0 0
        %1251 = vmatprep.subr.bf16.mxu0 0
        %1252 = vmatpush1.bf16.msra.mxu0 0
        %1253 = vmatprep.subr.bf16.mxu0 0
        %1254 = vmatpush1.bf16.msra.mxu0 0
        %1255 = vmatprep.subr.bf16.mxu0 0
        %1256 = vmatpush1.bf16.msra.mxu0 %v1237
        %1257 = vmatprep.subr.bf16.mxu0 0
        %1258 = vmatpush1.bf16.msra.mxu0 %v1236
        %1259 = vmatprep.subr.bf16.mxu0 0
        %1260 = vmatpush2.bf16.msra.mxu0 0
        %1261 = vmatprep.subr.bf16.mxu0 0
        %1262 = vmatpush2.bf16.msra.mxu0 0
        %1263 = vmatprep.subr.bf16.mxu0 0
        %1264 = vmatpush2.bf16.msra.mxu0 0
        %1265 = vmatprep.subr.bf16.mxu0 0
        %1266 = vmatpush2.bf16.msra.mxu0 0
        %1267 = vmatprep.subr.bf16.mxu0 0
        %1268 = vmatpush2.bf16.msra.mxu0 0
        %1269 = vmatprep.subr.bf16.mxu0 0
        %1270 = vmatpush2.bf16.msra.mxu0 0
        %1271 = vmatprep.subr.bf16.mxu0 0
        %1272 = vmatpush2.bf16.msra.mxu0 0
        %1273 = vmatprep.subr.bf16.mxu0 0
        %1274 = vmatpush2.bf16.msra.mxu0 0
        %1275 = vmatprep.mubr.bf16.mxu0 0
        %1276 = vmatmul.mubr.bf16.gmra.mxu0 %v1241
        %v1277 = vpop.f32.mrf.mxu0
        %v1278 = vadd.f32 %v1226, %v1277
        %v1279 = vpop.f32.mrf.mxu0
        %v1280 = vpop.f32.mrf.mxu0
        %v1281 = vadd.f32 %v1226, %v1280
        %v1282 = vpop.f32.mrf.mxu0
        %1283 = vdwg.mxu0
        %v1284 = vpack.c.bf16 %v1218, %v1215
        %v1285 = vpack.c.bf16 %v1281, %v1278
        %1287 = vrot.lane.b32.xlu0 %v1284, 96
        %v1288 = vpop.permute.xlu0 %1287
        %vm1289 = vcmask 64512
        %v1291 = vsel %vm1289, %v1284, 0
        %v1294 = vsel %vm1289, %v1288, 0
        %1296 = vmatprep.subr.bf16.mxu0 0
        %1297 = vmatpush1.bf16.xpose.msra.mxu0 0
        %1298 = vmatprep.subr.bf16.mxu0 0
        %1299 = vmatpush1.bf16.xpose.msra.mxu0 0
        %1300 = vmatprep.subr.bf16.mxu0 0
        %1301 = vmatpush1.bf16.xpose.msra.mxu0 0
        %1302 = vmatprep.subr.bf16.mxu0 0
        %1303 = vmatpush1.bf16.xpose.msra.mxu0 0
        %1304 = vmatprep.subr.bf16.mxu0 0
        %1305 = vmatpush1.bf16.xpose.msra.mxu0 0
        %1306 = vmatprep.subr.bf16.mxu0 0
        %1307 = vmatpush1.bf16.xpose.msra.mxu0 0
        %1308 = vmatprep.subr.bf16.mxu0 0
        %1309 = vmatpush1.bf16.xpose.msra.mxu0 0
        %1310 = vmatprep.subr.bf16.mxu0 0
        %1311 = vmatpush1.bf16.xpose.msra.mxu0 %v1294
        %1312 = vmatprep.subr.bf16.mxu0 0
        %1313 = vmatpush2.bf16.xpose.msra.mxu0 0
        %1314 = vmatprep.subr.bf16.mxu0 0
        %1315 = vmatpush2.bf16.xpose.msra.mxu0 0
        %1316 = vmatprep.subr.bf16.mxu0 0
        %1317 = vmatpush2.bf16.xpose.msra.mxu0 0
        %1318 = vmatprep.subr.bf16.mxu0 0
        %1319 = vmatpush2.bf16.xpose.msra.mxu0 0
        %1320 = vmatprep.subr.bf16.mxu0 0
        %1321 = vmatpush2.bf16.xpose.msra.mxu0 0
        %1322 = vmatprep.subr.bf16.mxu0 0
        %1323 = vmatpush2.bf16.xpose.msra.mxu0 0
        %1324 = vmatprep.subr.bf16.mxu0 0
        %1325 = vmatpush2.bf16.xpose.msra.mxu0 0
        %1326 = vmatprep.subr.bf16.mxu0 0
        %1327 = vmatpush2.bf16.xpose.msra.mxu0 0
        %1328 = vmatprep.mubr.bf16.mxu0 0
        %1329 = vmatmul.mubr.bf16.gmra.mxu0 %v1291
        %v1330 = vpop.f32.mrf.mxu0
        %v1331 = vadd.f32 0.0, %v1330
        %v1332 = vpop.f32.mrf.mxu0
        %v1333 = vpop.f32.mrf.mxu0
        %v1334 = vpop.f32.mrf.mxu0
        %1335 = vdwg.mxu0
        %v1336 = vsel %vm1289, %v1331, -inf
        %1337 = vmax.xlane.f32.xlu0 %v1336
        %v1338 = vpop.xlane.xlu0 %1337
        %v1339 = vsub.f32 %v1331, %v1338
        %v1340 = vmul.f32 %v1339, 1.442695
        %v1341 = vpow.pop %v1340
        %v1342 = vsel %vm1289, %v1341, 0.0
        %1343 = vadd.xlane.f32.xlu0 %v1342
        %v1344 = vpop.xlane.xlu0 %1343
        %v1345 = vrcp.pop %v1344
        %v1346 = vmul.f32 %v1341, %v1345
        %v1347 = vpack.c.bf16 %v1346, %v1346
        %v1349 = vsel %vm1289, %v1347, 0
        %vm1351 = vcmask 1043456
        %v1353 = vsel %vm1351, %v1285, 0
        %1355 = vmatprep.subr.bf16.mxu0 0
        %1356 = vmatpush1.bf16.msra.mxu0 0
        %1357 = vmatprep.subr.bf16.mxu0 0
        %1358 = vmatpush1.bf16.msra.mxu0 0
        %1359 = vmatprep.subr.bf16.mxu0 0
        %1360 = vmatpush1.bf16.msra.mxu0 0
        %1361 = vmatprep.subr.bf16.mxu0 0
        %1362 = vmatpush1.bf16.msra.mxu0 0
        %1363 = vmatprep.subr.bf16.mxu0 0
        %1364 = vmatpush1.bf16.msra.mxu0 0
        %1365 = vmatprep.subr.bf16.mxu0 0
        %1366 = vmatpush1.bf16.msra.mxu0 0
        %1367 = vmatprep.subr.bf16.mxu0 0
        %1368 = vmatpush1.bf16.msra.mxu0 0
        %1369 = vmatprep.subr.bf16.mxu0 0
        %1370 = vmatpush1.bf16.msra.mxu0 %v1353
        %1371 = vmatprep.subr.bf16.mxu0 0
        %1372 = vmatpush2.bf16.msra.mxu0 0
        %1373 = vmatprep.subr.bf16.mxu0 0
        %1374 = vmatpush2.bf16.msra.mxu0 0
        %1375 = vmatprep.subr.bf16.mxu0 0
        %1376 = vmatpush2.bf16.msra.mxu0 0
        %1377 = vmatprep.subr.bf16.mxu0 0
        %1378 = vmatpush2.bf16.msra.mxu0 0
        %1379 = vmatprep.subr.bf16.mxu0 0
        %1380 = vmatpush2.bf16.msra.mxu0 0
        %1381 = vmatprep.subr.bf16.mxu0 0
        %1382 = vmatpush2.bf16.msra.mxu0 0
        %1383 = vmatprep.subr.bf16.mxu0 0
        %1384 = vmatpush2.bf16.msra.mxu0 0
        %1385 = vmatprep.subr.bf16.mxu0 0
        %1386 = vmatpush2.bf16.msra.mxu0 0
        %1387 = vmatprep.mubr.bf16.mxu0 0
        %1388 = vmatmul.mubr.bf16.gmra.mxu0 %v1349
        %v1389 = vpop.f32.mrf.mxu0
        %v1390 = vadd.f32 0.0, %v1389
        %v1391 = vpop.f32.mrf.mxu0
        %v1392 = vpop.f32.mrf.mxu0
        %v1393 = vpop.f32.mrf.mxu0
        %1394 = vdwg.mxu0
        %1395 = vrot.lane.b32.xlu0 %v1284, 120
        %v1396 = vpop.permute.xlu0 %1395
        %1397 = vrot.lane.b32.xlu0 %v1284, 88
        %v1398 = vpop.permute.xlu0 %1397
        %v1400 = vsel %vm1289, %v1396, 0
        %v1403 = vsel %vm1289, %v1398, 0
        %1405 = vmatprep.subr.bf16.mxu0 0
        %1406 = vmatpush1.bf16.xpose.msra.mxu0 0
        %1407 = vmatprep.subr.bf16.mxu0 0
        %1408 = vmatpush1.bf16.xpose.msra.mxu0 0
        %1409 = vmatprep.subr.bf16.mxu0 0
        %1410 = vmatpush1.bf16.xpose.msra.mxu0 0
        %1411 = vmatprep.subr.bf16.mxu0 0
        %1412 = vmatpush1.bf16.xpose.msra.mxu0 0
        %1413 = vmatprep.subr.bf16.mxu0 0
        %1414 = vmatpush1.bf16.xpose.msra.mxu0 0
        %1415 = vmatprep.subr.bf16.mxu0 0
        %1416 = vmatpush1.bf16.xpose.msra.mxu0 0
        %1417 = vmatprep.subr.bf16.mxu0 0
        %1418 = vmatpush1.bf16.xpose.msra.mxu0 0
        %1419 = vmatprep.subr.bf16.mxu0 0
        %1420 = vmatpush1.bf16.xpose.msra.mxu0 %v1403
        %1421 = vmatprep.subr.bf16.mxu0 0
        %1422 = vmatpush2.bf16.xpose.msra.mxu0 0
        %1423 = vmatprep.subr.bf16.mxu0 0
        %1424 = vmatpush2.bf16.xpose.msra.mxu0 0
        %1425 = vmatprep.subr.bf16.mxu0 0
        %1426 = vmatpush2.bf16.xpose.msra.mxu0 0
        %1427 = vmatprep.subr.bf16.mxu0 0
        %1428 = vmatpush2.bf16.xpose.msra.mxu0 0
        %1429 = vmatprep.subr.bf16.mxu0 0
        %1430 = vmatpush2.bf16.xpose.msra.mxu0 0
        %1431 = vmatprep.subr.bf16.mxu0 0
        %1432 = vmatpush2.bf16.xpose.msra.mxu0 0
        %1433 = vmatprep.subr.bf16.mxu0 0
        %1434 = vmatpush2.bf16.xpose.msra.mxu0 0
        %1435 = vmatprep.subr.bf16.mxu0 0
        %1436 = vmatpush2.bf16.xpose.msra.mxu0 0
        %1437 = vmatprep.mubr.bf16.mxu0 0
        %1438 = vmatmul.mubr.bf16.gmra.mxu0 %v1400
        %v1439 = vpop.f32.mrf.mxu0
        %v1440 = vadd.f32 0.0, %v1439
        %v1441 = vpop.f32.mrf.mxu0
        %v1442 = vpop.f32.mrf.mxu0
        %v1443 = vpop.f32.mrf.mxu0
        %1444 = vdwg.mxu0
        %v1445 = vsel %vm1289, %v1440, -inf
        %1446 = vmax.xlane.f32.xlu0 %v1445
        %v1447 = vpop.xlane.xlu0 %1446
        %v1448 = vsub.f32 %v1440, %v1447
        %v1449 = vmul.f32 %v1448, 1.442695
        %v1450 = vpow.pop %v1449
        %v1451 = vsel %vm1289, %v1450, 0.0
        %1452 = vadd.xlane.f32.xlu0 %v1451
        %v1453 = vpop.xlane.xlu0 %1452
        %v1454 = vrcp.pop %v1453
        %v1455 = vmul.f32 %v1450, %v1454
        %v1456 = vpack.c.bf16 %v1455, %v1455
        %1458 = vrot.lane.b32.xlu0 %v1285, 120
        %v1459 = vpop.permute.xlu0 %1458
        %v1461 = vsel %vm1289, %v1456, 0
        %v1464 = vsel %vm1351, %v1459, 0
        %1466 = vmatprep.subr.bf16.mxu0 0
        %1467 = vmatpush1.bf16.msra.mxu0 0
        %1468 = vmatprep.subr.bf16.mxu0 0
        %1469 = vmatpush1.bf16.msra.mxu0 0
        %1470 = vmatprep.subr.bf16.mxu0 0
        %1471 = vmatpush1.bf16.msra.mxu0 0
        %1472 = vmatprep.subr.bf16.mxu0 0
        %1473 = vmatpush1.bf16.msra.mxu0 0
        %1474 = vmatprep.subr.bf16.mxu0 0
        %1475 = vmatpush1.bf16.msra.mxu0 0
        %1476 = vmatprep.subr.bf16.mxu0 0
        %1477 = vmatpush1.bf16.msra.mxu0 0
        %1478 = vmatprep.subr.bf16.mxu0 0
        %1479 = vmatpush1.bf16.msra.mxu0 0
        %1480 = vmatprep.subr.bf16.mxu0 0
        %1481 = vmatpush1.bf16.msra.mxu0 %v1464
        %1482 = vmatprep.subr.bf16.mxu0 0
        %1483 = vmatpush2.bf16.msra.mxu0 0
        %1484 = vmatprep.subr.bf16.mxu0 0
        %1485 = vmatpush2.bf16.msra.mxu0 0
        %1486 = vmatprep.subr.bf16.mxu0 0
        %1487 = vmatpush2.bf16.msra.mxu0 0
        %1488 = vmatprep.subr.bf16.mxu0 0
        %1489 = vmatpush2.bf16.msra.mxu0 0
        %1490 = vmatprep.subr.bf16.mxu0 0
        %1491 = vmatpush2.bf16.msra.mxu0 0
        %1492 = vmatprep.subr.bf16.mxu0 0
        %1493 = vmatpush2.bf16.msra.mxu0 0
        %1494 = vmatprep.subr.bf16.mxu0 0
        %1495 = vmatpush2.bf16.msra.mxu0 0
        %1496 = vmatprep.subr.bf16.mxu0 0
        %1497 = vmatpush2.bf16.msra.mxu0 0
        %1498 = vmatprep.mubr.bf16.mxu0 0
        %1499 = vmatmul.mubr.bf16.gmra.mxu0 %v1461
        %v1500 = vpop.f32.mrf.mxu0
        %v1501 = vadd.f32 0.0, %v1500
        %v1502 = vpop.f32.mrf.mxu0
        %v1503 = vpop.f32.mrf.mxu0
        %v1504 = vpop.f32.mrf.mxu0
        %1505 = vdwg.mxu0
        %1506 = vrot.lane.b32.xlu0 %v1284, 112
        %v1507 = vpop.permute.xlu0 %1506
        %1508 = vrot.lane.b32.xlu0 %v1284, 80
        %v1509 = vpop.permute.xlu0 %1508
        %v1511 = vsel %vm1289, %v1507, 0
        %v1514 = vsel %vm1289, %v1509, 0
        %1516 = vmatprep.subr.bf16.mxu0 0
        %1517 = vmatpush1.bf16.xpose.msra.mxu0 0
        %1518 = vmatprep.subr.bf16.mxu0 0
        %1519 = vmatpush1.bf16.xpose.msra.mxu0 0
        %1520 = vmatprep.subr.bf16.mxu0 0
        %1521 = vmatpush1.bf16.xpose.msra.mxu0 0
        %1522 = vmatprep.subr.bf16.mxu0 0
        %1523 = vmatpush1.bf16.xpose.msra.mxu0 0
        %1524 = vmatprep.subr.bf16.mxu0 0
        %1525 = vmatpush1.bf16.xpose.msra.mxu0 0
        %1526 = vmatprep.subr.bf16.mxu0 0
        %1527 = vmatpush1.bf16.xpose.msra.mxu0 0
        %1528 = vmatprep.subr.bf16.mxu0 0
        %1529 = vmatpush1.bf16.xpose.msra.mxu0 0
        %1530 = vmatprep.subr.bf16.mxu0 0
        %1531 = vmatpush1.bf16.xpose.msra.mxu0 %v1514
        %1532 = vmatprep.subr.bf16.mxu0 0
        %1533 = vmatpush2.bf16.xpose.msra.mxu0 0
        %1534 = vmatprep.subr.bf16.mxu0 0
        %1535 = vmatpush2.bf16.xpose.msra.mxu0 0
        %1536 = vmatprep.subr.bf16.mxu0 0
        %1537 = vmatpush2.bf16.xpose.msra.mxu0 0
        %1538 = vmatprep.subr.bf16.mxu0 0
        %1539 = vmatpush2.bf16.xpose.msra.mxu0 0
        %1540 = vmatprep.subr.bf16.mxu0 0
        %1541 = vmatpush2.bf16.xpose.msra.mxu0 0
        %1542 = vmatprep.subr.bf16.mxu0 0
        %1543 = vmatpush2.bf16.xpose.msra.mxu0 0
        %1544 = vmatprep.subr.bf16.mxu0 0
        %1545 = vmatpush2.bf16.xpose.msra.mxu0 0
        %1546 = vmatprep.subr.bf16.mxu0 0
        %1547 = vmatpush2.bf16.xpose.msra.mxu0 0
        %1548 = vmatprep.mubr.bf16.mxu0 0
        %1549 = vmatmul.mubr.bf16.gmra.mxu0 %v1511
        %v1550 = vpop.f32.mrf.mxu0
        %v1551 = vadd.f32 0.0, %v1550
        %v1552 = vpop.f32.mrf.mxu0
        %v1553 = vpop.f32.mrf.mxu0
        %v1554 = vpop.f32.mrf.mxu0
        %1555 = vdwg.mxu0
        %v1556 = vsel %vm1289, %v1551, -inf
        %1557 = vmax.xlane.f32.xlu0 %v1556
        %v1558 = vpop.xlane.xlu0 %1557
        %v1559 = vsub.f32 %v1551, %v1558
        %v1560 = vmul.f32 %v1559, 1.442695
        %v1561 = vpow.pop %v1560
        %v1562 = vsel %vm1289, %v1561, 0.0
        %1563 = vadd.xlane.f32.xlu0 %v1562
        %v1564 = vpop.xlane.xlu0 %1563
        %v1565 = vrcp.pop %v1564
        %v1566 = vmul.f32 %v1561, %v1565
        %v1567 = vpack.c.bf16 %v1566, %v1566
        %1568 = vrot.lane.b32.xlu0 %v1285, 112
        %v1569 = vpop.permute.xlu0 %1568
        %v1571 = vsel %vm1289, %v1567, 0
        %v1574 = vsel %vm1351, %v1569, 0
        %1576 = vmatprep.subr.bf16.mxu0 0
        %1577 = vmatpush1.bf16.msra.mxu0 0
        %1578 = vmatprep.subr.bf16.mxu0 0
        %1579 = vmatpush1.bf16.msra.mxu0 0
        %1580 = vmatprep.subr.bf16.mxu0 0
        %1581 = vmatpush1.bf16.msra.mxu0 0
        %1582 = vmatprep.subr.bf16.mxu0 0
        %1583 = vmatpush1.bf16.msra.mxu0 0
        %1584 = vmatprep.subr.bf16.mxu0 0
        %1585 = vmatpush1.bf16.msra.mxu0 0
        %1586 = vmatprep.subr.bf16.mxu0 0
        %1587 = vmatpush1.bf16.msra.mxu0 0
        %1588 = vmatprep.subr.bf16.mxu0 0
        %1589 = vmatpush1.bf16.msra.mxu0 0
        %1590 = vmatprep.subr.bf16.mxu0 0
        %1591 = vmatpush1.bf16.msra.mxu0 %v1574
        %1592 = vmatprep.subr.bf16.mxu0 0
        %1593 = vmatpush2.bf16.msra.mxu0 0
        %1594 = vmatprep.subr.bf16.mxu0 0
        %1595 = vmatpush2.bf16.msra.mxu0 0
        %1596 = vmatprep.subr.bf16.mxu0 0
        %1597 = vmatpush2.bf16.msra.mxu0 0
        %1598 = vmatprep.subr.bf16.mxu0 0
        %1599 = vmatpush2.bf16.msra.mxu0 0
        %1600 = vmatprep.subr.bf16.mxu0 0
        %1601 = vmatpush2.bf16.msra.mxu0 0
        %1602 = vmatprep.subr.bf16.mxu0 0
        %1603 = vmatpush2.bf16.msra.mxu0 0
        %1604 = vmatprep.subr.bf16.mxu0 0
        %1605 = vmatpush2.bf16.msra.mxu0 0
        %1606 = vmatprep.subr.bf16.mxu0 0
        %1607 = vmatpush2.bf16.msra.mxu0 0
        %1608 = vmatprep.mubr.bf16.mxu0 0
        %1609 = vmatmul.mubr.bf16.gmra.mxu0 %v1571
        %v1610 = vpop.f32.mrf.mxu0
        %v1611 = vadd.f32 0.0, %v1610
        %v1612 = vpop.f32.mrf.mxu0
        %v1613 = vpop.f32.mrf.mxu0
        %v1614 = vpop.f32.mrf.mxu0
        %1615 = vdwg.mxu0
        %1616 = vrot.lane.b32.xlu0 %v1284, 104
        %v1617 = vpop.permute.xlu0 %1616
        %1618 = vrot.lane.b32.xlu0 %v1284, 72
        %v1619 = vpop.permute.xlu0 %1618
        %v1621 = vsel %vm1289, %v1617, 0
        %v1624 = vsel %vm1289, %v1619, 0
        %1626 = vmatprep.subr.bf16.mxu0 0
        %1627 = vmatpush1.bf16.xpose.msra.mxu0 0
        %1628 = vmatprep.subr.bf16.mxu0 0
        %1629 = vmatpush1.bf16.xpose.msra.mxu0 0
        %1630 = vmatprep.subr.bf16.mxu0 0
        %1631 = vmatpush1.bf16.xpose.msra.mxu0 0
        %1632 = vmatprep.subr.bf16.mxu0 0
        %1633 = vmatpush1.bf16.xpose.msra.mxu0 0
        %1634 = vmatprep.subr.bf16.mxu0 0
        %1635 = vmatpush1.bf16.xpose.msra.mxu0 0
        %1636 = vmatprep.subr.bf16.mxu0 0
        %1637 = vmatpush1.bf16.xpose.msra.mxu0 0
        %1638 = vmatprep.subr.bf16.mxu0 0
        %1639 = vmatpush1.bf16.xpose.msra.mxu0 0
        %1640 = vmatprep.subr.bf16.mxu0 0
        %1641 = vmatpush1.bf16.xpose.msra.mxu0 %v1624
        %1642 = vmatprep.subr.bf16.mxu0 0
        %1643 = vmatpush2.bf16.xpose.msra.mxu0 0
        %1644 = vmatprep.subr.bf16.mxu0 0
        %1645 = vmatpush2.bf16.xpose.msra.mxu0 0
        %1646 = vmatprep.subr.bf16.mxu0 0
        %1647 = vmatpush2.bf16.xpose.msra.mxu0 0
        %1648 = vmatprep.subr.bf16.mxu0 0
        %1649 = vmatpush2.bf16.xpose.msra.mxu0 0
        %1650 = vmatprep.subr.bf16.mxu0 0
        %1651 = vmatpush2.bf16.xpose.msra.mxu0 0
        %1652 = vmatprep.subr.bf16.mxu0 0
        %1653 = vmatpush2.bf16.xpose.msra.mxu0 0
        %1654 = vmatprep.subr.bf16.mxu0 0
        %1655 = vmatpush2.bf16.xpose.msra.mxu0 0
        %1656 = vmatprep.subr.bf16.mxu0 0
        %1657 = vmatpush2.bf16.xpose.msra.mxu0 0
        %1658 = vmatprep.mubr.bf16.mxu0 0
        %1659 = vmatmul.mubr.bf16.gmra.mxu0 %v1621
        %v1660 = vpop.f32.mrf.mxu0
        %v1661 = vadd.f32 0.0, %v1660
        %v1662 = vpop.f32.mrf.mxu0
        %v1663 = vpop.f32.mrf.mxu0
        %v1664 = vpop.f32.mrf.mxu0
        %1665 = vdwg.mxu0
        %v1666 = vsel %vm1289, %v1661, -inf
        %1667 = vmax.xlane.f32.xlu0 %v1666
        %v1668 = vpop.xlane.xlu0 %1667
        %v1669 = vsub.f32 %v1661, %v1668
        %v1670 = vmul.f32 %v1669, 1.442695
        %v1671 = vpow.pop %v1670
        %v1672 = vsel %vm1289, %v1671, 0.0
        %1673 = vadd.xlane.f32.xlu0 %v1672
        %v1674 = vpop.xlane.xlu0 %1673
        %v1675 = vrcp.pop %v1674
        %v1676 = vmul.f32 %v1671, %v1675
        %v1677 = vpack.c.bf16 %v1676, %v1676
        %1678 = vrot.lane.b32.xlu0 %v1285, 104
        %v1679 = vpop.permute.xlu0 %1678
        %v1681 = vsel %vm1289, %v1677, 0
        %v1684 = vsel %vm1351, %v1679, 0
        %1686 = vmatprep.subr.bf16.mxu0 0
        %1687 = vmatpush1.bf16.msra.mxu0 0
        %1688 = vmatprep.subr.bf16.mxu0 0
        %1689 = vmatpush1.bf16.msra.mxu0 0
        %1690 = vmatprep.subr.bf16.mxu0 0
        %1691 = vmatpush1.bf16.msra.mxu0 0
        %1692 = vmatprep.subr.bf16.mxu0 0
        %1693 = vmatpush1.bf16.msra.mxu0 0
        %1694 = vmatprep.subr.bf16.mxu0 0
        %1695 = vmatpush1.bf16.msra.mxu0 0
        %1696 = vmatprep.subr.bf16.mxu0 0
        %1697 = vmatpush1.bf16.msra.mxu0 0
        %1698 = vmatprep.subr.bf16.mxu0 0
        %1699 = vmatpush1.bf16.msra.mxu0 0
        %1700 = vmatprep.subr.bf16.mxu0 0
        %1701 = vmatpush1.bf16.msra.mxu0 %v1684
        %1702 = vmatprep.subr.bf16.mxu0 0
        %1703 = vmatpush2.bf16.msra.mxu0 0
        %1704 = vmatprep.subr.bf16.mxu0 0
        %1705 = vmatpush2.bf16.msra.mxu0 0
        %1706 = vmatprep.subr.bf16.mxu0 0
        %1707 = vmatpush2.bf16.msra.mxu0 0
        %1708 = vmatprep.subr.bf16.mxu0 0
        %1709 = vmatpush2.bf16.msra.mxu0 0
        %1710 = vmatprep.subr.bf16.mxu0 0
        %1711 = vmatpush2.bf16.msra.mxu0 0
        %1712 = vmatprep.subr.bf16.mxu0 0
        %1713 = vmatpush2.bf16.msra.mxu0 0
        %1714 = vmatprep.subr.bf16.mxu0 0
        %1715 = vmatpush2.bf16.msra.mxu0 0
        %1716 = vmatprep.subr.bf16.mxu0 0
        %1717 = vmatpush2.bf16.msra.mxu0 0
        %1718 = vmatprep.mubr.bf16.mxu0 0
        %1719 = vmatmul.mubr.bf16.gmra.mxu0 %v1681
        %v1720 = vpop.f32.mrf.mxu0
        %v1721 = vadd.f32 0.0, %v1720
        %v1722 = vpop.f32.mrf.mxu0
        %v1723 = vpop.f32.mrf.mxu0
        %v1724 = vpop.f32.mrf.mxu0
        %1725 = vdwg.mxu0
        %1727 = vrot.lane.b32.xlu0 %v1501, 8
        %v1728 = vpop.permute.xlu0 %1727
        %1731 = vrot.lane.b32.xlu0 %v1611, 16
        %v1732 = vpop.permute.xlu0 %1731
        %1735 = vrot.lane.b32.xlu0 %v1721, 24
        %v1736 = vpop.permute.xlu0 %1735
        %v1738 = vsel %vm1289, %v1390, %v1728
        %vm1739 = vcmask 130048
        %v1740 = vsel %vm1739, %v1738, %v1732
        %vm1741 = vcmask 195584
        %v1742 = vsel %vm1741, %v1740, %v1736
        %v1743 = vrot.slane %v1284, 4
        %1744 = vrot.lane.b32.xlu0 %v1743, 96
        %v1745 = vpop.permute.xlu0 %1744
        %v1747 = vsel %vm1289, %v1743, 0
        %v1750 = vsel %vm1289, %v1745, 0
        %1752 = vmatprep.subr.bf16.mxu0 0
        %1753 = vmatpush1.bf16.xpose.msra.mxu0 0
        %1754 = vmatprep.subr.bf16.mxu0 0
        %1755 = vmatpush1.bf16.xpose.msra.mxu0 0
        %1756 = vmatprep.subr.bf16.mxu0 0
        %1757 = vmatpush1.bf16.xpose.msra.mxu0 0
        %1758 = vmatprep.subr.bf16.mxu0 0
        %1759 = vmatpush1.bf16.xpose.msra.mxu0 0
        %1760 = vmatprep.subr.bf16.mxu0 0
        %1761 = vmatpush1.bf16.xpose.msra.mxu0 0
        %1762 = vmatprep.subr.bf16.mxu0 0
        %1763 = vmatpush1.bf16.xpose.msra.mxu0 0
        %1764 = vmatprep.subr.bf16.mxu0 0
        %1765 = vmatpush1.bf16.xpose.msra.mxu0 0
        %1766 = vmatprep.subr.bf16.mxu0 0
        %1767 = vmatpush1.bf16.xpose.msra.mxu0 %v1750
        %1768 = vmatprep.subr.bf16.mxu0 0
        %1769 = vmatpush2.bf16.xpose.msra.mxu0 0
        %1770 = vmatprep.subr.bf16.mxu0 0
        %1771 = vmatpush2.bf16.xpose.msra.mxu0 0
        %1772 = vmatprep.subr.bf16.mxu0 0
        %1773 = vmatpush2.bf16.xpose.msra.mxu0 0
        %1774 = vmatprep.subr.bf16.mxu0 0
        %1775 = vmatpush2.bf16.xpose.msra.mxu0 0
        %1776 = vmatprep.subr.bf16.mxu0 0
        %1777 = vmatpush2.bf16.xpose.msra.mxu0 0
        %1778 = vmatprep.subr.bf16.mxu0 0
        %1779 = vmatpush2.bf16.xpose.msra.mxu0 0
        %1780 = vmatprep.subr.bf16.mxu0 0
        %1781 = vmatpush2.bf16.xpose.msra.mxu0 0
        %1782 = vmatprep.subr.bf16.mxu0 0
        %1783 = vmatpush2.bf16.xpose.msra.mxu0 0
        %1784 = vmatprep.mubr.bf16.mxu0 0
        %1785 = vmatmul.mubr.bf16.gmra.mxu0 %v1747
        %v1786 = vpop.f32.mrf.mxu0
        %v1787 = vadd.f32 0.0, %v1786
        %v1788 = vpop.f32.mrf.mxu0
        %v1789 = vpop.f32.mrf.mxu0
        %v1790 = vpop.f32.mrf.mxu0
        %1791 = vdwg.mxu0
        %v1792 = vsel %vm1289, %v1787, -inf
        %1793 = vmax.xlane.f32.xlu0 %v1792
        %v1794 = vpop.xlane.xlu0 %1793
        %v1795 = vsub.f32 %v1787, %v1794
        %v1796 = vmul.f32 %v1795, 1.442695
        %v1797 = vpow.pop %v1796
        %v1798 = vsel %vm1289, %v1797, 0.0
        %1799 = vadd.xlane.f32.xlu0 %v1798
        %v1800 = vpop.xlane.xlu0 %1799
        %v1801 = vrcp.pop %v1800
        %v1802 = vmul.f32 %v1797, %v1801
        %v1803 = vpack.c.bf16 %v1802, %v1802
        %v1804 = vrot.slane %v1285, 4
        %v1806 = vsel %vm1289, %v1803, 0
        %v1809 = vsel %vm1351, %v1804, 0
        %1811 = vmatprep.subr.bf16.mxu0 0
        %1812 = vmatpush1.bf16.msra.mxu0 0
        %1813 = vmatprep.subr.bf16.mxu0 0
        %1814 = vmatpush1.bf16.msra.mxu0 0
        %1815 = vmatprep.subr.bf16.mxu0 0
        %1816 = vmatpush1.bf16.msra.mxu0 0
        %1817 = vmatprep.subr.bf16.mxu0 0
        %1818 = vmatpush1.bf16.msra.mxu0 0
        %1819 = vmatprep.subr.bf16.mxu0 0
        %1820 = vmatpush1.bf16.msra.mxu0 0
        %1821 = vmatprep.subr.bf16.mxu0 0
        %1822 = vmatpush1.bf16.msra.mxu0 0
        %1823 = vmatprep.subr.bf16.mxu0 0
        %1824 = vmatpush1.bf16.msra.mxu0 0
        %1825 = vmatprep.subr.bf16.mxu0 0
        %1826 = vmatpush1.bf16.msra.mxu0 %v1809
        %1827 = vmatprep.subr.bf16.mxu0 0
        %1828 = vmatpush2.bf16.msra.mxu0 0
        %1829 = vmatprep.subr.bf16.mxu0 0
        %1830 = vmatpush2.bf16.msra.mxu0 0
        %1831 = vmatprep.subr.bf16.mxu0 0
        %1832 = vmatpush2.bf16.msra.mxu0 0
        %1833 = vmatprep.subr.bf16.mxu0 0
        %1834 = vmatpush2.bf16.msra.mxu0 0
        %1835 = vmatprep.subr.bf16.mxu0 0
        %1836 = vmatpush2.bf16.msra.mxu0 0
        %1837 = vmatprep.subr.bf16.mxu0 0
        %1838 = vmatpush2.bf16.msra.mxu0 0
        %1839 = vmatprep.subr.bf16.mxu0 0
        %1840 = vmatpush2.bf16.msra.mxu0 0
        %1841 = vmatprep.subr.bf16.mxu0 0
        %1842 = vmatpush2.bf16.msra.mxu0 0
        %1843 = vmatprep.mubr.bf16.mxu0 0
        %1844 = vmatmul.mubr.bf16.gmra.mxu0 %v1806
        %v1845 = vpop.f32.mrf.mxu0
        %v1846 = vadd.f32 0.0, %v1845
        %v1847 = vpop.f32.mrf.mxu0
        %v1848 = vpop.f32.mrf.mxu0
        %v1849 = vpop.f32.mrf.mxu0
        %1850 = vdwg.mxu0
        %1851 = vrot.lane.b32.xlu0 %v1743, 120
        %v1852 = vpop.permute.xlu0 %1851
        %1853 = vrot.lane.b32.xlu0 %v1743, 88
        %v1854 = vpop.permute.xlu0 %1853
        %v1856 = vsel %vm1289, %v1852, 0
        %v1859 = vsel %vm1289, %v1854, 0
        %1861 = vmatprep.subr.bf16.mxu0 0
        %1862 = vmatpush1.bf16.xpose.msra.mxu0 0
        %1863 = vmatprep.subr.bf16.mxu0 0
        %1864 = vmatpush1.bf16.xpose.msra.mxu0 0
        %1865 = vmatprep.subr.bf16.mxu0 0
        %1866 = vmatpush1.bf16.xpose.msra.mxu0 0
        %1867 = vmatprep.subr.bf16.mxu0 0
        %1868 = vmatpush1.bf16.xpose.msra.mxu0 0
        %1869 = vmatprep.subr.bf16.mxu0 0
        %1870 = vmatpush1.bf16.xpose.msra.mxu0 0
        %1871 = vmatprep.subr.bf16.mxu0 0
        %1872 = vmatpush1.bf16.xpose.msra.mxu0 0
        %1873 = vmatprep.subr.bf16.mxu0 0
        %1874 = vmatpush1.bf16.xpose.msra.mxu0 0
        %1875 = vmatprep.subr.bf16.mxu0 0
        %1876 = vmatpush1.bf16.xpose.msra.mxu0 %v1859
        %1877 = vmatprep.subr.bf16.mxu0 0
        %1878 = vmatpush2.bf16.xpose.msra.mxu0 0
        %1879 = vmatprep.subr.bf16.mxu0 0
        %1880 = vmatpush2.bf16.xpose.msra.mxu0 0
        %1881 = vmatprep.subr.bf16.mxu0 0
        %1882 = vmatpush2.bf16.xpose.msra.mxu0 0
        %1883 = vmatprep.subr.bf16.mxu0 0
        %1884 = vmatpush2.bf16.xpose.msra.mxu0 0
        %1885 = vmatprep.subr.bf16.mxu0 0
        %1886 = vmatpush2.bf16.xpose.msra.mxu0 0
        %1887 = vmatprep.subr.bf16.mxu0 0
        %1888 = vmatpush2.bf16.xpose.msra.mxu0 0
        %1889 = vmatprep.subr.bf16.mxu0 0
        %1890 = vmatpush2.bf16.xpose.msra.mxu0 0
        %1891 = vmatprep.subr.bf16.mxu0 0
        %1892 = vmatpush2.bf16.xpose.msra.mxu0 0
        %1893 = vmatprep.mubr.bf16.mxu0 0
        %1894 = vmatmul.mubr.bf16.gmra.mxu0 %v1856
        %v1895 = vpop.f32.mrf.mxu0
        %v1896 = vadd.f32 0.0, %v1895
        %v1897 = vpop.f32.mrf.mxu0
        %v1898 = vpop.f32.mrf.mxu0
        %v1899 = vpop.f32.mrf.mxu0
        %1900 = vdwg.mxu0
        %v1901 = vsel %vm1289, %v1896, -inf
        %1902 = vmax.xlane.f32.xlu0 %v1901
        %v1903 = vpop.xlane.xlu0 %1902
        %v1904 = vsub.f32 %v1896, %v1903
        %v1905 = vmul.f32 %v1904, 1.442695
        %v1906 = vpow.pop %v1905
        %v1907 = vsel %vm1289, %v1906, 0.0
        %1908 = vadd.xlane.f32.xlu0 %v1907
        %v1909 = vpop.xlane.xlu0 %1908
        %v1910 = vrcp.pop %v1909
        %v1911 = vmul.f32 %v1906, %v1910
        %v1912 = vpack.c.bf16 %v1911, %v1911
        %1913 = vrot.lane.b32.xlu0 %v1804, 120
        %v1914 = vpop.permute.xlu0 %1913
        %v1916 = vsel %vm1289, %v1912, 0
        %v1919 = vsel %vm1351, %v1914, 0
        %1921 = vmatprep.subr.bf16.mxu0 0
        %1922 = vmatpush1.bf16.msra.mxu0 0
        %1923 = vmatprep.subr.bf16.mxu0 0
        %1924 = vmatpush1.bf16.msra.mxu0 0
        %1925 = vmatprep.subr.bf16.mxu0 0
        %1926 = vmatpush1.bf16.msra.mxu0 0
        %1927 = vmatprep.subr.bf16.mxu0 0
        %1928 = vmatpush1.bf16.msra.mxu0 0
        %1929 = vmatprep.subr.bf16.mxu0 0
        %1930 = vmatpush1.bf16.msra.mxu0 0
        %1931 = vmatprep.subr.bf16.mxu0 0
        %1932 = vmatpush1.bf16.msra.mxu0 0
        %1933 = vmatprep.subr.bf16.mxu0 0
        %1934 = vmatpush1.bf16.msra.mxu0 0
        %1935 = vmatprep.subr.bf16.mxu0 0
        %1936 = vmatpush1.bf16.msra.mxu0 %v1919
        %1937 = vmatprep.subr.bf16.mxu0 0
        %1938 = vmatpush2.bf16.msra.mxu0 0
        %1939 = vmatprep.subr.bf16.mxu0 0
        %1940 = vmatpush2.bf16.msra.mxu0 0
        %1941 = vmatprep.subr.bf16.mxu0 0
        %1942 = vmatpush2.bf16.msra.mxu0 0
        %1943 = vmatprep.subr.bf16.mxu0 0
        %1944 = vmatpush2.bf16.msra.mxu0 0
        %1945 = vmatprep.subr.bf16.mxu0 0
        %1946 = vmatpush2.bf16.msra.mxu0 0
        %1947 = vmatprep.subr.bf16.mxu0 0
        %1948 = vmatpush2.bf16.msra.mxu0 0
        %1949 = vmatprep.subr.bf16.mxu0 0
        %1950 = vmatpush2.bf16.msra.mxu0 0
        %1951 = vmatprep.subr.bf16.mxu0 0
        %1952 = vmatpush2.bf16.msra.mxu0 0
        %1953 = vmatprep.mubr.bf16.mxu0 0
        %1954 = vmatmul.mubr.bf16.gmra.mxu0 %v1916
        %v1955 = vpop.f32.mrf.mxu0
        %v1956 = vadd.f32 0.0, %v1955
        %v1957 = vpop.f32.mrf.mxu0
        %v1958 = vpop.f32.mrf.mxu0
        %v1959 = vpop.f32.mrf.mxu0
        %1960 = vdwg.mxu0
        %1961 = vrot.lane.b32.xlu0 %v1743, 112
        %v1962 = vpop.permute.xlu0 %1961
        %1963 = vrot.lane.b32.xlu0 %v1743, 80
        %v1964 = vpop.permute.xlu0 %1963
        %v1966 = vsel %vm1289, %v1962, 0
        %v1969 = vsel %vm1289, %v1964, 0
        %1971 = vmatprep.subr.bf16.mxu0 0
        %1972 = vmatpush1.bf16.xpose.msra.mxu0 0
        %1973 = vmatprep.subr.bf16.mxu0 0
        %1974 = vmatpush1.bf16.xpose.msra.mxu0 0
        %1975 = vmatprep.subr.bf16.mxu0 0
        %1976 = vmatpush1.bf16.xpose.msra.mxu0 0
        %1977 = vmatprep.subr.bf16.mxu0 0
        %1978 = vmatpush1.bf16.xpose.msra.mxu0 0
        %1979 = vmatprep.subr.bf16.mxu0 0
        %1980 = vmatpush1.bf16.xpose.msra.mxu0 0
        %1981 = vmatprep.subr.bf16.mxu0 0
        %1982 = vmatpush1.bf16.xpose.msra.mxu0 0
        %1983 = vmatprep.subr.bf16.mxu0 0
        %1984 = vmatpush1.bf16.xpose.msra.mxu0 0
        %1985 = vmatprep.subr.bf16.mxu0 0
        %1986 = vmatpush1.bf16.xpose.msra.mxu0 %v1969
        %1987 = vmatprep.subr.bf16.mxu0 0
        %1988 = vmatpush2.bf16.xpose.msra.mxu0 0
        %1989 = vmatprep.subr.bf16.mxu0 0
        %1990 = vmatpush2.bf16.xpose.msra.mxu0 0
        %1991 = vmatprep.subr.bf16.mxu0 0
        %1992 = vmatpush2.bf16.xpose.msra.mxu0 0
        %1993 = vmatprep.subr.bf16.mxu0 0
        %1994 = vmatpush2.bf16.xpose.msra.mxu0 0
        %1995 = vmatprep.subr.bf16.mxu0 0
        %1996 = vmatpush2.bf16.xpose.msra.mxu0 0
        %1997 = vmatprep.subr.bf16.mxu0 0
        %1998 = vmatpush2.bf16.xpose.msra.mxu0 0
        %1999 = vmatprep.subr.bf16.mxu0 0
        %2000 = vmatpush2.bf16.xpose.msra.mxu0 0
        %2001 = vmatprep.subr.bf16.mxu0 0
        %2002 = vmatpush2.bf16.xpose.msra.mxu0 0
        %2003 = vmatprep.mubr.bf16.mxu0 0
        %2004 = vmatmul.mubr.bf16.gmra.mxu0 %v1966
        %v2005 = vpop.f32.mrf.mxu0
        %v2006 = vadd.f32 0.0, %v2005
        %v2007 = vpop.f32.mrf.mxu0
        %v2008 = vpop.f32.mrf.mxu0
        %v2009 = vpop.f32.mrf.mxu0
        %2010 = vdwg.mxu0
        %v2011 = vsel %vm1289, %v2006, -inf
        %2012 = vmax.xlane.f32.xlu0 %v2011
        %v2013 = vpop.xlane.xlu0 %2012
        %v2014 = vsub.f32 %v2006, %v2013
        %v2015 = vmul.f32 %v2014, 1.442695
        %v2016 = vpow.pop %v2015
        %v2017 = vsel %vm1289, %v2016, 0.0
        %2018 = vadd.xlane.f32.xlu0 %v2017
        %v2019 = vpop.xlane.xlu0 %2018
        %v2020 = vrcp.pop %v2019
        %v2021 = vmul.f32 %v2016, %v2020
        %v2022 = vpack.c.bf16 %v2021, %v2021
        %2023 = vrot.lane.b32.xlu0 %v1804, 112
        %v2024 = vpop.permute.xlu0 %2023
        %v2026 = vsel %vm1289, %v2022, 0
        %v2029 = vsel %vm1351, %v2024, 0
        %2031 = vmatprep.subr.bf16.mxu0 0
        %2032 = vmatpush1.bf16.msra.mxu0 0
        %2033 = vmatprep.subr.bf16.mxu0 0
        %2034 = vmatpush1.bf16.msra.mxu0 0
        %2035 = vmatprep.subr.bf16.mxu0 0
        %2036 = vmatpush1.bf16.msra.mxu0 0
        %2037 = vmatprep.subr.bf16.mxu0 0
        %2038 = vmatpush1.bf16.msra.mxu0 0
        %2039 = vmatprep.subr.bf16.mxu0 0
        %2040 = vmatpush1.bf16.msra.mxu0 0
        %2041 = vmatprep.subr.bf16.mxu0 0
        %2042 = vmatpush1.bf16.msra.mxu0 0
        %2043 = vmatprep.subr.bf16.mxu0 0
        %2044 = vmatpush1.bf16.msra.mxu0 0
        %2045 = vmatprep.subr.bf16.mxu0 0
        %2046 = vmatpush1.bf16.msra.mxu0 %v2029
        %2047 = vmatprep.subr.bf16.mxu0 0
        %2048 = vmatpush2.bf16.msra.mxu0 0
        %2049 = vmatprep.subr.bf16.mxu0 0
        %2050 = vmatpush2.bf16.msra.mxu0 0
        %2051 = vmatprep.subr.bf16.mxu0 0
        %2052 = vmatpush2.bf16.msra.mxu0 0
        %2053 = vmatprep.subr.bf16.mxu0 0
        %2054 = vmatpush2.bf16.msra.mxu0 0
        %2055 = vmatprep.subr.bf16.mxu0 0
        %2056 = vmatpush2.bf16.msra.mxu0 0
        %2057 = vmatprep.subr.bf16.mxu0 0
        %2058 = vmatpush2.bf16.msra.mxu0 0
        %2059 = vmatprep.subr.bf16.mxu0 0
        %2060 = vmatpush2.bf16.msra.mxu0 0
        %2061 = vmatprep.subr.bf16.mxu0 0
        %2062 = vmatpush2.bf16.msra.mxu0 0
        %2063 = vmatprep.mubr.bf16.mxu0 0
        %2064 = vmatmul.mubr.bf16.gmra.mxu0 %v2026
        %v2065 = vpop.f32.mrf.mxu0
        %v2066 = vadd.f32 0.0, %v2065
        %v2067 = vpop.f32.mrf.mxu0
        %v2068 = vpop.f32.mrf.mxu0
        %v2069 = vpop.f32.mrf.mxu0
        %2070 = vdwg.mxu0
        %2071 = vrot.lane.b32.xlu0 %v1743, 104
        %v2072 = vpop.permute.xlu0 %2071
        %2073 = vrot.lane.b32.xlu0 %v1743, 72
        %v2074 = vpop.permute.xlu0 %2073
        %v2076 = vsel %vm1289, %v2072, 0
        %v2079 = vsel %vm1289, %v2074, 0
        %2081 = vmatprep.subr.bf16.mxu0 0
        %2082 = vmatpush1.bf16.xpose.msra.mxu0 0
        %2083 = vmatprep.subr.bf16.mxu0 0
        %2084 = vmatpush1.bf16.xpose.msra.mxu0 0
        %2085 = vmatprep.subr.bf16.mxu0 0
        %2086 = vmatpush1.bf16.xpose.msra.mxu0 0
        %2087 = vmatprep.subr.bf16.mxu0 0
        %2088 = vmatpush1.bf16.xpose.msra.mxu0 0
        %2089 = vmatprep.subr.bf16.mxu0 0
        %2090 = vmatpush1.bf16.xpose.msra.mxu0 0
        %2091 = vmatprep.subr.bf16.mxu0 0
        %2092 = vmatpush1.bf16.xpose.msra.mxu0 0
        %2093 = vmatprep.subr.bf16.mxu0 0
        %2094 = vmatpush1.bf16.xpose.msra.mxu0 0
        %2095 = vmatprep.subr.bf16.mxu0 0
        %2096 = vmatpush1.bf16.xpose.msra.mxu0 %v2079
        %2097 = vmatprep.subr.bf16.mxu0 0
        %2098 = vmatpush2.bf16.xpose.msra.mxu0 0
        %2099 = vmatprep.subr.bf16.mxu0 0
        %2100 = vmatpush2.bf16.xpose.msra.mxu0 0
        %2101 = vmatprep.subr.bf16.mxu0 0
        %2102 = vmatpush2.bf16.xpose.msra.mxu0 0
        %2103 = vmatprep.subr.bf16.mxu0 0
        %2104 = vmatpush2.bf16.xpose.msra.mxu0 0
        %2105 = vmatprep.subr.bf16.mxu0 0
        %2106 = vmatpush2.bf16.xpose.msra.mxu0 0
        %2107 = vmatprep.subr.bf16.mxu0 0
        %2108 = vmatpush2.bf16.xpose.msra.mxu0 0
        %2109 = vmatprep.subr.bf16.mxu0 0
        %2110 = vmatpush2.bf16.xpose.msra.mxu0 0
        %2111 = vmatprep.subr.bf16.mxu0 0
        %2112 = vmatpush2.bf16.xpose.msra.mxu0 0
        %2113 = vmatprep.mubr.bf16.mxu0 0
        %2114 = vmatmul.mubr.bf16.gmra.mxu0 %v2076
        %v2115 = vpop.f32.mrf.mxu0
        %v2116 = vadd.f32 0.0, %v2115
        %v2117 = vpop.f32.mrf.mxu0
        %v2118 = vpop.f32.mrf.mxu0
        %v2119 = vpop.f32.mrf.mxu0
        %2120 = vdwg.mxu0
        %v2121 = vsel %vm1289, %v2116, -inf
        %2122 = vmax.xlane.f32.xlu0 %v2121
        %v2123 = vpop.xlane.xlu0 %2122
        %v2124 = vsub.f32 %v2116, %v2123
        %v2125 = vmul.f32 %v2124, 1.442695
        %v2126 = vpow.pop %v2125
        %v2127 = vsel %vm1289, %v2126, 0.0
        %2128 = vadd.xlane.f32.xlu0 %v2127
        %v2129 = vpop.xlane.xlu0 %2128
        %v2130 = vrcp.pop %v2129
        %v2131 = vmul.f32 %v2126, %v2130
        %v2132 = vpack.c.bf16 %v2131, %v2131
        %2133 = vrot.lane.b32.xlu0 %v1804, 104
        %v2134 = vpop.permute.xlu0 %2133
        %v2136 = vsel %vm1289, %v2132, 0
        %v2139 = vsel %vm1351, %v2134, 0
        %2141 = vmatprep.subr.bf16.mxu0 0
        %2142 = vmatpush1.bf16.msra.mxu0 0
        %2143 = vmatprep.subr.bf16.mxu0 0
        %2144 = vmatpush1.bf16.msra.mxu0 0
        %2145 = vmatprep.subr.bf16.mxu0 0
        %2146 = vmatpush1.bf16.msra.mxu0 0
        %2147 = vmatprep.subr.bf16.mxu0 0
        %2148 = vmatpush1.bf16.msra.mxu0 0
        %2149 = vmatprep.subr.bf16.mxu0 0
        %2150 = vmatpush1.bf16.msra.mxu0 0
        %2151 = vmatprep.subr.bf16.mxu0 0
        %2152 = vmatpush1.bf16.msra.mxu0 0
        %2153 = vmatprep.subr.bf16.mxu0 0
        %2154 = vmatpush1.bf16.msra.mxu0 0
        %2155 = vmatprep.subr.bf16.mxu0 0
        %2156 = vmatpush1.bf16.msra.mxu0 %v2139
        %2157 = vmatprep.subr.bf16.mxu0 0
        %2158 = vmatpush2.bf16.msra.mxu0 0
        %2159 = vmatprep.subr.bf16.mxu0 0
        %2160 = vmatpush2.bf16.msra.mxu0 0
        %2161 = vmatprep.subr.bf16.mxu0 0
        %2162 = vmatpush2.bf16.msra.mxu0 0
        %2163 = vmatprep.subr.bf16.mxu0 0
        %2164 = vmatpush2.bf16.msra.mxu0 0
        %2165 = vmatprep.subr.bf16.mxu0 0
        %2166 = vmatpush2.bf16.msra.mxu0 0
        %2167 = vmatprep.subr.bf16.mxu0 0
        %2168 = vmatpush2.bf16.msra.mxu0 0
        %2169 = vmatprep.subr.bf16.mxu0 0
        %2170 = vmatpush2.bf16.msra.mxu0 0
        %2171 = vmatprep.subr.bf16.mxu0 0
        %2172 = vmatpush2.bf16.msra.mxu0 0
        %2173 = vmatprep.mubr.bf16.mxu0 0
        %2174 = vmatmul.mubr.bf16.gmra.mxu0 %v2136
        %v2175 = vpop.f32.mrf.mxu0
        %v2176 = vadd.f32 0.0, %v2175
        %v2177 = vpop.f32.mrf.mxu0
        %v2178 = vpop.f32.mrf.mxu0
        %v2179 = vpop.f32.mrf.mxu0
        %2180 = vdwg.mxu0
        %2182 = vrot.lane.b32.xlu0 %v1956, 8
        %v2183 = vpop.permute.xlu0 %2182
        %2186 = vrot.lane.b32.xlu0 %v2066, 16
        %v2187 = vpop.permute.xlu0 %2186
        %2190 = vrot.lane.b32.xlu0 %v2176, 24
        %v2191 = vpop.permute.xlu0 %2190
        %v2193 = vsel %vm1289, %v1846, %v2183
        %v2194 = vsel %vm1739, %v2193, %v2187
        %v2195 = vsel %vm1741, %v2194, %v2191
        %v2196 = vpack.c.bf16 %v2195, %v1742
        %v2198 = vlaneseq
        %v2199 = vshrl.u32 %v2198, 7
        %v2200 = vsub.s32 0, %v2199
        %v2201 = vrot.slane %v948, %v2200
        %v2207 = vunpack.c.l.b16 %v944
        %v2208 = vunpack.c.l.b16 %v945
        %v2209 = vunpack.c.l.b16 %v946
        %v2210 = vunpack.c.l.b16 %v947
        %v2211 = vpack.c.b16 %v2208, %v2207
        %v2212 = vpack.c.b16 %v2210, %v2209
        %v2216 = vsel %vm1013, %v2196, 0
        %2218 = vmatprep.subr.bf16.mxu0 0
        %2219 = vmatpush1.bf16.msra.mxu0 0
        %2220 = vmatprep.subr.bf16.mxu0 0
        %2221 = vmatpush1.bf16.msra.mxu0 0
        %2222 = vmatprep.subr.bf16.mxu0 0
        %2223 = vmatpush1.bf16.msra.mxu0 0
        %2224 = vmatprep.subr.bf16.mxu0 0
        %2225 = vmatpush1.bf16.msra.mxu0 0
        %2226 = vmatprep.subr.bf16.mxu0 0
        %2227 = vmatpush1.bf16.msra.mxu0 0
        %2228 = vmatprep.subr.bf16.mxu0 0
        %2229 = vmatpush1.bf16.msra.mxu0 0
        %2230 = vmatprep.subr.bf16.mxu0 0
        %2231 = vmatpush1.bf16.msra.mxu0 %v2212
        %2232 = vmatprep.subr.bf16.mxu0 0
        %2233 = vmatpush1.bf16.msra.mxu0 %v2211
        %2234 = vmatprep.subr.bf16.mxu0 0
        %2235 = vmatpush2.bf16.msra.mxu0 0
        %2236 = vmatprep.subr.bf16.mxu0 0
        %2237 = vmatpush2.bf16.msra.mxu0 0
        %2238 = vmatprep.subr.bf16.mxu0 0
        %2239 = vmatpush2.bf16.msra.mxu0 0
        %2240 = vmatprep.subr.bf16.mxu0 0
        %2241 = vmatpush2.bf16.msra.mxu0 0
        %2242 = vmatprep.subr.bf16.mxu0 0
        %2243 = vmatpush2.bf16.msra.mxu0 0
        %2244 = vmatprep.subr.bf16.mxu0 0
        %2245 = vmatpush2.bf16.msra.mxu0 0
        %2246 = vmatprep.subr.bf16.mxu0 0
        %2247 = vmatpush2.bf16.msra.mxu0 0
        %2248 = vmatprep.subr.bf16.mxu0 0
        %2249 = vmatpush2.bf16.msra.mxu0 0
        %2250 = vmatprep.mubr.bf16.mxu0 0
        %2251 = vmatmul.mubr.bf16.gmra.mxu0 %v2216
        %v2252 = vpop.f32.mrf.mxu0
        %v2253 = vadd.f32 %v2201, %v2252
        %v2254 = vpop.f32.mrf.mxu0
        %v2255 = vpop.f32.mrf.mxu0
        %v2256 = vadd.f32 %v2201, %v2255
        %v2257 = vpop.f32.mrf.mxu0
        %2258 = vdwg.mxu0
        %v2259 = vadd.f32 %v1154, %v2253
        %v2260 = vadd.f32 %v1155, %v2256
        %v2261 = vsel %vm1013, %v2259, 0.0
        %2262 = vadd.xlane.f32.xlu0 %v2261
        %v2263 = vpop.xlane.xlu0 %2262
        %v2264 = vsel %vm1013, %v2260, 0.0
        %2265 = vadd.xlane.f32.xlu0 %v2264
        %v2266 = vpop.xlane.xlu0 %2265
        %v2267 = vrcp.pop 32.0
        %v2268 = vmul.f32 %v2263, %v2267
        %v2269 = vmul.f32 %v2266, %v2267
        %v2270 = vsub.f32 %v2259, %v2268
        %v2271 = vsub.f32 %v2260, %v2269
        %v2272 = vmul.f32 %v2270, %v2270
        %v2273 = vmul.f32 %v2271, %v2271
        %v2274 = vsel %vm1013, %v2272, 0.0
        %2275 = vadd.xlane.f32.xlu0 %v2274
        %v2276 = vpop.xlane.xlu0 %2275
        %v2277 = vsel %vm1013, %v2273, 0.0
        %2278 = vadd.xlane.f32.xlu0 %v2277
        %v2279 = vpop.xlane.xlu0 %2278
        %v2280 = vmul.f32 %v2276, %v2267
        %v2281 = vmul.f32 %v2279, %v2267
        %v2282 = vadd.f32 %v2280, 1e-05
        %v2283 = vadd.f32 %v2281, 1e-05
        %v2284 = vrsqrt.pop %v2282
        %v2285 = vrsqrt.pop %v2283
        %v2286 = vmul.f32 %v2270, %v2284
        %v2287 = vmul.f32 %v2271, %v2285
        %v2289 = vlaneseq
        %v2290 = vshrl.u32 %v2289, 7
        %v2291 = vsub.s32 0, %v2290
        %v2292 = vrot.slane %v983, %v2291
        %v2294 = vmul.f32 %v2286, %v2292
        %v2295 = vmul.f32 %v2287, %v2292
        %v2297 = vlaneseq
        %v2298 = vshrl.u32 %v2297, 7
        %v2299 = vsub.s32 0, %v2298
        %v2300 = vrot.slane %v984, %v2299
        %v2302 = vadd.f32 %v2294, %v2300
        %v2303 = vadd.f32 %v2295, %v2300
        %v2304 = vadd.f32 %v2302, %v924
        %v2305 = vadd.f32 %v2303, %v925
        %v2306 = vpack.c.bf16 %v2305, %v2304
        %v2308 = vlaneseq
        %v2309 = vshrl.u32 %v2308, 7
        %v2310 = vsub.s32 0, %v2309
        %v2311 = vrot.slane %v953, %v2310
        %v2317 = vunpack.c.l.b16 %v949
        %v2318 = vunpack.c.l.b16 %v950
        %v2319 = vunpack.c.l.b16 %v951
        %v2320 = vunpack.c.l.b16 %v952
        %v2321 = vpack.c.b16 %v2318, %v2317
        %v2322 = vpack.c.b16 %v2320, %v2319
        %v2326 = vsel %vm1013, %v2306, 0
        %2328 = vmatprep.subr.bf16.mxu0 0
        %2329 = vmatpush1.bf16.msra.mxu0 0
        %2330 = vmatprep.subr.bf16.mxu0 0
        %2331 = vmatpush1.bf16.msra.mxu0 0
        %2332 = vmatprep.subr.bf16.mxu0 0
        %2333 = vmatpush1.bf16.msra.mxu0 0
        %2334 = vmatprep.subr.bf16.mxu0 0
        %2335 = vmatpush1.bf16.msra.mxu0 0
        %2336 = vmatprep.subr.bf16.mxu0 0
        %2337 = vmatpush1.bf16.msra.mxu0 0
        %2338 = vmatprep.subr.bf16.mxu0 0
        %2339 = vmatpush1.bf16.msra.mxu0 0
        %2340 = vmatprep.subr.bf16.mxu0 0
        %2341 = vmatpush1.bf16.msra.mxu0 %v2322
        %2342 = vmatprep.subr.bf16.mxu0 0
        %2343 = vmatpush1.bf16.msra.mxu0 %v2321
        %2344 = vmatprep.subr.bf16.mxu0 0
        %2345 = vmatpush2.bf16.msra.mxu0 0
        %2346 = vmatprep.subr.bf16.mxu0 0
        %2347 = vmatpush2.bf16.msra.mxu0 0
        %2348 = vmatprep.subr.bf16.mxu0 0
        %2349 = vmatpush2.bf16.msra.mxu0 0
        %2350 = vmatprep.subr.bf16.mxu0 0
        %2351 = vmatpush2.bf16.msra.mxu0 0
        %2352 = vmatprep.subr.bf16.mxu0 0
        %2353 = vmatpush2.bf16.msra.mxu0 0
        %2354 = vmatprep.subr.bf16.mxu0 0
        %2355 = vmatpush2.bf16.msra.mxu0 0
        %2356 = vmatprep.subr.bf16.mxu0 0
        %2357 = vmatpush2.bf16.msra.mxu0 0
        %2358 = vmatprep.subr.bf16.mxu0 0
        %2359 = vmatpush2.bf16.msra.mxu0 0
        %2360 = vmatprep.mubr.bf16.mxu0 0
        %2361 = vmatmul.mubr.bf16.gmra.mxu0 %v2326
        %v2362 = vpop.f32.mrf.mxu0
        %v2363 = vadd.f32 %v2311, %v2362
        %v2364 = vpop.f32.mrf.mxu0
        %v2365 = vpop.f32.mrf.mxu0
        %v2366 = vadd.f32 %v2311, %v2365
        %v2367 = vpop.f32.mrf.mxu0
        %2368 = vdwg.mxu0
        %v2369 = vpack.c.bf16 %v2366, %v2363
        %v2371 = vsel %vm1289, %v2369, 0
        %v2374 = vsel %vm1289, %v1069, 0
        %2376 = vmatprep.subr.bf16.mxu0 0
        %2377 = vmatpush1.bf16.xpose.msra.mxu0 0
        %2378 = vmatprep.subr.bf16.mxu0 0
        %2379 = vmatpush1.bf16.xpose.msra.mxu0 0
        %2380 = vmatprep.subr.bf16.mxu0 0
        %2381 = vmatpush1.bf16.xpose.msra.mxu0 0
        %2382 = vmatprep.subr.bf16.mxu0 0
        %2383 = vmatpush1.bf16.xpose.msra.mxu0 0
        %2384 = vmatprep.subr.bf16.mxu0 0
        %2385 = vmatpush1.bf16.xpose.msra.mxu0 0
        %2386 = vmatprep.subr.bf16.mxu0 0
        %2387 = vmatpush1.bf16.xpose.msra.mxu0 0
        %2388 = vmatprep.subr.bf16.mxu0 0
        %2389 = vmatpush1.bf16.xpose.msra.mxu0 0
        %2390 = vmatprep.subr.bf16.mxu0 0
        %2391 = vmatpush1.bf16.xpose.msra.mxu0 %v2374
        %2392 = vmatprep.subr.bf16.mxu0 0
        %2393 = vmatpush2.bf16.xpose.msra.mxu0 0
        %2394 = vmatprep.subr.bf16.mxu0 0
        %2395 = vmatpush2.bf16.xpose.msra.mxu0 0
        %2396 = vmatprep.subr.bf16.mxu0 0
        %2397 = vmatpush2.bf16.xpose.msra.mxu0 0
        %2398 = vmatprep.subr.bf16.mxu0 0
        %2399 = vmatpush2.bf16.xpose.msra.mxu0 0
        %2400 = vmatprep.subr.bf16.mxu0 0
        %2401 = vmatpush2.bf16.xpose.msra.mxu0 0
        %2402 = vmatprep.subr.bf16.mxu0 0
        %2403 = vmatpush2.bf16.xpose.msra.mxu0 0
        %2404 = vmatprep.subr.bf16.mxu0 0
        %2405 = vmatpush2.bf16.xpose.msra.mxu0 0
        %2406 = vmatprep.subr.bf16.mxu0 0
        %2407 = vmatpush2.bf16.xpose.msra.mxu0 0
        %2408 = vmatprep.mubr.bf16.mxu0 0
        %2409 = vmatmul.mubr.bf16.gmra.mxu0 %v2371
        %v2410 = vpop.f32.mrf.mxu0
        %v2411 = vadd.f32 0.0, %v2410
        %v2412 = vpop.f32.mrf.mxu0
        %v2413 = vpop.f32.mrf.mxu0
        %v2414 = vpop.f32.mrf.mxu0
        %2415 = vdwg.mxu0
        %v2416 = vsel %vm1739, %v2411, -inf
        %2417 = vmax.xlane.f32.xlu0 %v2416
        %v2418 = vpop.xlane.xlu0 %2417
        %v2419 = vsub.f32 %v2411, %v2418
        %v2420 = vmul.f32 %v2419, 1.442695
        %v2421 = vpow.pop %v2420
        %v2422 = vsel %vm1739, %v2421, 0.0
        %2423 = vadd.xlane.f32.xlu0 %v2422
        %v2424 = vpop.xlane.xlu0 %2423
        %v2425 = vrcp.pop %v2424
        %v2426 = vmul.f32 %v2421, %v2425
        %v2427 = vpack.c.bf16 %v2426, %v2426
        %v2429 = vsel %vm1739, %v2427, 0
        %2431 = vmatprep.subr.bf16.mxu0 0
        %2432 = vmatpush1.bf16.msra.mxu0 0
        %2433 = vmatprep.subr.bf16.mxu0 0
        %2434 = vmatpush1.bf16.msra.mxu0 0
        %2435 = vmatprep.subr.bf16.mxu0 0
        %2436 = vmatpush1.bf16.msra.mxu0 0
        %2437 = vmatprep.subr.bf16.mxu0 0
        %2438 = vmatpush1.bf16.msra.mxu0 0
        %2439 = vmatprep.subr.bf16.mxu0 0
        %2440 = vmatpush1.bf16.msra.mxu0 0
        %2441 = vmatprep.subr.bf16.mxu0 0
        %2442 = vmatpush1.bf16.msra.mxu0 0
        %2443 = vmatprep.subr.bf16.mxu0 0
        %2444 = vmatpush1.bf16.msra.mxu0 0
        %2445 = vmatprep.subr.bf16.mxu0 0
        %2446 = vmatpush1.bf16.msra.mxu0 %v1146
        %2447 = vmatprep.subr.bf16.mxu0 0
        %2448 = vmatpush2.bf16.msra.mxu0 0
        %2449 = vmatprep.subr.bf16.mxu0 0
        %2450 = vmatpush2.bf16.msra.mxu0 0
        %2451 = vmatprep.subr.bf16.mxu0 0
        %2452 = vmatpush2.bf16.msra.mxu0 0
        %2453 = vmatprep.subr.bf16.mxu0 0
        %2454 = vmatpush2.bf16.msra.mxu0 0
        %2455 = vmatprep.subr.bf16.mxu0 0
        %2456 = vmatpush2.bf16.msra.mxu0 0
        %2457 = vmatprep.subr.bf16.mxu0 0
        %2458 = vmatpush2.bf16.msra.mxu0 0
        %2459 = vmatprep.subr.bf16.mxu0 0
        %2460 = vmatpush2.bf16.msra.mxu0 0
        %2461 = vmatprep.subr.bf16.mxu0 0
        %2462 = vmatpush2.bf16.msra.mxu0 0
        %2463 = vmatprep.mubr.bf16.mxu0 0
        %2464 = vmatmul.mubr.bf16.gmra.mxu0 %v2429
        %v2465 = vpop.f32.mrf.mxu0
        %v2466 = vadd.f32 0.0, %v2465
        %v2467 = vpop.f32.mrf.mxu0
        %v2468 = vpop.f32.mrf.mxu0
        %v2469 = vpop.f32.mrf.mxu0
        %2470 = vdwg.mxu0
        %2472 = vrot.lane.b32.xlu0 %v2369, 120
        %v2473 = vpop.permute.xlu0 %2472
        %2475 = vrot.lane.b32.xlu0 %v1069, 120
        %v2476 = vpop.permute.xlu0 %2475
        %v2478 = vsel %vm1289, %v2473, 0
        %v2481 = vsel %vm1289, %v2476, 0
        %2483 = vmatprep.subr.bf16.mxu0 0
        %2484 = vmatpush1.bf16.xpose.msra.mxu0 0
        %2485 = vmatprep.subr.bf16.mxu0 0
        %2486 = vmatpush1.bf16.xpose.msra.mxu0 0
        %2487 = vmatprep.subr.bf16.mxu0 0
        %2488 = vmatpush1.bf16.xpose.msra.mxu0 0
        %2489 = vmatprep.subr.bf16.mxu0 0
        %2490 = vmatpush1.bf16.xpose.msra.mxu0 0
        %2491 = vmatprep.subr.bf16.mxu0 0
        %2492 = vmatpush1.bf16.xpose.msra.mxu0 0
        %2493 = vmatprep.subr.bf16.mxu0 0
        %2494 = vmatpush1.bf16.xpose.msra.mxu0 0
        %2495 = vmatprep.subr.bf16.mxu0 0
        %2496 = vmatpush1.bf16.xpose.msra.mxu0 0
        %2497 = vmatprep.subr.bf16.mxu0 0
        %2498 = vmatpush1.bf16.xpose.msra.mxu0 %v2481
        %2499 = vmatprep.subr.bf16.mxu0 0
        %2500 = vmatpush2.bf16.xpose.msra.mxu0 0
        %2501 = vmatprep.subr.bf16.mxu0 0
        %2502 = vmatpush2.bf16.xpose.msra.mxu0 0
        %2503 = vmatprep.subr.bf16.mxu0 0
        %2504 = vmatpush2.bf16.xpose.msra.mxu0 0
        %2505 = vmatprep.subr.bf16.mxu0 0
        %2506 = vmatpush2.bf16.xpose.msra.mxu0 0
        %2507 = vmatprep.subr.bf16.mxu0 0
        %2508 = vmatpush2.bf16.xpose.msra.mxu0 0
        %2509 = vmatprep.subr.bf16.mxu0 0
        %2510 = vmatpush2.bf16.xpose.msra.mxu0 0
        %2511 = vmatprep.subr.bf16.mxu0 0
        %2512 = vmatpush2.bf16.xpose.msra.mxu0 0
        %2513 = vmatprep.subr.bf16.mxu0 0
        %2514 = vmatpush2.bf16.xpose.msra.mxu0 0
        %2515 = vmatprep.mubr.bf16.mxu0 0
        %2516 = vmatmul.mubr.bf16.gmra.mxu0 %v2478
        %v2517 = vpop.f32.mrf.mxu0
        %v2518 = vadd.f32 0.0, %v2517
        %v2519 = vpop.f32.mrf.mxu0
        %v2520 = vpop.f32.mrf.mxu0
        %v2521 = vpop.f32.mrf.mxu0
        %2522 = vdwg.mxu0
        %v2523 = vsel %vm1739, %v2518, -inf
        %2524 = vmax.xlane.f32.xlu0 %v2523
        %v2525 = vpop.xlane.xlu0 %2524
        %v2526 = vsub.f32 %v2518, %v2525
        %v2527 = vmul.f32 %v2526, 1.442695
        %v2528 = vpow.pop %v2527
        %v2529 = vsel %vm1739, %v2528, 0.0
        %2530 = vadd.xlane.f32.xlu0 %v2529
        %v2531 = vpop.xlane.xlu0 %2530
        %v2532 = vrcp.pop %v2531
        %v2533 = vmul.f32 %v2528, %v2532
        %v2534 = vpack.c.bf16 %v2533, %v2533
        %2536 = vrot.lane.b32.xlu0 %v1146, 120
        %v2537 = vpop.permute.xlu0 %2536
        %v2540 = vsel %vm1739, %v2534, 0
        %2542 = vmatprep.subr.bf16.mxu0 0
        %2543 = vmatpush1.bf16.msra.mxu0 0
        %2544 = vmatprep.subr.bf16.mxu0 0
        %2545 = vmatpush1.bf16.msra.mxu0 0
        %2546 = vmatprep.subr.bf16.mxu0 0
        %2547 = vmatpush1.bf16.msra.mxu0 0
        %2548 = vmatprep.subr.bf16.mxu0 0
        %2549 = vmatpush1.bf16.msra.mxu0 0
        %2550 = vmatprep.subr.bf16.mxu0 0
        %2551 = vmatpush1.bf16.msra.mxu0 0
        %2552 = vmatprep.subr.bf16.mxu0 0
        %2553 = vmatpush1.bf16.msra.mxu0 0
        %2554 = vmatprep.subr.bf16.mxu0 0
        %2555 = vmatpush1.bf16.msra.mxu0 0
        %2556 = vmatprep.subr.bf16.mxu0 0
        %2557 = vmatpush1.bf16.msra.mxu0 %v2537
        %2558 = vmatprep.subr.bf16.mxu0 0
        %2559 = vmatpush2.bf16.msra.mxu0 0
        %2560 = vmatprep.subr.bf16.mxu0 0
        %2561 = vmatpush2.bf16.msra.mxu0 0
        %2562 = vmatprep.subr.bf16.mxu0 0
        %2563 = vmatpush2.bf16.msra.mxu0 0
        %2564 = vmatprep.subr.bf16.mxu0 0
        %2565 = vmatpush2.bf16.msra.mxu0 0
        %2566 = vmatprep.subr.bf16.mxu0 0
        %2567 = vmatpush2.bf16.msra.mxu0 0
        %2568 = vmatprep.subr.bf16.mxu0 0
        %2569 = vmatpush2.bf16.msra.mxu0 0
        %2570 = vmatprep.subr.bf16.mxu0 0
        %2571 = vmatpush2.bf16.msra.mxu0 0
        %2572 = vmatprep.subr.bf16.mxu0 0
        %2573 = vmatpush2.bf16.msra.mxu0 0
        %2574 = vmatprep.mubr.bf16.mxu0 0
        %2575 = vmatmul.mubr.bf16.gmra.mxu0 %v2540
        %v2576 = vpop.f32.mrf.mxu0
        %v2577 = vadd.f32 0.0, %v2576
        %v2578 = vpop.f32.mrf.mxu0
        %v2579 = vpop.f32.mrf.mxu0
        %v2580 = vpop.f32.mrf.mxu0
        %2581 = vdwg.mxu0
        %2582 = vrot.lane.b32.xlu0 %v2369, 112
        %v2583 = vpop.permute.xlu0 %2582
        %2584 = vrot.lane.b32.xlu0 %v1069, 112
        %v2585 = vpop.permute.xlu0 %2584
        %v2587 = vsel %vm1289, %v2583, 0
        %v2590 = vsel %vm1289, %v2585, 0
        %2592 = vmatprep.subr.bf16.mxu0 0
        %2593 = vmatpush1.bf16.xpose.msra.mxu0 0
        %2594 = vmatprep.subr.bf16.mxu0 0
        %2595 = vmatpush1.bf16.xpose.msra.mxu0 0
        %2596 = vmatprep.subr.bf16.mxu0 0
        %2597 = vmatpush1.bf16.xpose.msra.mxu0 0
        %2598 = vmatprep.subr.bf16.mxu0 0
        %2599 = vmatpush1.bf16.xpose.msra.mxu0 0
        %2600 = vmatprep.subr.bf16.mxu0 0
        %2601 = vmatpush1.bf16.xpose.msra.mxu0 0
        %2602 = vmatprep.subr.bf16.mxu0 0
        %2603 = vmatpush1.bf16.xpose.msra.mxu0 0
        %2604 = vmatprep.subr.bf16.mxu0 0
        %2605 = vmatpush1.bf16.xpose.msra.mxu0 0
        %2606 = vmatprep.subr.bf16.mxu0 0
        %2607 = vmatpush1.bf16.xpose.msra.mxu0 %v2590
        %2608 = vmatprep.subr.bf16.mxu0 0
        %2609 = vmatpush2.bf16.xpose.msra.mxu0 0
        %2610 = vmatprep.subr.bf16.mxu0 0
        %2611 = vmatpush2.bf16.xpose.msra.mxu0 0
        %2612 = vmatprep.subr.bf16.mxu0 0
        %2613 = vmatpush2.bf16.xpose.msra.mxu0 0
        %2614 = vmatprep.subr.bf16.mxu0 0
        %2615 = vmatpush2.bf16.xpose.msra.mxu0 0
        %2616 = vmatprep.subr.bf16.mxu0 0
        %2617 = vmatpush2.bf16.xpose.msra.mxu0 0
        %2618 = vmatprep.subr.bf16.mxu0 0
        %2619 = vmatpush2.bf16.xpose.msra.mxu0 0
        %2620 = vmatprep.subr.bf16.mxu0 0
        %2621 = vmatpush2.bf16.xpose.msra.mxu0 0
        %2622 = vmatprep.subr.bf16.mxu0 0
        %2623 = vmatpush2.bf16.xpose.msra.mxu0 0
        %2624 = vmatprep.mubr.bf16.mxu0 0
        %2625 = vmatmul.mubr.bf16.gmra.mxu0 %v2587
        %v2626 = vpop.f32.mrf.mxu0
        %v2627 = vadd.f32 0.0, %v2626
        %v2628 = vpop.f32.mrf.mxu0
        %v2629 = vpop.f32.mrf.mxu0
        %v2630 = vpop.f32.mrf.mxu0
        %2631 = vdwg.mxu0
        %v2632 = vsel %vm1739, %v2627, -inf
        %2633 = vmax.xlane.f32.xlu0 %v2632
        %v2634 = vpop.xlane.xlu0 %2633
        %v2635 = vsub.f32 %v2627, %v2634
        %v2636 = vmul.f32 %v2635, 1.442695
        %v2637 = vpow.pop %v2636
        %v2638 = vsel %vm1739, %v2637, 0.0
        %2639 = vadd.xlane.f32.xlu0 %v2638
        %v2640 = vpop.xlane.xlu0 %2639
        %v2641 = vrcp.pop %v2640
        %v2642 = vmul.f32 %v2637, %v2641
        %v2643 = vpack.c.bf16 %v2642, %v2642
        %2644 = vrot.lane.b32.xlu0 %v1146, 112
        %v2645 = vpop.permute.xlu0 %2644
        %v2648 = vsel %vm1739, %v2643, 0
        %2650 = vmatprep.subr.bf16.mxu0 0
        %2651 = vmatpush1.bf16.msra.mxu0 0
        %2652 = vmatprep.subr.bf16.mxu0 0
        %2653 = vmatpush1.bf16.msra.mxu0 0
        %2654 = vmatprep.subr.bf16.mxu0 0
        %2655 = vmatpush1.bf16.msra.mxu0 0
        %2656 = vmatprep.subr.bf16.mxu0 0
        %2657 = vmatpush1.bf16.msra.mxu0 0
        %2658 = vmatprep.subr.bf16.mxu0 0
        %2659 = vmatpush1.bf16.msra.mxu0 0
        %2660 = vmatprep.subr.bf16.mxu0 0
        %2661 = vmatpush1.bf16.msra.mxu0 0
        %2662 = vmatprep.subr.bf16.mxu0 0
        %2663 = vmatpush1.bf16.msra.mxu0 0
        %2664 = vmatprep.subr.bf16.mxu0 0
        %2665 = vmatpush1.bf16.msra.mxu0 %v2645
        %2666 = vmatprep.subr.bf16.mxu0 0
        %2667 = vmatpush2.bf16.msra.mxu0 0
        %2668 = vmatprep.subr.bf16.mxu0 0
        %2669 = vmatpush2.bf16.msra.mxu0 0
        %2670 = vmatprep.subr.bf16.mxu0 0
        %2671 = vmatpush2.bf16.msra.mxu0 0
        %2672 = vmatprep.subr.bf16.mxu0 0
        %2673 = vmatpush2.bf16.msra.mxu0 0
        %2674 = vmatprep.subr.bf16.mxu0 0
        %2675 = vmatpush2.bf16.msra.mxu0 0
        %2676 = vmatprep.subr.bf16.mxu0 0
        %2677 = vmatpush2.bf16.msra.mxu0 0
        %2678 = vmatprep.subr.bf16.mxu0 0
        %2679 = vmatpush2.bf16.msra.mxu0 0
        %2680 = vmatprep.subr.bf16.mxu0 0
        %2681 = vmatpush2.bf16.msra.mxu0 0
        %2682 = vmatprep.mubr.bf16.mxu0 0
        %2683 = vmatmul.mubr.bf16.gmra.mxu0 %v2648
        %v2684 = vpop.f32.mrf.mxu0
        %v2685 = vadd.f32 0.0, %v2684
        %v2686 = vpop.f32.mrf.mxu0
        %v2687 = vpop.f32.mrf.mxu0
        %v2688 = vpop.f32.mrf.mxu0
        %2689 = vdwg.mxu0
        %2690 = vrot.lane.b32.xlu0 %v2369, 104
        %v2691 = vpop.permute.xlu0 %2690
        %2692 = vrot.lane.b32.xlu0 %v1069, 104
        %v2693 = vpop.permute.xlu0 %2692
        %v2695 = vsel %vm1289, %v2691, 0
        %v2698 = vsel %vm1289, %v2693, 0
        %2700 = vmatprep.subr.bf16.mxu0 0
        %2701 = vmatpush1.bf16.xpose.msra.mxu0 0
        %2702 = vmatprep.subr.bf16.mxu0 0
        %2703 = vmatpush1.bf16.xpose.msra.mxu0 0
        %2704 = vmatprep.subr.bf16.mxu0 0
        %2705 = vmatpush1.bf16.xpose.msra.mxu0 0
        %2706 = vmatprep.subr.bf16.mxu0 0
        %2707 = vmatpush1.bf16.xpose.msra.mxu0 0
        %2708 = vmatprep.subr.bf16.mxu0 0
        %2709 = vmatpush1.bf16.xpose.msra.mxu0 0
        %2710 = vmatprep.subr.bf16.mxu0 0
        %2711 = vmatpush1.bf16.xpose.msra.mxu0 0
        %2712 = vmatprep.subr.bf16.mxu0 0
        %2713 = vmatpush1.bf16.xpose.msra.mxu0 0
        %2714 = vmatprep.subr.bf16.mxu0 0
        %2715 = vmatpush1.bf16.xpose.msra.mxu0 %v2698
        %2716 = vmatprep.subr.bf16.mxu0 0
        %2717 = vmatpush2.bf16.xpose.msra.mxu0 0
        %2718 = vmatprep.subr.bf16.mxu0 0
        %2719 = vmatpush2.bf16.xpose.msra.mxu0 0
        %2720 = vmatprep.subr.bf16.mxu0 0
        %2721 = vmatpush2.bf16.xpose.msra.mxu0 0
        %2722 = vmatprep.subr.bf16.mxu0 0
        %2723 = vmatpush2.bf16.xpose.msra.mxu0 0
        %2724 = vmatprep.subr.bf16.mxu0 0
        %2725 = vmatpush2.bf16.xpose.msra.mxu0 0
        %2726 = vmatprep.subr.bf16.mxu0 0
        %2727 = vmatpush2.bf16.xpose.msra.mxu0 0
        %2728 = vmatprep.subr.bf16.mxu0 0
        %2729 = vmatpush2.bf16.xpose.msra.mxu0 0
        %2730 = vmatprep.subr.bf16.mxu0 0
        %2731 = vmatpush2.bf16.xpose.msra.mxu0 0
        %2732 = vmatprep.mubr.bf16.mxu0 0
        %2733 = vmatmul.mubr.bf16.gmra.mxu0 %v2695
        %v2734 = vpop.f32.mrf.mxu0
        %v2735 = vadd.f32 0.0, %v2734
        %v2736 = vpop.f32.mrf.mxu0
        %v2737 = vpop.f32.mrf.mxu0
        %v2738 = vpop.f32.mrf.mxu0
        %2739 = vdwg.mxu0
        %v2740 = vsel %vm1739, %v2735, -inf
        %2741 = vmax.xlane.f32.xlu0 %v2740
        %v2742 = vpop.xlane.xlu0 %2741
        %v2743 = vsub.f32 %v2735, %v2742
        %v2744 = vmul.f32 %v2743, 1.442695
        %v2745 = vpow.pop %v2744
        %v2746 = vsel %vm1739, %v2745, 0.0
        %2747 = vadd.xlane.f32.xlu0 %v2746
        %v2748 = vpop.xlane.xlu0 %2747
        %v2749 = vrcp.pop %v2748
        %v2750 = vmul.f32 %v2745, %v2749
        %v2751 = vpack.c.bf16 %v2750, %v2750
        %2752 = vrot.lane.b32.xlu0 %v1146, 104
        %v2753 = vpop.permute.xlu0 %2752
        %v2756 = vsel %vm1739, %v2751, 0
        %2758 = vmatprep.subr.bf16.mxu0 0
        %2759 = vmatpush1.bf16.msra.mxu0 0
        %2760 = vmatprep.subr.bf16.mxu0 0
        %2761 = vmatpush1.bf16.msra.mxu0 0
        %2762 = vmatprep.subr.bf16.mxu0 0
        %2763 = vmatpush1.bf16.msra.mxu0 0
        %2764 = vmatprep.subr.bf16.mxu0 0
        %2765 = vmatpush1.bf16.msra.mxu0 0
        %2766 = vmatprep.subr.bf16.mxu0 0
        %2767 = vmatpush1.bf16.msra.mxu0 0
        %2768 = vmatprep.subr.bf16.mxu0 0
        %2769 = vmatpush1.bf16.msra.mxu0 0
        %2770 = vmatprep.subr.bf16.mxu0 0
        %2771 = vmatpush1.bf16.msra.mxu0 0
        %2772 = vmatprep.subr.bf16.mxu0 0
        %2773 = vmatpush1.bf16.msra.mxu0 %v2753
        %2774 = vmatprep.subr.bf16.mxu0 0
        %2775 = vmatpush2.bf16.msra.mxu0 0
        %2776 = vmatprep.subr.bf16.mxu0 0
        %2777 = vmatpush2.bf16.msra.mxu0 0
        %2778 = vmatprep.subr.bf16.mxu0 0
        %2779 = vmatpush2.bf16.msra.mxu0 0
        %2780 = vmatprep.subr.bf16.mxu0 0
        %2781 = vmatpush2.bf16.msra.mxu0 0
        %2782 = vmatprep.subr.bf16.mxu0 0
        %2783 = vmatpush2.bf16.msra.mxu0 0
        %2784 = vmatprep.subr.bf16.mxu0 0
        %2785 = vmatpush2.bf16.msra.mxu0 0
        %2786 = vmatprep.subr.bf16.mxu0 0
        %2787 = vmatpush2.bf16.msra.mxu0 0
        %2788 = vmatprep.subr.bf16.mxu0 0
        %2789 = vmatpush2.bf16.msra.mxu0 0
        %2790 = vmatprep.mubr.bf16.mxu0 0
        %2791 = vmatmul.mubr.bf16.gmra.mxu0 %v2756
        %v2792 = vpop.f32.mrf.mxu0
        %v2793 = vadd.f32 0.0, %v2792
        %v2794 = vpop.f32.mrf.mxu0
        %v2795 = vpop.f32.mrf.mxu0
        %v2796 = vpop.f32.mrf.mxu0
        %2797 = vdwg.mxu0
        %2799 = vrot.lane.b32.xlu0 %v2577, 8
        %v2800 = vpop.permute.xlu0 %2799
        %2803 = vrot.lane.b32.xlu0 %v2685, 16
        %v2804 = vpop.permute.xlu0 %2803
        %2807 = vrot.lane.b32.xlu0 %v2793, 24
        %v2808 = vpop.permute.xlu0 %2807
        %v2810 = vsel %vm1289, %v2466, %v2800
        %v2811 = vsel %vm1739, %v2810, %v2804
        %v2812 = vsel %vm1741, %v2811, %v2808
        %v2813 = vrot.slane %v2369, 4
        %v2815 = vsel %vm1289, %v2813, 0
        %v2818 = vsel %vm1289, %v1070, 0
        %2820 = vmatprep.subr.bf16.mxu0 0
        %2821 = vmatpush1.bf16.xpose.msra.mxu0 0
        %2822 = vmatprep.subr.bf16.mxu0 0
        %2823 = vmatpush1.bf16.xpose.msra.mxu0 0
        %2824 = vmatprep.subr.bf16.mxu0 0
        %2825 = vmatpush1.bf16.xpose.msra.mxu0 0
        %2826 = vmatprep.subr.bf16.mxu0 0
        %2827 = vmatpush1.bf16.xpose.msra.mxu0 0
        %2828 = vmatprep.subr.bf16.mxu0 0
        %2829 = vmatpush1.bf16.xpose.msra.mxu0 0
        %2830 = vmatprep.subr.bf16.mxu0 0
        %2831 = vmatpush1.bf16.xpose.msra.mxu0 0
        %2832 = vmatprep.subr.bf16.mxu0 0
        %2833 = vmatpush1.bf16.xpose.msra.mxu0 0
        %2834 = vmatprep.subr.bf16.mxu0 0
        %2835 = vmatpush1.bf16.xpose.msra.mxu0 %v2818
        %2836 = vmatprep.subr.bf16.mxu0 0
        %2837 = vmatpush2.bf16.xpose.msra.mxu0 0
        %2838 = vmatprep.subr.bf16.mxu0 0
        %2839 = vmatpush2.bf16.xpose.msra.mxu0 0
        %2840 = vmatprep.subr.bf16.mxu0 0
        %2841 = vmatpush2.bf16.xpose.msra.mxu0 0
        %2842 = vmatprep.subr.bf16.mxu0 0
        %2843 = vmatpush2.bf16.xpose.msra.mxu0 0
        %2844 = vmatprep.subr.bf16.mxu0 0
        %2845 = vmatpush2.bf16.xpose.msra.mxu0 0
        %2846 = vmatprep.subr.bf16.mxu0 0
        %2847 = vmatpush2.bf16.xpose.msra.mxu0 0
        %2848 = vmatprep.subr.bf16.mxu0 0
        %2849 = vmatpush2.bf16.xpose.msra.mxu0 0
        %2850 = vmatprep.subr.bf16.mxu0 0
        %2851 = vmatpush2.bf16.xpose.msra.mxu0 0
        %2852 = vmatprep.mubr.bf16.mxu0 0
        %2853 = vmatmul.mubr.bf16.gmra.mxu0 %v2815
        %v2854 = vpop.f32.mrf.mxu0
        %v2855 = vadd.f32 0.0, %v2854
        %v2856 = vpop.f32.mrf.mxu0
        %v2857 = vpop.f32.mrf.mxu0
        %v2858 = vpop.f32.mrf.mxu0
        %2859 = vdwg.mxu0
        %v2860 = vsel %vm1739, %v2855, -inf
        %2861 = vmax.xlane.f32.xlu0 %v2860
        %v2862 = vpop.xlane.xlu0 %2861
        %v2863 = vsub.f32 %v2855, %v2862
        %v2864 = vmul.f32 %v2863, 1.442695
        %v2865 = vpow.pop %v2864
        %v2866 = vsel %vm1739, %v2865, 0.0
        %2867 = vadd.xlane.f32.xlu0 %v2866
        %v2868 = vpop.xlane.xlu0 %2867
        %v2869 = vrcp.pop %v2868
        %v2870 = vmul.f32 %v2865, %v2869
        %v2871 = vpack.c.bf16 %v2870, %v2870
        %v2873 = vsel %vm1739, %v2871, 0
        %2875 = vmatprep.subr.bf16.mxu0 0
        %2876 = vmatpush1.bf16.msra.mxu0 0
        %2877 = vmatprep.subr.bf16.mxu0 0
        %2878 = vmatpush1.bf16.msra.mxu0 0
        %2879 = vmatprep.subr.bf16.mxu0 0
        %2880 = vmatpush1.bf16.msra.mxu0 0
        %2881 = vmatprep.subr.bf16.mxu0 0
        %2882 = vmatpush1.bf16.msra.mxu0 0
        %2883 = vmatprep.subr.bf16.mxu0 0
        %2884 = vmatpush1.bf16.msra.mxu0 0
        %2885 = vmatprep.subr.bf16.mxu0 0
        %2886 = vmatpush1.bf16.msra.mxu0 0
        %2887 = vmatprep.subr.bf16.mxu0 0
        %2888 = vmatpush1.bf16.msra.mxu0 0
        %2889 = vmatprep.subr.bf16.mxu0 0
        %2890 = vmatpush1.bf16.msra.mxu0 %v1147
        %2891 = vmatprep.subr.bf16.mxu0 0
        %2892 = vmatpush2.bf16.msra.mxu0 0
        %2893 = vmatprep.subr.bf16.mxu0 0
        %2894 = vmatpush2.bf16.msra.mxu0 0
        %2895 = vmatprep.subr.bf16.mxu0 0
        %2896 = vmatpush2.bf16.msra.mxu0 0
        %2897 = vmatprep.subr.bf16.mxu0 0
        %2898 = vmatpush2.bf16.msra.mxu0 0
        %2899 = vmatprep.subr.bf16.mxu0 0
        %2900 = vmatpush2.bf16.msra.mxu0 0
        %2901 = vmatprep.subr.bf16.mxu0 0
        %2902 = vmatpush2.bf16.msra.mxu0 0
        %2903 = vmatprep.subr.bf16.mxu0 0
        %2904 = vmatpush2.bf16.msra.mxu0 0
        %2905 = vmatprep.subr.bf16.mxu0 0
        %2906 = vmatpush2.bf16.msra.mxu0 0
        %2907 = vmatprep.mubr.bf16.mxu0 0
        %2908 = vmatmul.mubr.bf16.gmra.mxu0 %v2873
        %v2909 = vpop.f32.mrf.mxu0
        %v2910 = vadd.f32 0.0, %v2909
        %v2911 = vpop.f32.mrf.mxu0
        %v2912 = vpop.f32.mrf.mxu0
        %v2913 = vpop.f32.mrf.mxu0
        %2914 = vdwg.mxu0
        %2915 = vrot.lane.b32.xlu0 %v2813, 120
        %v2916 = vpop.permute.xlu0 %2915
        %2918 = vrot.lane.b32.xlu0 %v1070, 120
        %v2919 = vpop.permute.xlu0 %2918
        %v2921 = vsel %vm1289, %v2916, 0
        %v2924 = vsel %vm1289, %v2919, 0
        %2926 = vmatprep.subr.bf16.mxu0 0
        %2927 = vmatpush1.bf16.xpose.msra.mxu0 0
        %2928 = vmatprep.subr.bf16.mxu0 0
        %2929 = vmatpush1.bf16.xpose.msra.mxu0 0
        %2930 = vmatprep.subr.bf16.mxu0 0
        %2931 = vmatpush1.bf16.xpose.msra.mxu0 0
        %2932 = vmatprep.subr.bf16.mxu0 0
        %2933 = vmatpush1.bf16.xpose.msra.mxu0 0
        %2934 = vmatprep.subr.bf16.mxu0 0
        %2935 = vmatpush1.bf16.xpose.msra.mxu0 0
        %2936 = vmatprep.subr.bf16.mxu0 0
        %2937 = vmatpush1.bf16.xpose.msra.mxu0 0
        %2938 = vmatprep.subr.bf16.mxu0 0
        %2939 = vmatpush1.bf16.xpose.msra.mxu0 0
        %2940 = vmatprep.subr.bf16.mxu0 0
        %2941 = vmatpush1.bf16.xpose.msra.mxu0 %v2924
        %2942 = vmatprep.subr.bf16.mxu0 0
        %2943 = vmatpush2.bf16.xpose.msra.mxu0 0
        %2944 = vmatprep.subr.bf16.mxu0 0
        %2945 = vmatpush2.bf16.xpose.msra.mxu0 0
        %2946 = vmatprep.subr.bf16.mxu0 0
        %2947 = vmatpush2.bf16.xpose.msra.mxu0 0
        %2948 = vmatprep.subr.bf16.mxu0 0
        %2949 = vmatpush2.bf16.xpose.msra.mxu0 0
        %2950 = vmatprep.subr.bf16.mxu0 0
        %2951 = vmatpush2.bf16.xpose.msra.mxu0 0
        %2952 = vmatprep.subr.bf16.mxu0 0
        %2953 = vmatpush2.bf16.xpose.msra.mxu0 0
        %2954 = vmatprep.subr.bf16.mxu0 0
        %2955 = vmatpush2.bf16.xpose.msra.mxu0 0
        %2956 = vmatprep.subr.bf16.mxu0 0
        %2957 = vmatpush2.bf16.xpose.msra.mxu0 0
        %2958 = vmatprep.mubr.bf16.mxu0 0
        %2959 = vmatmul.mubr.bf16.gmra.mxu0 %v2921
        %v2960 = vpop.f32.mrf.mxu0
        %v2961 = vadd.f32 0.0, %v2960
        %v2962 = vpop.f32.mrf.mxu0
        %v2963 = vpop.f32.mrf.mxu0
        %v2964 = vpop.f32.mrf.mxu0
        %2965 = vdwg.mxu0
        %v2966 = vsel %vm1739, %v2961, -inf
        %2967 = vmax.xlane.f32.xlu0 %v2966
        %v2968 = vpop.xlane.xlu0 %2967
        %v2969 = vsub.f32 %v2961, %v2968
        %v2970 = vmul.f32 %v2969, 1.442695
        %v2971 = vpow.pop %v2970
        %v2972 = vsel %vm1739, %v2971, 0.0
        %2973 = vadd.xlane.f32.xlu0 %v2972
        %v2974 = vpop.xlane.xlu0 %2973
        %v2975 = vrcp.pop %v2974
        %v2976 = vmul.f32 %v2971, %v2975
        %v2977 = vpack.c.bf16 %v2976, %v2976
        %2979 = vrot.lane.b32.xlu0 %v1147, 120
        %v2980 = vpop.permute.xlu0 %2979
        %v2983 = vsel %vm1739, %v2977, 0
        %2985 = vmatprep.subr.bf16.mxu0 0
        %2986 = vmatpush1.bf16.msra.mxu0 0
        %2987 = vmatprep.subr.bf16.mxu0 0
        %2988 = vmatpush1.bf16.msra.mxu0 0
        %2989 = vmatprep.subr.bf16.mxu0 0
        %2990 = vmatpush1.bf16.msra.mxu0 0
        %2991 = vmatprep.subr.bf16.mxu0 0
        %2992 = vmatpush1.bf16.msra.mxu0 0
        %2993 = vmatprep.subr.bf16.mxu0 0
        %2994 = vmatpush1.bf16.msra.mxu0 0
        %2995 = vmatprep.subr.bf16.mxu0 0
        %2996 = vmatpush1.bf16.msra.mxu0 0
        %2997 = vmatprep.subr.bf16.mxu0 0
        %2998 = vmatpush1.bf16.msra.mxu0 0
        %2999 = vmatprep.subr.bf16.mxu0 0
        %3000 = vmatpush1.bf16.msra.mxu0 %v2980
        %3001 = vmatprep.subr.bf16.mxu0 0
        %3002 = vmatpush2.bf16.msra.mxu0 0
        %3003 = vmatprep.subr.bf16.mxu0 0
        %3004 = vmatpush2.bf16.msra.mxu0 0
        %3005 = vmatprep.subr.bf16.mxu0 0
        %3006 = vmatpush2.bf16.msra.mxu0 0
        %3007 = vmatprep.subr.bf16.mxu0 0
        %3008 = vmatpush2.bf16.msra.mxu0 0
        %3009 = vmatprep.subr.bf16.mxu0 0
        %3010 = vmatpush2.bf16.msra.mxu0 0
        %3011 = vmatprep.subr.bf16.mxu0 0
        %3012 = vmatpush2.bf16.msra.mxu0 0
        %3013 = vmatprep.subr.bf16.mxu0 0
        %3014 = vmatpush2.bf16.msra.mxu0 0
        %3015 = vmatprep.subr.bf16.mxu0 0
        %3016 = vmatpush2.bf16.msra.mxu0 0
        %3017 = vmatprep.mubr.bf16.mxu0 0
        %3018 = vmatmul.mubr.bf16.gmra.mxu0 %v2983
        %v3019 = vpop.f32.mrf.mxu0
        %v3020 = vadd.f32 0.0, %v3019
        %v3021 = vpop.f32.mrf.mxu0
        %v3022 = vpop.f32.mrf.mxu0
        %v3023 = vpop.f32.mrf.mxu0
        %3024 = vdwg.mxu0
        %3025 = vrot.lane.b32.xlu0 %v2813, 112
        %v3026 = vpop.permute.xlu0 %3025
        %3027 = vrot.lane.b32.xlu0 %v1070, 112
        %v3028 = vpop.permute.xlu0 %3027
        %v3030 = vsel %vm1289, %v3026, 0
        %v3033 = vsel %vm1289, %v3028, 0
        %3035 = vmatprep.subr.bf16.mxu0 0
        %3036 = vmatpush1.bf16.xpose.msra.mxu0 0
        %3037 = vmatprep.subr.bf16.mxu0 0
        %3038 = vmatpush1.bf16.xpose.msra.mxu0 0
        %3039 = vmatprep.subr.bf16.mxu0 0
        %3040 = vmatpush1.bf16.xpose.msra.mxu0 0
        %3041 = vmatprep.subr.bf16.mxu0 0
        %3042 = vmatpush1.bf16.xpose.msra.mxu0 0
        %3043 = vmatprep.subr.bf16.mxu0 0
        %3044 = vmatpush1.bf16.xpose.msra.mxu0 0
        %3045 = vmatprep.subr.bf16.mxu0 0
        %3046 = vmatpush1.bf16.xpose.msra.mxu0 0
        %3047 = vmatprep.subr.bf16.mxu0 0
        %3048 = vmatpush1.bf16.xpose.msra.mxu0 0
        %3049 = vmatprep.subr.bf16.mxu0 0
        %3050 = vmatpush1.bf16.xpose.msra.mxu0 %v3033
        %3051 = vmatprep.subr.bf16.mxu0 0
        %3052 = vmatpush2.bf16.xpose.msra.mxu0 0
        %3053 = vmatprep.subr.bf16.mxu0 0
        %3054 = vmatpush2.bf16.xpose.msra.mxu0 0
        %3055 = vmatprep.subr.bf16.mxu0 0
        %3056 = vmatpush2.bf16.xpose.msra.mxu0 0
        %3057 = vmatprep.subr.bf16.mxu0 0
        %3058 = vmatpush2.bf16.xpose.msra.mxu0 0
        %3059 = vmatprep.subr.bf16.mxu0 0
        %3060 = vmatpush2.bf16.xpose.msra.mxu0 0
        %3061 = vmatprep.subr.bf16.mxu0 0
        %3062 = vmatpush2.bf16.xpose.msra.mxu0 0
        %3063 = vmatprep.subr.bf16.mxu0 0
        %3064 = vmatpush2.bf16.xpose.msra.mxu0 0
        %3065 = vmatprep.subr.bf16.mxu0 0
        %3066 = vmatpush2.bf16.xpose.msra.mxu0 0
        %3067 = vmatprep.mubr.bf16.mxu0 0
        %3068 = vmatmul.mubr.bf16.gmra.mxu0 %v3030
        %v3069 = vpop.f32.mrf.mxu0
        %v3070 = vadd.f32 0.0, %v3069
        %v3071 = vpop.f32.mrf.mxu0
        %v3072 = vpop.f32.mrf.mxu0
        %v3073 = vpop.f32.mrf.mxu0
        %3074 = vdwg.mxu0
        %v3075 = vsel %vm1739, %v3070, -inf
        %3076 = vmax.xlane.f32.xlu0 %v3075
        %v3077 = vpop.xlane.xlu0 %3076
        %v3078 = vsub.f32 %v3070, %v3077
        %v3079 = vmul.f32 %v3078, 1.442695
        %v3080 = vpow.pop %v3079
        %v3081 = vsel %vm1739, %v3080, 0.0
        %3082 = vadd.xlane.f32.xlu0 %v3081
        %v3083 = vpop.xlane.xlu0 %3082
        %v3084 = vrcp.pop %v3083
        %v3085 = vmul.f32 %v3080, %v3084
        %v3086 = vpack.c.bf16 %v3085, %v3085
        %3087 = vrot.lane.b32.xlu0 %v1147, 112
        %v3088 = vpop.permute.xlu0 %3087
        %v3091 = vsel %vm1739, %v3086, 0
        %3093 = vmatprep.subr.bf16.mxu0 0
        %3094 = vmatpush1.bf16.msra.mxu0 0
        %3095 = vmatprep.subr.bf16.mxu0 0
        %3096 = vmatpush1.bf16.msra.mxu0 0
        %3097 = vmatprep.subr.bf16.mxu0 0
        %3098 = vmatpush1.bf16.msra.mxu0 0
        %3099 = vmatprep.subr.bf16.mxu0 0
        %3100 = vmatpush1.bf16.msra.mxu0 0
        %3101 = vmatprep.subr.bf16.mxu0 0
        %3102 = vmatpush1.bf16.msra.mxu0 0
        %3103 = vmatprep.subr.bf16.mxu0 0
        %3104 = vmatpush1.bf16.msra.mxu0 0
        %3105 = vmatprep.subr.bf16.mxu0 0
        %3106 = vmatpush1.bf16.msra.mxu0 0
        %3107 = vmatprep.subr.bf16.mxu0 0
        %3108 = vmatpush1.bf16.msra.mxu0 %v3088
        %3109 = vmatprep.subr.bf16.mxu0 0
        %3110 = vmatpush2.bf16.msra.mxu0 0
        %3111 = vmatprep.subr.bf16.mxu0 0
        %3112 = vmatpush2.bf16.msra.mxu0 0
        %3113 = vmatprep.subr.bf16.mxu0 0
        %3114 = vmatpush2.bf16.msra.mxu0 0
        %3115 = vmatprep.subr.bf16.mxu0 0
        %3116 = vmatpush2.bf16.msra.mxu0 0
        %3117 = vmatprep.subr.bf16.mxu0 0
        %3118 = vmatpush2.bf16.msra.mxu0 0
        %3119 = vmatprep.subr.bf16.mxu0 0
        %3120 = vmatpush2.bf16.msra.mxu0 0
        %3121 = vmatprep.subr.bf16.mxu0 0
        %3122 = vmatpush2.bf16.msra.mxu0 0
        %3123 = vmatprep.subr.bf16.mxu0 0
        %3124 = vmatpush2.bf16.msra.mxu0 0
        %3125 = vmatprep.mubr.bf16.mxu0 0
        %3126 = vmatmul.mubr.bf16.gmra.mxu0 %v3091
        %v3127 = vpop.f32.mrf.mxu0
        %v3128 = vadd.f32 0.0, %v3127
        %v3129 = vpop.f32.mrf.mxu0
        %v3130 = vpop.f32.mrf.mxu0
        %v3131 = vpop.f32.mrf.mxu0
        %3132 = vdwg.mxu0
        %3133 = vrot.lane.b32.xlu0 %v2813, 104
        %v3134 = vpop.permute.xlu0 %3133
        %3135 = vrot.lane.b32.xlu0 %v1070, 104
        %v3136 = vpop.permute.xlu0 %3135
        %v3138 = vsel %vm1289, %v3134, 0
        %v3141 = vsel %vm1289, %v3136, 0
        %3143 = vmatprep.subr.bf16.mxu0 0
        %3144 = vmatpush1.bf16.xpose.msra.mxu0 0
        %3145 = vmatprep.subr.bf16.mxu0 0
        %3146 = vmatpush1.bf16.xpose.msra.mxu0 0
        %3147 = vmatprep.subr.bf16.mxu0 0
        %3148 = vmatpush1.bf16.xpose.msra.mxu0 0
        %3149 = vmatprep.subr.bf16.mxu0 0
        %3150 = vmatpush1.bf16.xpose.msra.mxu0 0
        %3151 = vmatprep.subr.bf16.mxu0 0
        %3152 = vmatpush1.bf16.xpose.msra.mxu0 0
        %3153 = vmatprep.subr.bf16.mxu0 0
        %3154 = vmatpush1.bf16.xpose.msra.mxu0 0
        %3155 = vmatprep.subr.bf16.mxu0 0
        %3156 = vmatpush1.bf16.xpose.msra.mxu0 0
        %3157 = vmatprep.subr.bf16.mxu0 0
        %3158 = vmatpush1.bf16.xpose.msra.mxu0 %v3141
        %3159 = vmatprep.subr.bf16.mxu0 0
        %3160 = vmatpush2.bf16.xpose.msra.mxu0 0
        %3161 = vmatprep.subr.bf16.mxu0 0
        %3162 = vmatpush2.bf16.xpose.msra.mxu0 0
        %3163 = vmatprep.subr.bf16.mxu0 0
        %3164 = vmatpush2.bf16.xpose.msra.mxu0 0
        %3165 = vmatprep.subr.bf16.mxu0 0
        %3166 = vmatpush2.bf16.xpose.msra.mxu0 0
        %3167 = vmatprep.subr.bf16.mxu0 0
        %3168 = vmatpush2.bf16.xpose.msra.mxu0 0
        %3169 = vmatprep.subr.bf16.mxu0 0
        %3170 = vmatpush2.bf16.xpose.msra.mxu0 0
        %3171 = vmatprep.subr.bf16.mxu0 0
        %3172 = vmatpush2.bf16.xpose.msra.mxu0 0
        %3173 = vmatprep.subr.bf16.mxu0 0
        %3174 = vmatpush2.bf16.xpose.msra.mxu0 0
        %3175 = vmatprep.mubr.bf16.mxu0 0
        %3176 = vmatmul.mubr.bf16.gmra.mxu0 %v3138
        %v3177 = vpop.f32.mrf.mxu0
        %v3178 = vadd.f32 0.0, %v3177
        %v3179 = vpop.f32.mrf.mxu0
        %v3180 = vpop.f32.mrf.mxu0
        %v3181 = vpop.f32.mrf.mxu0
        %3182 = vdwg.mxu0
        %v3183 = vsel %vm1739, %v3178, -inf
        %3184 = vmax.xlane.f32.xlu0 %v3183
        %v3185 = vpop.xlane.xlu0 %3184
        %v3186 = vsub.f32 %v3178, %v3185
        %v3187 = vmul.f32 %v3186, 1.442695
        %v3188 = vpow.pop %v3187
        %v3189 = vsel %vm1739, %v3188, 0.0
        %3190 = vadd.xlane.f32.xlu0 %v3189
        %v3191 = vpop.xlane.xlu0 %3190
        %v3192 = vrcp.pop %v3191
        %v3193 = vmul.f32 %v3188, %v3192
        %v3194 = vpack.c.bf16 %v3193, %v3193
        %3195 = vrot.lane.b32.xlu0 %v1147, 104
        %v3196 = vpop.permute.xlu0 %3195
        %v3199 = vsel %vm1739, %v3194, 0
        %3201 = vmatprep.subr.bf16.mxu0 0
        %3202 = vmatpush1.bf16.msra.mxu0 0
        %3203 = vmatprep.subr.bf16.mxu0 0
        %3204 = vmatpush1.bf16.msra.mxu0 0
        %3205 = vmatprep.subr.bf16.mxu0 0
        %3206 = vmatpush1.bf16.msra.mxu0 0
        %3207 = vmatprep.subr.bf16.mxu0 0
        %3208 = vmatpush1.bf16.msra.mxu0 0
        %3209 = vmatprep.subr.bf16.mxu0 0
        %3210 = vmatpush1.bf16.msra.mxu0 0
        %3211 = vmatprep.subr.bf16.mxu0 0
        %3212 = vmatpush1.bf16.msra.mxu0 0
        %3213 = vmatprep.subr.bf16.mxu0 0
        %3214 = vmatpush1.bf16.msra.mxu0 0
        %3215 = vmatprep.subr.bf16.mxu0 0
        %3216 = vmatpush1.bf16.msra.mxu0 %v3196
        %3217 = vmatprep.subr.bf16.mxu0 0
        %3218 = vmatpush2.bf16.msra.mxu0 0
        %3219 = vmatprep.subr.bf16.mxu0 0
        %3220 = vmatpush2.bf16.msra.mxu0 0
        %3221 = vmatprep.subr.bf16.mxu0 0
        %3222 = vmatpush2.bf16.msra.mxu0 0
        %3223 = vmatprep.subr.bf16.mxu0 0
        %3224 = vmatpush2.bf16.msra.mxu0 0
        %3225 = vmatprep.subr.bf16.mxu0 0
        %3226 = vmatpush2.bf16.msra.mxu0 0
        %3227 = vmatprep.subr.bf16.mxu0 0
        %3228 = vmatpush2.bf16.msra.mxu0 0
        %3229 = vmatprep.subr.bf16.mxu0 0
        %3230 = vmatpush2.bf16.msra.mxu0 0
        %3231 = vmatprep.subr.bf16.mxu0 0
        %3232 = vmatpush2.bf16.msra.mxu0 0
        %3233 = vmatprep.mubr.bf16.mxu0 0
        %3234 = vmatmul.mubr.bf16.gmra.mxu0 %v3199
        %v3235 = vpop.f32.mrf.mxu0
        %v3236 = vadd.f32 0.0, %v3235
        %v3237 = vpop.f32.mrf.mxu0
        %v3238 = vpop.f32.mrf.mxu0
        %v3239 = vpop.f32.mrf.mxu0
        %3240 = vdwg.mxu0
        %3242 = vrot.lane.b32.xlu0 %v3020, 8
        %v3243 = vpop.permute.xlu0 %3242
        %3246 = vrot.lane.b32.xlu0 %v3128, 16
        %v3247 = vpop.permute.xlu0 %3246
        %3250 = vrot.lane.b32.xlu0 %v3236, 24
        %v3251 = vpop.permute.xlu0 %3250
        %v3253 = vsel %vm1289, %v2910, %v3243
        %v3254 = vsel %vm1739, %v3253, %v3247
        %v3255 = vsel %vm1741, %v3254, %v3251
        %v3256 = vpack.c.bf16 %v3255, %v2812
        %v3258 = vlaneseq
        %v3259 = vshrl.u32 %v3258, 7
        %v3260 = vsub.s32 0, %v3259
        %v3261 = vrot.slane %v968, %v3260
        %v3267 = vunpack.c.l.b16 %v964
        %v3268 = vunpack.c.l.b16 %v965
        %v3269 = vunpack.c.l.b16 %v966
        %v3270 = vunpack.c.l.b16 %v967
        %v3271 = vpack.c.b16 %v3268, %v3267
        %v3272 = vpack.c.b16 %v3270, %v3269
        %v3276 = vsel %vm1013, %v3256, 0
        %3278 = vmatprep.subr.bf16.mxu0 0
        %3279 = vmatpush1.bf16.msra.mxu0 0
        %3280 = vmatprep.subr.bf16.mxu0 0
        %3281 = vmatpush1.bf16.msra.mxu0 0
        %3282 = vmatprep.subr.bf16.mxu0 0
        %3283 = vmatpush1.bf16.msra.mxu0 0
        %3284 = vmatprep.subr.bf16.mxu0 0
        %3285 = vmatpush1.bf16.msra.mxu0 0
        %3286 = vmatprep.subr.bf16.mxu0 0
        %3287 = vmatpush1.bf16.msra.mxu0 0
        %3288 = vmatprep.subr.bf16.mxu0 0
        %3289 = vmatpush1.bf16.msra.mxu0 0
        %3290 = vmatprep.subr.bf16.mxu0 0
        %3291 = vmatpush1.bf16.msra.mxu0 %v3272
        %3292 = vmatprep.subr.bf16.mxu0 0
        %3293 = vmatpush1.bf16.msra.mxu0 %v3271
        %3294 = vmatprep.subr.bf16.mxu0 0
        %3295 = vmatpush2.bf16.msra.mxu0 0
        %3296 = vmatprep.subr.bf16.mxu0 0
        %3297 = vmatpush2.bf16.msra.mxu0 0
        %3298 = vmatprep.subr.bf16.mxu0 0
        %3299 = vmatpush2.bf16.msra.mxu0 0
        %3300 = vmatprep.subr.bf16.mxu0 0
        %3301 = vmatpush2.bf16.msra.mxu0 0
        %3302 = vmatprep.subr.bf16.mxu0 0
        %3303 = vmatpush2.bf16.msra.mxu0 0
        %3304 = vmatprep.subr.bf16.mxu0 0
        %3305 = vmatpush2.bf16.msra.mxu0 0
        %3306 = vmatprep.subr.bf16.mxu0 0
        %3307 = vmatpush2.bf16.msra.mxu0 0
        %3308 = vmatprep.subr.bf16.mxu0 0
        %3309 = vmatpush2.bf16.msra.mxu0 0
        %3310 = vmatprep.mubr.bf16.mxu0 0
        %3311 = vmatmul.mubr.bf16.gmra.mxu0 %v3276
        %v3312 = vpop.f32.mrf.mxu0
        %v3313 = vadd.f32 %v3261, %v3312
        %v3314 = vpop.f32.mrf.mxu0
        %v3315 = vpop.f32.mrf.mxu0
        %v3316 = vadd.f32 %v3261, %v3315
        %v3317 = vpop.f32.mrf.mxu0
        %3318 = vdwg.mxu0
        %v3319 = vadd.f32 %v2302, %v3313
        %v3320 = vadd.f32 %v2303, %v3316
        %v3321 = vsel %vm1013, %v3319, 0.0
        %3322 = vadd.xlane.f32.xlu0 %v3321
        %v3323 = vpop.xlane.xlu0 %3322
        %v3324 = vsel %vm1013, %v3320, 0.0
        %3325 = vadd.xlane.f32.xlu0 %v3324
        %v3326 = vpop.xlane.xlu0 %3325
        %v3327 = vmul.f32 %v3323, %v2267
        %v3328 = vmul.f32 %v3326, %v2267
        %v3329 = vsub.f32 %v3319, %v3327
        %v3330 = vsub.f32 %v3320, %v3328
        %v3331 = vmul.f32 %v3329, %v3329
        %v3332 = vmul.f32 %v3330, %v3330
        %v3333 = vsel %vm1013, %v3331, 0.0
        %3334 = vadd.xlane.f32.xlu0 %v3333
        %v3335 = vpop.xlane.xlu0 %3334
        %v3336 = vsel %vm1013, %v3332, 0.0
        %3337 = vadd.xlane.f32.xlu0 %v3336
        %v3338 = vpop.xlane.xlu0 %3337
        %v3339 = vmul.f32 %v3335, %v2267
        %v3340 = vmul.f32 %v3338, %v2267
        %v3341 = vadd.f32 %v3339, 1e-05
        %v3342 = vadd.f32 %v3340, 1e-05
        %v3343 = vrsqrt.pop %v3341
        %v3344 = vrsqrt.pop %v3342
        %v3345 = vmul.f32 %v3329, %v3343
        %v3346 = vmul.f32 %v3330, %v3344
        %v3348 = vlaneseq
        %v3349 = vshrl.u32 %v3348, 7
        %v3350 = vsub.s32 0, %v3349
        %v3351 = vrot.slane %v985, %v3350
        %v3353 = vmul.f32 %v3345, %v3351
        %v3354 = vmul.f32 %v3346, %v3351
        %v3356 = vlaneseq
        %v3357 = vshrl.u32 %v3356, 7
        %v3358 = vsub.s32 0, %v3357
        %v3359 = vrot.slane %v986, %v3358
        %v3361 = vadd.f32 %v3353, %v3359
        %v3362 = vadd.f32 %v3354, %v3359
        %v3363 = vpack.c.bf16 %v3362, %v3361
        %v3365 = vlaneseq
        %v3366 = vshrl.u32 %v3365, 7
        %v3367 = vsub.s32 0, %v3366
        %v3368 = vrot.slane %v973, %v3367
        %v3374 = vunpack.c.l.b16 %v969
        %v3375 = vunpack.c.l.b16 %v970
        %v3376 = vunpack.c.l.b16 %v971
        %v3377 = vunpack.c.l.b16 %v972
        %v3378 = vpack.c.b16 %v3375, %v3374
        %v3379 = vpack.c.b16 %v3377, %v3376
        %v3383 = vsel %vm1013, %v3363, 0
        %3385 = vmatprep.subr.bf16.mxu0 0
        %3386 = vmatpush1.bf16.msra.mxu0 0
        %3387 = vmatprep.subr.bf16.mxu0 0
        %3388 = vmatpush1.bf16.msra.mxu0 0
        %3389 = vmatprep.subr.bf16.mxu0 0
        %3390 = vmatpush1.bf16.msra.mxu0 0
        %3391 = vmatprep.subr.bf16.mxu0 0
        %3392 = vmatpush1.bf16.msra.mxu0 0
        %3393 = vmatprep.subr.bf16.mxu0 0
        %3394 = vmatpush1.bf16.msra.mxu0 0
        %3395 = vmatprep.subr.bf16.mxu0 0
        %3396 = vmatpush1.bf16.msra.mxu0 0
        %3397 = vmatprep.subr.bf16.mxu0 0
        %3398 = vmatpush1.bf16.msra.mxu0 %v3379
        %3399 = vmatprep.subr.bf16.mxu0 0
        %3400 = vmatpush1.bf16.msra.mxu0 %v3378
        %3401 = vmatprep.subr.bf16.mxu0 0
        %3402 = vmatpush2.bf16.msra.mxu0 0
        %3403 = vmatprep.subr.bf16.mxu0 0
        %3404 = vmatpush2.bf16.msra.mxu0 0
        %3405 = vmatprep.subr.bf16.mxu0 0
        %3406 = vmatpush2.bf16.msra.mxu0 0
        %3407 = vmatprep.subr.bf16.mxu0 0
        %3408 = vmatpush2.bf16.msra.mxu0 0
        %3409 = vmatprep.subr.bf16.mxu0 0
        %3410 = vmatpush2.bf16.msra.mxu0 0
        %3411 = vmatprep.subr.bf16.mxu0 0
        %3412 = vmatpush2.bf16.msra.mxu0 0
        %3413 = vmatprep.subr.bf16.mxu0 0
        %3414 = vmatpush2.bf16.msra.mxu0 0
        %3415 = vmatprep.subr.bf16.mxu0 0
        %3416 = vmatpush2.bf16.msra.mxu0 0
        %3417 = vmatprep.mubr.bf16.mxu0 0
        %3418 = vmatmul.mubr.bf16.gmra.mxu0 %v3383
        %v3419 = vpop.f32.mrf.mxu0
        %v3420 = vadd.f32 %v3368, %v3419
        %v3421 = vpop.f32.mrf.mxu0
        %v3422 = vpop.f32.mrf.mxu0
        %v3423 = vadd.f32 %v3368, %v3422
        %v3424 = vpop.f32.mrf.mxu0
        %3425 = vdwg.mxu0
        %v3426 = vmax.f32 %v3420, 0.0
        %v3427 = vmax.f32 %v3423, 0.0
        %v3428 = vpack.c.bf16 %v3427, %v3426
        %v3430 = vlaneseq
        %v3431 = vshrl.u32 %v3430, 7
        %v3432 = vsub.s32 0, %v3431
        %v3433 = vrot.slane %v982, %v3432
        %v3443 = vunpack.c.l.b16 %v974
        %v3444 = vunpack.c.l.b16 %v975
        %v3445 = vunpack.c.l.b16 %v976
        %v3446 = vunpack.c.l.b16 %v977
        %v3447 = vunpack.c.l.b16 %v978
        %v3448 = vunpack.c.l.b16 %v979
        %v3449 = vunpack.c.l.b16 %v980
        %v3450 = vunpack.c.l.b16 %v981
        %v3451 = vpack.c.b16 %v3444, %v3443
        %v3452 = vpack.c.b16 %v3446, %v3445
        %v3453 = vpack.c.b16 %v3448, %v3447
        %v3454 = vpack.c.b16 %v3450, %v3449
        %vm3459 = vcmask 523264
        %v3461 = vsel %vm3459, %v3428, 0
        %3463 = vmatprep.subr.bf16.mxu0 0
        %3464 = vmatpush1.bf16.msra.mxu0 0
        %3465 = vmatprep.subr.bf16.mxu0 0
        %3466 = vmatpush1.bf16.msra.mxu0 0
        %3467 = vmatprep.subr.bf16.mxu0 0
        %3468 = vmatpush1.bf16.msra.mxu0 0
        %3469 = vmatprep.subr.bf16.mxu0 0
        %3470 = vmatpush1.bf16.msra.mxu0 0
        %3471 = vmatprep.subr.bf16.mxu0 0
        %3472 = vmatpush1.bf16.msra.mxu0 %v3454
        %3473 = vmatprep.subr.bf16.mxu0 0
        %3474 = vmatpush1.bf16.msra.mxu0 %v3453
        %3475 = vmatprep.subr.bf16.mxu0 0
        %3476 = vmatpush1.bf16.msra.mxu0 %v3452
        %3477 = vmatprep.subr.bf16.mxu0 0
        %3478 = vmatpush1.bf16.msra.mxu0 %v3451
        %3479 = vmatprep.subr.bf16.mxu0 0
        %3480 = vmatpush2.bf16.msra.mxu0 0
        %3481 = vmatprep.subr.bf16.mxu0 0
        %3482 = vmatpush2.bf16.msra.mxu0 0
        %3483 = vmatprep.subr.bf16.mxu0 0
        %3484 = vmatpush2.bf16.msra.mxu0 0
        %3485 = vmatprep.subr.bf16.mxu0 0
        %3486 = vmatpush2.bf16.msra.mxu0 0
        %3487 = vmatprep.subr.bf16.mxu0 0
        %3488 = vmatpush2.bf16.msra.mxu0 0
        %3489 = vmatprep.subr.bf16.mxu0 0
        %3490 = vmatpush2.bf16.msra.mxu0 0
        %3491 = vmatprep.subr.bf16.mxu0 0
        %3492 = vmatpush2.bf16.msra.mxu0 0
        %3493 = vmatprep.subr.bf16.mxu0 0
        %3494 = vmatpush2.bf16.msra.mxu0 0
        %3495 = vmatprep.mubr.bf16.mxu0 0
        %3496 = vmatmul.mubr.bf16.gmra.mxu0 %v3461
        %v3497 = vpop.f32.mrf.mxu0
        %v3498 = vadd.f32 %v3433, %v3497
        %v3499 = vpop.f32.mrf.mxu0
        %v3500 = vpop.f32.mrf.mxu0
        %v3501 = vadd.f32 %v3433, %v3500
        %v3502 = vpop.f32.mrf.mxu0
        %3503 = vdwg.mxu0
        %v3504 = vadd.f32 %v3361, %v3498
        %v3505 = vadd.f32 %v3362, %v3501
        %v3506 = vsel %vm1013, %v3504, 0.0
        %3507 = vadd.xlane.f32.xlu0 %v3506
        %v3508 = vpop.xlane.xlu0 %3507
        %v3509 = vsel %vm1013, %v3505, 0.0
        %3510 = vadd.xlane.f32.xlu0 %v3509
        %v3511 = vpop.xlane.xlu0 %3510
        %v3512 = vmul.f32 %v3508, %v2267
        %v3513 = vmul.f32 %v3511, %v2267
        %v3514 = vsub.f32 %v3504, %v3512
        %v3515 = vsub.f32 %v3505, %v3513
        %v3516 = vmul.f32 %v3514, %v3514
        %v3517 = vmul.f32 %v3515, %v3515
        %v3518 = vsel %vm1013, %v3516, 0.0
        %3519 = vadd.xlane.f32.xlu0 %v3518
        %v3520 = vpop.xlane.xlu0 %3519
        %v3521 = vsel %vm1013, %v3517, 0.0
        %3522 = vadd.xlane.f32.xlu0 %v3521
        %v3523 = vpop.xlane.xlu0 %3522
        %v3524 = vmul.f32 %v3520, %v2267
        %v3525 = vmul.f32 %v3523, %v2267
        %v3526 = vadd.f32 %v3524, 1e-05
        %v3527 = vadd.f32 %v3525, 1e-05
        %v3528 = vrsqrt.pop %v3526
        %v3529 = vrsqrt.pop %v3527
        %v3530 = vmul.f32 %v3514, %v3528
        %v3531 = vmul.f32 %v3515, %v3529
        %v3533 = vlaneseq
        %v3534 = vshrl.u32 %v3533, 7
        %v3535 = vsub.s32 0, %v3534
        %v3536 = vrot.slane %v987, %v3535
        %v3538 = vmul.f32 %v3530, %v3536
        %v3539 = vmul.f32 %v3531, %v3536
        %v3541 = vlaneseq
        %v3542 = vshrl.u32 %v3541, 7
        %v3543 = vsub.s32 0, %v3542
        %v3544 = vrot.slane %v988, %v3543
        %v3546 = vadd.f32 %v3538, %v3544
        %v3547 = vadd.f32 %v3539, %v3544
      $region137: #{transformer_decoder.1} parent=131 // loop_footer
        %s1153 = sadd.s32 1, %s1149
      $region138: #{transformer_decoder.1} parent=131 // loop_footer_branch
        %1148 = sbr.rel target = $region134
      $region139: #{transformer_decoder.1} parent=131 // loop_exit
        _
      %3548 = vst.msk [vmem:[%s919] sm:$0xff] %vm1013, %v1154
      %3549 = vst.msk [vmem:[%s919 + $0x8] sm:$0xff] %vm1013, %v1155
      %s3550 = smul.u32 2, %s39
      %p3551 = scmp.lt.s32.totalorder %s3550, 3
      %s3552 = scalar_select %p3551, %s3550, 3
      %s3553 = smul.addr %s3552, 8
      %s3554 = scalar_lea.vmem %s28, %s3553
      // Predicated region
      $region140: #{transformer_decoder.1} parent=131 // pred_check
        %p3555 = pneg %p665
      $region141: #{transformer_decoder.1} parent=131 // pred_check_branch
        %3557 = sbr.rel (%p3555) target = $region143
      $region142: #{transformer_decoder.1} parent=131 // pred_region
        %s3558 = smul.u32 2, %s39
      $region143: #{transformer_decoder.1} parent=131 // pred_fallthru
        _
    $region132: #{transformer_decoder.1} parent=5 // pred_fallthru
      _
    %p3559 = scmp.le.s32.totalorder 2, %s34
    // Predicated region
    $region144: #{transformer_decoder.1} parent=5 // pred_check
      %p3560 = pneg %p3559
    $region145: #{transformer_decoder.1} parent=5 // pred_check_branch
      %3562 = sbr.rel (%p3560) target = $region147
    $region146: #{transformer_decoder.1} parent=5 // pred_region
      %s3563 = ssub.s32 %s34, 2
      // Predicated region
      $region148: #{transformer_decoder.1} parent=146 // pred_check
        %p3564 = pneg %p671
      $region149: #{transformer_decoder.1} parent=146 // pred_check_branch
        %3566 = sbr.rel (%p3564) target = $region151
      $region150: #{transformer_decoder.1} parent=146 // pred_region
        %s3567 = smul.u32 2, %s40
        %p3568 = scmp.lt.s32.totalorder %s3567, 3
        %s3569 = scalar_select %p3568, %s3567, 3
        %s3570 = smul.addr %s3569, 8
        %s3571 = scalar_lea.vmem %s28, %s3570
      $region151: #{transformer_decoder.1} parent=146 // pred_fallthru
        _
    $region147: #{transformer_decoder.1} parent=5 // pred_fallthru
      _
  $region6: #{transformer_decoder.1} parent=0 // loop_footer
    %s38 = sadd.s32 1, %s34
  $region7: #{transformer_decoder.1} parent=0 // loop_footer_branch
    %33 = sbr.rel target = $region3
  $region8: #{transformer_decoder.1} parent=0 // loop_exit
    _

</llo_original>
